<compile_context>
chip_gen: v6e
topology: v6e:2x2x1
jax: 0.10.0
libtpu: 0.0.40
codegen_flags: <defaults>
</compile_context>

<pallas_src>
import functools
import math

import jax
import jax.numpy as jnp
from jax.experimental import pallas as pl
from jax.experimental.pallas import tpu as pltpu

F32_MIN = float(jnp.finfo(jnp.float32).min)   # torch.finfo(torch.float32).min
_VMEM_LIMIT = 32 * 1024 * 1024                # safe scoped-VMEM budget on v5e/v6e/v7x


# ----------------------------- tiling helpers -----------------------------

def _round_up(x, m):
    return ((x + m - 1) // m) * m


def _pick_sublane_tile(dim, max_tile):
    """Largest tile <= max_tile that divides `dim`, preferring multiples of 8 (sublane axis).
    Falls back to the full dim (always legal)."""
    if dim <= max_tile:
        return dim
    start = max_tile - (max_tile % 8)
    for t in range(start, 0, -8):
        if dim % t == 0:
            return t
    return dim


def _lane_tile(dim, max_tile):
    """Lane (last-dim) tile.  Prefers multiples of 256 (v6e/v7x 2x256x256 MXU), then 128, that
    divide `dim`; otherwise pads `dim` up to a multiple of a 128-aligned tile (caller zero-pads
    the operand and slices the output).  Returns (tile, padded_dim)."""
    if dim <= max_tile:
        t = dim if dim % 128 == 0 else _round_up(dim, 128)
        return t, t
    for align in (256, 128):
        t = (max_tile // align) * align
        while t >= align:
            if dim % t == 0:
                return t, dim
            t -= align
    t = (max_tile // 128) * 128
    return t, _round_up(dim, t)


def _divisor_lane_tile(dim, max_tile):
    """Like _lane_tile but never pads (for reduction axes); falls back to the full dim."""
    if dim <= max_tile:
        return dim
    for align in (256, 128):
        t = (max_tile // align) * align
        while t >= align:
            if dim % t == 0:
                return t
            t -= align
    return dim


def _heads_per_block(n_head, head_dim):
    # Pack heads so the attention block lane width (hg * head_dim) is a multiple of 128 when
    # possible (GPT-2: Dh=64 -> 2 heads/block).  Must divide n_head.
    return math.gcd(n_head, max(1, 128 // head_dim))


# ----------------------------- fused LayerNorm + Conv1D -----------------------------

def _ln_matmul_kernel(x_ref, g_ref, b_ref, w_ref, bias_ref, o_ref, xn_ref, *, eps):
    """out = LayerNorm(x) @ W + bias.  LN stats + affine + bf16 cast computed only at the first
    N tile and cached in VMEM (xn_ref); reused for every N tile of the same row block."""
    @pl.when(pl.program_id(1) == 0)
    def _():
        x = x_ref[...]                                        # (tm, K) f32
        mean = jnp.mean(x, axis=-1, keepdims=True)
        var = jnp.mean(jnp.square(x - mean), axis=-1, keepdims=True)
        xn = (x - mean) * jax.lax.rsqrt(var + eps)
        xn_ref[...] = (xn * g_ref[...] + b_ref[...]).astype(xn_ref.dtype)

    y = jnp.dot(xn_ref[...], w_ref[...], preferred_element_type=jnp.float32) + bias_ref[...]
    o_ref[...] = y.astype(o_ref.dtype)


def ln_matmul(x, g, b, w, bias, *, eps, out_dtype=jnp.bfloat16, tm_max=256, tn_max=512):
    """Fused LayerNorm + Conv1D (y = LN(x) @ W + b), row/col tiled; full K per block (LN needs
    the whole feature row).  N axis is innermost + 'arbitrary' so the LN cache stays coherent."""
    M, K = x.shape
    N = w.shape[1]
    tm = _pick_sublane_tile(M, tm_max)
    tn, n_pad = _lane_tile(N, tn_max)
    if n_pad != N:                                            # ragged N: pad weight/bias, slice out
        w = jnp.pad(w, ((0, 0), (0, n_pad - N)))
        bias = jnp.pad(bias, (0, n_pad - N))
    out = pl.pallas_call(
        functools.partial(_ln_matmul_kernel, eps=eps),
        out_shape=jax.ShapeDtypeStruct((M, n_pad), out_dtype),
        grid=(M // tm, n_pad // tn),
        in_specs=[
            pl.BlockSpec((tm, K), lambda i, j: (i, 0)),
            pl.BlockSpec((1, K), lambda i, j: (0, 0)),
            pl.BlockSpec((1, K), lambda i, j: (0, 0)),
            pl.BlockSpec((K, tn), lambda i, j: (0, j)),
            pl.BlockSpec((1, tn), lambda i, j: (0, j)),
        ],
        out_specs=pl.BlockSpec((tm, tn), lambda i, j: (i, j)),
        scratch_shapes=[pltpu.VMEM((tm, K), jnp.bfloat16)],
        compiler_params=pltpu.CompilerParams(
            dimension_semantics=("parallel", "arbitrary"),
            vmem_limit_bytes=_VMEM_LIMIT),
    )(x, g.reshape(1, K), b.reshape(1, K), w, bias.reshape(1, n_pad))
    return out if n_pad == N else out[:, :N]


# ----------------------------- standalone LayerNorm (lm_head path) -----------------------------

def _ln_kernel(x_ref, g_ref, b_ref, o_ref, *, eps):
    x = x_ref[...]
    mean = jnp.mean(x, axis=-1, keepdims=True)
    var = jnp.mean(jnp.square(x - mean), axis=-1, keepdims=True)
    o_ref[...] = (((x - mean) * jax.lax.rsqrt(var + eps)) * g_ref[...] + b_ref[...]).astype(o_ref.dtype)


def layernorm(x, g, b, *, eps, out_dtype=jnp.bfloat16, tm_max=512):
    M, K = x.shape
    tm = _pick_sublane_tile(M, tm_max)
    return pl.pallas_call(
        functools.partial(_ln_kernel, eps=eps),
        out_shape=jax.ShapeDtypeStruct((M, K), out_dtype),
        grid=(M // tm,),
        in_specs=[pl.BlockSpec((tm, K), lambda i: (i, 0)),
                  pl.BlockSpec((1, K), lambda i: (0, 0)),
                  pl.BlockSpec((1, K), lambda i: (0, 0))],
        out_specs=pl.BlockSpec((tm, K), lambda i: (i, 0)),
        compiler_params=pltpu.CompilerParams(
            dimension_semantics=("parallel",),
            vmem_limit_bytes=_VMEM_LIMIT),
    )(x, g.reshape(1, K), b.reshape(1, K))


# ----------------------------- weight-stationary matmul (lm_head) -----------------------------

def _matmul_kernel(x_ref, w_ref, o_ref):
    o_ref[...] = jnp.dot(x_ref[...], w_ref[...],
                         preferred_element_type=jnp.float32).astype(o_ref.dtype)


def matmul_weight_stationary(x, w, *, out_dtype=jnp.float32, tm_max=512, tn_max=512):
    """y = x @ w with the weight column block kept VMEM-resident: grid = (N tiles, M tiles) with
    M innermost, so each [K, tn] weight block is DMA'd from HBM exactly once (lm_head / vocab)."""
    M, K = x.shape
    N = w.shape[1]
    tm = _pick_sublane_tile(M, tm_max)
    tn, n_pad = _lane_tile(N, tn_max)
    if n_pad != N:
        w = jnp.pad(w, ((0, 0), (0, n_pad - N)))
    out = pl.pallas_call(
        _matmul_kernel,
        out_shape=jax.ShapeDtypeStruct((M, n_pad), out_dtype),
        grid=(n_pad // tn, M // tm),                          # M innermost -> weight stationary
        in_specs=[pl.BlockSpec((tm, K), lambda j, i: (i, 0)),
                  pl.BlockSpec((K, tn), lambda j, i: (0, j))],
        out_specs=pl.BlockSpec((tm, tn), lambda j, i: (i, j)),
        compiler_params=pltpu.CompilerParams(
            dimension_semantics=("parallel", "arbitrary"),
            vmem_limit_bytes=_VMEM_LIMIT),
    )(x, w)
    return out if n_pad == N else out[:, :N]


# ----------------------------- projection + bias + residual -----------------------------

def _matmul_residual_kernel(x_ref, w_ref, bias_ref, res_ref, o_ref, acc_ref):
    @pl.when(pl.program_id(2) == 0)
    def _():
        acc_ref[...] = jnp.zeros_like(acc_ref)

    acc_ref[...] += jnp.dot(x_ref[...], w_ref[...], preferred_element_type=jnp.float32)

    @pl.when(pl.program_id(2) == pl.num_programs(2) - 1)
    def _():
        o_ref[...] = (acc_ref[...] + bias_ref[...] + res_ref[...]).astype(o_ref.dtype)


def matmul_bias_residual(x, w, bias, res, *, out_dtype=jnp.float32,
                         tm_max=256, tn_max=512, tk_max=512):
    M, K = x.shape
    N = w.shape[1]
    tm = _pick_sublane_tile(M, tm_max)
    tn = _divisor_lane_tile(N, tn_max)
    tk = _divisor_lane_tile(K, tk_max)
    return pl.pallas_call(
        _matmul_residual_kernel,
        out_shape=jax.ShapeDtypeStruct((M, N), out_dtype),
        grid=(M // tm, N // tn, K // tk),
        in_specs=[
            pl.BlockSpec((tm, tk), lambda i, j, k: (i, k)),
            pl.BlockSpec((tk, tn), lambda i, j, k: (k, j)),
            pl.BlockSpec((1, tn), lambda i, j, k: (0, j)),
            pl.BlockSpec((tm, tn), lambda i, j, k: (i, j)),
        ],
        out_specs=pl.BlockSpec((tm, tn), lambda i, j, k: (i, j)),
        scratch_shapes=[pltpu.VMEM((tm, tn), jnp.float32)],
        compiler_params=pltpu.CompilerParams(
            dimension_semantics=("parallel", "parallel", "arbitrary"),
            vmem_limit_bytes=_VMEM_LIMIT),
    )(x, w, bias.reshape(1, N), res)


# ----------------------------- fully fused MLP (LN + c_fc + GELU + c_proj + residual) -----------------------------

def _fused_mlp_kernel(x_ref, g_ref, b_ref, wfc_ref, bfc_ref, wproj_ref, bproj_ref, res_ref,
                      o_ref, xn_ref, acc_ref, *, eps):
    """K-tiled over the 4E hidden: each step computes a GELU'd fc chunk in VMEM and immediately
    contracts it into the f32 accumulator — the [tm, 4E] hidden never leaves VMEM."""
    @pl.when(pl.program_id(1) == 0)
    def _():
        x = x_ref[...]                                        # (tm, E) f32
        mean = jnp.mean(x, axis=-1, keepdims=True)
        var = jnp.mean(jnp.square(x - mean), axis=-1, keepdims=True)
        xn = (x - mean) * jax.lax.rsqrt(var + eps)
        xn_ref[...] = (xn * g_ref[...] + b_ref[...]).astype(xn_ref.dtype)
        acc_ref[...] = jnp.zeros_like(acc_ref)

    h = jnp.dot(xn_ref[...], wfc_ref[...], preferred_element_type=jnp.float32) + bfc_ref[...]
    # GPT-2 "gelu_new", computed in f32 (v5e VPU has no bf16)
    h = 0.5 * h * (1.0 + jnp.tanh(0.7978845608028654 * (h + 0.044715 * h * h * h)))
    acc_ref[...] += jnp.dot(h.astype(wproj_ref.dtype), wproj_ref[...],
                            preferred_element_type=jnp.float32)

    @pl.when(pl.program_id(1) == pl.num_programs(1) - 1)
    def _():
        o_ref[...] = (acc_ref[...] + bproj_ref[...] + res_ref[...]).astype(o_ref.dtype)


def fused_mlp(x, g, b, wfc, bfc, wproj, bproj, res, *, eps, out_dtype=jnp.float32,
              tm_max=256, th_max=512):
    M, E = x.shape
    I = wfc.shape[1]
    tm = _pick_sublane_tile(M, tm_max)
    th = _divisor_lane_tile(I, th_max)
    return pl.pallas_call(
        functools.partial(_fused_mlp_kernel, eps=eps),
        out_shape=jax.ShapeDtypeStruct((M, E), out_dtype),
        grid=(M // tm, I // th),
        in_specs=[
            pl.BlockSpec((tm, E), lambda i, k: (i, 0)),
            pl.BlockSpec((1, E), lambda i, k: (0, 0)),
            pl.BlockSpec((1, E), lambda i, k: (0, 0)),
            pl.BlockSpec((E, th), lambda i, k: (0, k)),
            pl.BlockSpec((1, th), lambda i, k: (0, k)),
            pl.BlockSpec((th, E), lambda i, k: (k, 0)),
            pl.BlockSpec((1, E), lambda i, k: (0, 0)),
            pl.BlockSpec((tm, E), lambda i, k: (i, 0)),
        ],
        out_specs=pl.BlockSpec((tm, E), lambda i, k: (i, 0)),
        scratch_shapes=[pltpu.VMEM((tm, E), jnp.bfloat16),     # cached LN(x)
                        pltpu.VMEM((tm, E), jnp.float32)],     # f32 accumulator
        compiler_params=pltpu.CompilerParams(
            dimension_semantics=("parallel", "arbitrary"),
            vmem_limit_bytes=_VMEM_LIMIT),
    )(x, g.reshape(1, E), b.reshape(1, E), wfc, bfc.reshape(1, I),
      wproj, bproj.reshape(1, E), res)


# ----------------------------- attention -----------------------------

def _attn_kernel(q_ref, k_ref, v_ref, m_ref, o_ref, *, n_pack, head_dim, causal, tq):
    """Attention for `n_pack` packed heads, one (batch, head-group, query-tile) grid cell.
    Softmax in f32; causal + additive key mask combined in one jnp.where (no -inf overflow);
    pl.reciprocal(approx=True) on the denominator, scaling the (tq, Dh) output."""
    qb = q_ref[0]           # (tq,  n_pack*Dh)  bf16
    kb = k_ref[0]           # (Skv, n_pack*Dh)  bf16
    vb = v_ref[0]           # (Skv, n_pack*Dh)  bf16
    mask = m_ref[0]         # (1, Skv)          f32 additive key-side mask
    inv_scale = 1.0 / math.sqrt(head_dim)
    row_off = pl.program_id(2) * tq
    outs = []
    for h in range(n_pack):
        sl = slice(h * head_dim, (h + 1) * head_dim)
        q = qb[:, sl]
        k = kb[:, sl]
        v = vb[:, sl]
        s = jax.lax.dot_general(q, k, (((1,), (1,)), ((), ())),
                                preferred_element_type=jnp.float32)   # (tq, Skv)
        s = s * inv_scale
        if causal:
            rows = jax.lax.broadcasted_iota(jnp.int32, s.shape, 0) + row_off
            cols = jax.lax.broadcasted_iota(jnp.int32, s.shape, 1)
            s = jnp.where(cols <= rows, s + mask, F32_MIN)
        else:
            s = s + mask
        s = s - jnp.max(s, axis=-1, keepdims=True)
        p = jnp.exp(s)
        inv_l = pl.reciprocal(jnp.sum(p, axis=-1, keepdims=True), approx=True)
        acc = jax.lax.dot_general(p.astype(v.dtype), v, (((1,), (0,)), ((), ())),
                                  preferred_element_type=jnp.float32)
        outs.append(acc * inv_l)                       # scale (tq, Dh), not (tq, Skv)
    o = outs[0] if n_pack == 1 else jnp.concatenate(outs, axis=-1)
    o_ref[0] = o.astype(o_ref.dtype)


def self_attention(qkv, add_mask, n_head, head_dim, *, tq_max=256):
    """qkv: [B, S, 3E] (fused QKV), add_mask: [B, 1, S] additive.  Returns [B, S, E].
    Grid = (B, head-groups, query tiles); K/V index_maps are independent of the query-tile axis
    so they stay VMEM-resident while the score tile stays bounded."""
    B, S, _ = qkv.shape
    E = n_head * head_dim
    hg = _heads_per_block(n_head, head_dim)
    G = n_head // hg
    W = hg * head_dim
    tq = _pick_sublane_tile(S, tq_max)
    kern = functools.partial(_attn_kernel, n_pack=hg, head_dim=head_dim, causal=True, tq=tq)
    return pl.pallas_call(
        kern,
        out_shape=jax.ShapeDtypeStruct((B, S, E), jnp.bfloat16),
        grid=(B, G, S // tq),
        in_specs=[
            pl.BlockSpec((1, tq, W), lambda b, g, t: (b, t, g)),           # q columns
            pl.BlockSpec((1, S, W), lambda b, g, t: (b, 0, G + g)),        # k columns (resident)
            pl.BlockSpec((1, S, W), lambda b, g, t: (b, 0, 2 * G + g)),    # v columns (resident)
            pl.BlockSpec((1, 1, S), lambda b, g, t: (b, 0, 0)),            # mask shared over heads
        ],
        out_specs=pl.BlockSpec((1, tq, W), lambda b, g, t: (b, t, g)),     # merged [B,S,E] store
        compiler_params=pltpu.CompilerParams(
            dimension_semantics=("parallel", "parallel", "parallel"),
            vmem_limit_bytes=_VMEM_LIMIT),
    )(qkv, qkv, qkv, add_mask)


def cross_attention_op(q, kv, add_mask_kv, n_head, head_dim, *, tq_max=256):
    """q: [B, S2, E] (stream-2), kv: [B, S1, 2E] (stream-1), key-side mask [B, 1, S1].  No causal."""
    B, S2, E = q.shape
    S1 = kv.shape[1]
    hg = _heads_per_block(n_head, head_dim)
    G = n_head // hg
    W = hg * head_dim
    tq = _pick_sublane_tile(S2, tq_max)
    kern = functools.partial(_attn_kernel, n_pack=hg, head_dim=head_dim, causal=False, tq=tq)
    return pl.pallas_call(
        kern,
        out_shape=jax.ShapeDtypeStruct((B, S2, E), jnp.bfloat16),
        grid=(B, G, S2 // tq),
        in_specs=[
            pl.BlockSpec((1, tq, W), lambda b, g, t: (b, t, g)),           # q columns
            pl.BlockSpec((1, S1, W), lambda b, g, t: (b, 0, g)),           # k columns of kv
            pl.BlockSpec((1, S1, W), lambda b, g, t: (b, 0, G + g)),       # v columns of kv
            pl.BlockSpec((1, 1, S1), lambda b, g, t: (b, 0, 0)),
        ],
        out_specs=pl.BlockSpec((1, tq, W), lambda b, g, t: (b, t, g)),
        compiler_params=pltpu.CompilerParams(
            dimension_semantics=("parallel", "parallel", "parallel"),
            vmem_limit_bytes=_VMEM_LIMIT),
    )(q, kv, kv, add_mask_kv)


# ----------------------------- model glue (plain JAX between fused kernels) -----------------------------

def block_forward(h1, h2, am1, am2, lp, n_head, head_dim, eps):
    B, S1, E = h1.shape
    S2 = h2.shape[1]
    M1, M2 = B * S1, B * S2
    f1, f2 = h1.reshape(M1, E), h2.reshape(M2, E)

    # --- self-attention (both streams): fused LN+QKV -> attention -> fused proj+residual ---
    qkv1 = ln_matmul(f1, lp["ln_1_g"], lp["ln_1_b"],
                     lp["attn1"]["c_attn_w"], lp["attn1"]["c_attn_b"], eps=eps)
    a1 = self_attention(qkv1.reshape(B, S1, 3 * E), am1, n_head, head_dim)
    f1 = matmul_bias_residual(a1.reshape(M1, E), lp["attn1"]["c_proj_w"],
                              lp["attn1"]["c_proj_b"], f1)

    qkv2 = ln_matmul(f2, lp["ln_2_g"], lp["ln_2_b"],
                     lp["attn2"]["c_attn_w"], lp["attn2"]["c_attn_b"], eps=eps)
    a2 = self_attention(qkv2.reshape(B, S2, 3 * E), am2, n_head, head_dim)
    f2 = matmul_bias_residual(a2.reshape(M2, E), lp["attn2"]["c_proj_w"],
                              lp["attn2"]["c_proj_b"], f2)

    # --- cross-attention: query from stream-2 (ln_4), key/value from stream-1 (ln_3),
    #     key-side mask from stream-1; no causal mask.  Stream-1 passes through unchanged. ---
    q = ln_matmul(f2, lp["ln_4_g"], lp["ln_4_b"],
                  lp["cross"]["q_attn_w"], lp["cross"]["q_attn_b"], eps=eps)
    kv = ln_matmul(f1, lp["ln_3_g"], lp["ln_3_b"],
                   lp["cross"]["c_attn_w"], lp["cross"]["c_attn_b"], eps=eps)
    ca = cross_attention_op(q.reshape(B, S2, E), kv.reshape(B, S1, 2 * E), am1,
                            n_head, head_dim)
    f2 = matmul_bias_residual(ca.reshape(M2, E), lp["cross"]["c_proj_w"],
                              lp["cross"]["c_proj_b"], f2)

    # --- MLPs: single fused LN + c_fc + GELU + c_proj + residual kernel per stream ---
    f1 = fused_mlp(f1, lp["ln_5_g"], lp["ln_5_b"],
                   lp["mlp1"]["c_fc_w"], lp["mlp1"]["c_fc_b"],
                   lp["mlp1"]["c_proj_w"], lp["mlp1"]["c_proj_b"], f1, eps=eps)
    f2 = fused_mlp(f2, lp["ln_6_g"], lp["ln_6_b"],
                   lp["mlp2"]["c_fc_w"], lp["mlp2"]["c_fc_b"],
                   lp["mlp2"]["c_proj_w"], lp["mlp2"]["c_proj_b"], f2, eps=eps)

    return f1.reshape(B, S1, E), f2.reshape(B, S2, E)


def cross_attention_gpt2_forward(params, input_ids1, input_ids2,
                                 attention_mask1, attention_mask2, cfg):
    B, S1 = input_ids1.shape
    S2 = input_ids2.shape[1]
    E, V = cfg["n_embd"], cfg["vocab"]
    H = cfg["n_head"]
    Dh = E // H
    eps = cfg["ln_eps"]

    # Embedding gather + positional add kept in plain JAX (f32 residual stream).
    h1 = jnp.take(params["wte1"], input_ids1, axis=0) + params["wpe1"][:S1][None]
    h2 = jnp.take(params["wte2"], input_ids2, axis=0) + params["wpe2"][:S2][None]
    # TODO(synk): drop1/drop2 and in-block dropouts are stochastic; treated as identity (eval mode).

    # Additive masks kept as [B, 1, S] — broadcast over heads through the attention index_map.
    am1 = ((1.0 - attention_mask1.astype(jnp.float32)) * F32_MIN)[:, None, :]
    am2 = ((1.0 - attention_mask2.astype(jnp.float32)) * F32_MIN)[:, None, :]

    for lp in params["layers"]:
        h1, h2 = block_forward(h1, h2, am1, am2, lp, H, Dh, eps)

    # Final LN once (bf16), then a weight-stationary vocab projection (lm_head has no bias):
    # the [E, V] weight is streamed from HBM exactly once, LN is computed exactly once per row.
    h2n = layernorm(h2.reshape(B * S2, E), params["ln_f_g"], params["ln_f_b"], eps=eps)
    logits = matmul_weight_stationary(h2n, params["lm_head_w"], out_dtype=jnp.float32)
    return logits.reshape(B, S2, V)


# ----------------------------- deterministic parameter init -----------------------------

def init_params(key, cfg):
    E, V, P, L = cfg["n_embd"], cfg["vocab"], cfg["n_pos"], cfg["n_layer"]
    I = 4 * E
    keys = iter(jax.random.split(key, 1024))

    def nrm_f32(shape, std=0.02):
        return jax.random.normal(next(keys), shape, jnp.float32) * std

    def nrm_w(shape, std=0.02):     # matmul weights stored in bf16 (MXU-native, half the DMA)
        return nrm_f32(shape, std).astype(jnp.bfloat16)

    zeros = lambda s: jnp.zeros(s, jnp.float32)
    ones = lambda s: jnp.ones(s, jnp.float32)

    params = {
        "wte1": nrm_f32((V, E)), "wpe1": nrm_f32((P, E), 0.01),
        "wte2": nrm_f32((V, E)), "wpe2": nrm_f32((P, E), 0.01),
        "ln_f_g": ones((E,)), "ln_f_b": zeros((E,)),
    }
    # Weight tying as in GPT2LMHeadModel (materialized; fine for pure inference).
    params["lm_head_w"] = params["wte2"].T.astype(jnp.bfloat16)

    layers = []
    for _ in range(L):
        lp = {}
        for name in ["ln_1", "ln_2", "ln_3", "ln_4", "ln_5", "ln_6"]:
            lp[name + "_g"] = ones((E,))
            lp[name + "_b"] = zeros((E,))
        lp["attn1"] = {"c_attn_w": nrm_w((E, 3 * E)), "c_attn_b": zeros((3 * E,)),
                       "c_proj_w": nrm_w((E, E)), "c_proj_b": zeros((E,))}
        lp["attn2"] = {"c_attn_w": nrm_w((E, 3 * E)), "c_attn_b": zeros((3 * E,)),
                       "c_proj_w": nrm_w((E, E)), "c_proj_b": zeros((E,))}
        lp["cross"] = {"q_attn_w": nrm_w((E, E)), "q_attn_b": zeros((E,)),
                       "c_attn_w": nrm_w((E, 2 * E)), "c_attn_b": zeros((2 * E,)),
                       "c_proj_w": nrm_w((E, E)), "c_proj_b": zeros((E,))}
        lp["mlp1"] = {"c_fc_w": nrm_w((E, I)), "c_fc_b": zeros((I,)),
                      "c_proj_w": nrm_w((I, E)), "c_proj_b": zeros((E,))}
        lp["mlp2"] = {"c_fc_w": nrm_w((E, I)), "c_fc_b": zeros((I,)),
                      "c_proj_w": nrm_w((I, E)), "c_proj_b": zeros((E,))}
        layers.append(lp)
    params["layers"] = layers
    return params


# ----------------------------- main -----------------------------

if __name__ == "__main__":
    # Small shapes; n_embd/n_head chosen so head_dim=64 (GPT-2-like) and the packed-head
    # attention blocks are 128 lanes wide.
    cfg = dict(vocab=512, n_embd=128, n_head=2, n_layer=2, n_pos=16, ln_eps=1e-5)

    key = jax.random.PRNGKey(0)
    kp, k1, k2 = jax.random.split(key, 3)
    params = init_params(kp, cfg)

    B, S = 2, 8
    input_ids1 = jax.random.randint(k1, (B, S), 0, cfg["vocab"], dtype=jnp.int32)
    input_ids2 = jax.random.randint(k2, (B, S), 0, cfg["vocab"], dtype=jnp.int32)
    attention_mask1 = jnp.ones((B, S), jnp.float32).at[:, -2:].set(0.0)  # last 2 tokens padded
    attention_mask2 = jnp.ones((B, S), jnp.float32).at[:, -1:].set(0.0)  # last token padded

    fwd = jax.jit(functools.partial(cross_attention_gpt2_forward, cfg=cfg))
    logits = fwd(params, input_ids1, input_ids2, attention_mask1, attention_mask2)
    logits = jax.block_until_ready(logits)

    assert logits.shape == (B, S, cfg["vocab"]), logits.shape
    assert bool(jnp.all(jnp.isfinite(logits)))
    print("KERNEL_OK")
</pallas_src>

<mosaic_0001>
module attributes {stable_mosaic.version = 11 : i64} {
  func.func @_attn_kernel(%arg0: i32, %arg1: i32, %arg2: i32, %arg3: memref<1x8x128xbf16, #tpu.memory_space<vmem>>, %arg4: memref<1x8x128xbf16, #tpu.memory_space<vmem>>, %arg5: memref<1x8x128xbf16, #tpu.memory_space<vmem>>, %arg6: memref<1x1x8xf32, #tpu.memory_space<vmem>>, %arg7: memref<1x8x128xbf16, #tpu.memory_space<vmem>>) attributes {dimension_semantics = [#tpu.dimension_semantics<parallel>, #tpu.dimension_semantics<parallel>, #tpu.dimension_semantics<parallel>], iteration_bounds = array<i64: 2, 1, 1>, scalar_prefetch = 0 : i64, scratch_operands = 0 : i64, tpu.core_type = #tpu.core_type<tc>, window_params = [{transform_indices = @transform_0, window_bounds = array<i64: 1, 8, 128>}, {transform_indices = @transform_1, window_bounds = array<i64: 1, 8, 128>}, {transform_indices = @transform_2, window_bounds = array<i64: 1, 8, 128>}, {transform_indices = @transform_3, window_bounds = array<i64: 1, 1, 8>}, {transform_indices = @transform_4, window_bounds = array<i64: 1, 8, 128>}]} {
    %c0 = arith.constant 0 : index
    %c0_0 = arith.constant 0 : index
    %c0_1 = arith.constant 0 : index
    %0 = vector.load %arg3[%c0, %c0_0, %c0_1] : memref<1x8x128xbf16, #tpu.memory_space<vmem>>, vector<1x8x128xbf16>
    %1 = vector.shape_cast %0 : vector<1x8x128xbf16> to vector<8x128xbf16>
    %c0_2 = arith.constant 0 : index
    %c0_3 = arith.constant 0 : index
    %c0_4 = arith.constant 0 : index
    %2 = vector.load %arg4[%c0_2, %c0_3, %c0_4] : memref<1x8x128xbf16, #tpu.memory_space<vmem>>, vector<1x8x128xbf16>
    %3 = vector.shape_cast %2 : vector<1x8x128xbf16> to vector<8x128xbf16>
    %c0_5 = arith.constant 0 : index
    %c0_6 = arith.constant 0 : index
    %c0_7 = arith.constant 0 : index
    %4 = vector.load %arg5[%c0_5, %c0_6, %c0_7] : memref<1x8x128xbf16, #tpu.memory_space<vmem>>, vector<1x8x128xbf16>
    %5 = vector.shape_cast %4 : vector<1x8x128xbf16> to vector<8x128xbf16>
    %c0_8 = arith.constant 0 : index
    %c0_9 = arith.constant 0 : index
    %c0_10 = arith.constant 0 : index
    %6 = vector.load %arg6[%c0_8, %c0_9, %c0_10] : memref<1x1x8xf32, #tpu.memory_space<vmem>>, vector<1x1x8xf32>
    %7 = vector.shape_cast %6 : vector<1x1x8xf32> to vector<1x8xf32>
    %c8_i32 = arith.constant 8 : i32
    %8 = arith.muli %arg2, %c8_i32 : i32
    %9 = vector.extract_strided_slice %1 {offsets = [0, 0], sizes = [8, 64], strides = [1, 1]} : vector<8x128xbf16> to vector<8x64xbf16>
    %10 = vector.extract_strided_slice %3 {offsets = [0, 0], sizes = [8, 64], strides = [1, 1]} : vector<8x128xbf16> to vector<8x64xbf16>
    %11 = vector.extract_strided_slice %5 {offsets = [0, 0], sizes = [8, 64], strides = [1, 1]} : vector<8x128xbf16> to vector<8x64xbf16>
    %cst = arith.constant dense<0.000000e+00> : vector<8x8xf32>
    %12 = tpu.matmul %9, %10, %cst {dimension_numbers = #tpu.dot_dimension_numbers<[1], [1], [0], [0], [0, 0, 1, 0], [], []>} : vector<8x64xbf16>, vector<8x64xbf16>, vector<8x8xf32> -> vector<8x8xf32>
    %cst_11 = arith.constant 1.250000e-01 : f32
    %13 = vector.broadcast %cst_11 : f32 to vector<8x8xf32>
    %14 = arith.mulf %12, %13 : vector<8x8xf32>
    %15 = tpu.iota {dimensions = array<i32: 0>} : vector<8x8xi32>
    %16 = vector.broadcast %8 : i32 to vector<8x8xi32>
    %17 = arith.addi %15, %16 : vector<8x8xi32>
    %18 = tpu.iota {dimensions = array<i32: 1>} : vector<8x8xi32>
    %19 = arith.cmpi sle, %18, %17 : vector<8x8xi32>
    %20 = vector.broadcast %7 : vector<1x8xf32> to vector<8x8xf32>
    %21 = arith.addf %14, %20 : vector<8x8xf32>
    %cst_12 = arith.constant -3.40282347E+38 : f32
    %22 = vector.broadcast %cst_12 : f32 to vector<8x8xf32>
    %23 = arith.select %19, %21, %22 : vector<8x8xi1>, vector<8x8xf32>
    %cst_13 = arith.constant dense<0xFF800000> : vector<8xf32>
    %24 = vector.multi_reduction <maximumf>, %23, %cst_13 [1] : vector<8x8xf32> to vector<8xf32>
    %25 = vector.shape_cast %24 : vector<8xf32> to vector<8x1xf32>
    %26 = vector.broadcast %25 : vector<8x1xf32> to vector<8x8xf32>
    %27 = arith.subf %23, %26 : vector<8x8xf32>
    %28 = math.exp %27 : vector<8x8xf32>
    %cst_14 = arith.constant dense<0.000000e+00> : vector<8xf32>
    %29 = vector.multi_reduction <add>, %28, %cst_14 [1] : vector<8x8xf32> to vector<8xf32>
    %30 = vector.shape_cast %29 : vector<8xf32> to vector<8x1xf32>
    %31 = tpu.reciprocal %30 {approx = true} : vector<8x1xf32> -> vector<8x1xf32>
    %32 = arith.truncf %28 : vector<8x8xf32> to vector<8x8xbf16>
    %cst_15 = arith.constant dense<0.000000e+00> : vector<8x64xf32>
    %33 = tpu.matmul %32, %11, %cst_15 {dimension_numbers = #tpu.dot_dimension_numbers<[1], [0], [0], [1], [0, 0, 1, 1], [], []>} : vector<8x8xbf16>, vector<8x64xbf16>, vector<8x64xf32> -> vector<8x64xf32>
    %34 = vector.broadcast %31 : vector<8x1xf32> to vector<8x64xf32>
    %35 = arith.mulf %33, %34 : vector<8x64xf32>
    %36 = vector.extract_strided_slice %1 {offsets = [0, 64], sizes = [8, 64], strides = [1, 1]} : vector<8x128xbf16> to vector<8x64xbf16>
    %37 = vector.extract_strided_slice %3 {offsets = [0, 64], sizes = [8, 64], strides = [1, 1]} : vector<8x128xbf16> to vector<8x64xbf16>
    %38 = vector.extract_strided_slice %5 {offsets = [0, 64], sizes = [8, 64], strides = [1, 1]} : vector<8x128xbf16> to vector<8x64xbf16>
    %cst_16 = arith.constant dense<0.000000e+00> : vector<8x8xf32>
    %39 = tpu.matmul %36, %37, %cst_16 {dimension_numbers = #tpu.dot_dimension_numbers<[1], [1], [0], [0], [0, 0, 1, 0], [], []>} : vector<8x64xbf16>, vector<8x64xbf16>, vector<8x8xf32> -> vector<8x8xf32>
    %cst_17 = arith.constant 1.250000e-01 : f32
    %40 = vector.broadcast %cst_17 : f32 to vector<8x8xf32>
    %41 = arith.mulf %39, %40 : vector<8x8xf32>
    %42 = tpu.iota {dimensions = array<i32: 0>} : vector<8x8xi32>
    %43 = vector.broadcast %8 : i32 to vector<8x8xi32>
    %44 = arith.addi %42, %43 : vector<8x8xi32>
    %45 = tpu.iota {dimensions = array<i32: 1>} : vector<8x8xi32>
    %46 = arith.cmpi sle, %45, %44 : vector<8x8xi32>
    %47 = vector.broadcast %7 : vector<1x8xf32> to vector<8x8xf32>
    %48 = arith.addf %41, %47 : vector<8x8xf32>
    %cst_18 = arith.constant -3.40282347E+38 : f32
    %49 = vector.broadcast %cst_18 : f32 to vector<8x8xf32>
    %50 = arith.select %46, %48, %49 : vector<8x8xi1>, vector<8x8xf32>
    %cst_19 = arith.constant dense<0xFF800000> : vector<8xf32>
    %51 = vector.multi_reduction <maximumf>, %50, %cst_19 [1] : vector<8x8xf32> to vector<8xf32>
    %52 = vector.shape_cast %51 : vector<8xf32> to vector<8x1xf32>
    %53 = vector.broadcast %52 : vector<8x1xf32> to vector<8x8xf32>
    %54 = arith.subf %50, %53 : vector<8x8xf32>
    %55 = math.exp %54 : vector<8x8xf32>
    %cst_20 = arith.constant dense<0.000000e+00> : vector<8xf32>
    %56 = vector.multi_reduction <add>, %55, %cst_20 [1] : vector<8x8xf32> to vector<8xf32>
    %57 = vector.shape_cast %56 : vector<8xf32> to vector<8x1xf32>
    %58 = tpu.reciprocal %57 {approx = true} : vector<8x1xf32> -> vector<8x1xf32>
    %59 = arith.truncf %55 : vector<8x8xf32> to vector<8x8xbf16>
    %cst_21 = arith.constant dense<0.000000e+00> : vector<8x64xf32>
    %60 = tpu.matmul %59, %38, %cst_21 {dimension_numbers = #tpu.dot_dimension_numbers<[1], [0], [0], [1], [0, 0, 1, 1], [], []>} : vector<8x8xbf16>, vector<8x64xbf16>, vector<8x64xf32> -> vector<8x64xf32>
    %61 = vector.broadcast %58 : vector<8x1xf32> to vector<8x64xf32>
    %62 = arith.mulf %60, %61 : vector<8x64xf32>
    %63 = tpu.concatenate %35, %62 in 1 : vector<8x64xf32>, vector<8x64xf32> -> vector<8x128xf32>
    %64 = arith.truncf %63 : vector<8x128xf32> to vector<8x128xbf16>
    %c0_22 = arith.constant 0 : index
    %c0_23 = arith.constant 0 : index
    %c0_24 = arith.constant 0 : index
    %65 = vector.load %arg7[%c0_22, %c0_23, %c0_24] : memref<1x8x128xbf16, #tpu.memory_space<vmem>>, vector<1x8x128xbf16>
    %66 = vector.shape_cast %65 : vector<1x8x128xbf16> to vector<8x128xbf16>
    %67 = vector.shape_cast %64 : vector<8x128xbf16> to vector<1x8x128xbf16>
    tpu.vector_store %arg7[%c0_22, %c0_23, %c0_24], %67 {strides = array<i32>} : memref<1x8x128xbf16, #tpu.memory_space<vmem>>, vector<1x8x128xbf16>,
    return
  }
  func.func @transform_0(%arg0: i32, %arg1: i32, %arg2: i32) -> (i32, i32, i32) {
    %c0_i32 = arith.constant 0 : i32
    return %arg0, %arg2, %arg1 : i32, i32, i32
  }
  func.func @transform_1(%arg0: i32, %arg1: i32, %arg2: i32) -> (i32, i32, i32) {
    %c1_i32 = arith.constant 1 : i32
    %0 = arith.addi %c1_i32, %arg1 : i32
    %c0_i32 = arith.constant 0 : i32
    %c0_i32_0 = arith.constant 0 : i32
    return %arg0, %c0_i32, %0 : i32, i32, i32
  }
  func.func @transform_2(%arg0: i32, %arg1: i32, %arg2: i32) -> (i32, i32, i32) {
    %c2_i32 = arith.constant 2 : i32
    %0 = arith.addi %c2_i32, %arg1 : i32
    %c0_i32 = arith.constant 0 : i32
    %c0_i32_0 = arith.constant 0 : i32
    return %arg0, %c0_i32, %0 : i32, i32, i32
  }
  func.func @transform_3(%arg0: i32, %arg1: i32, %arg2: i32) -> (i32, i32, i32) {
    %c0_i32 = arith.constant 0 : i32
    %c0_i32_0 = arith.constant 0 : i32
    %c0_i32_1 = arith.constant 0 : i32
    return %arg0, %c0_i32, %c0_i32_0 : i32, i32, i32
  }
  func.func @transform_4(%arg0: i32, %arg1: i32, %arg2: i32) -> (i32, i32, i32) {
    %c0_i32 = arith.constant 0 : i32
    return %arg0, %arg2, %arg1 : i32, i32, i32
  }
}

module attributes {stable_mosaic.version = 11 : i64} {
  func.func @_ln_matmul_kernel(%arg0: i32, %arg1: i32, %arg2: memref<16x128xf32, #tpu.memory_space<vmem>>, %arg3: memref<1x128xf32, #tpu.memory_space<vmem>>, %arg4: memref<1x128xf32, #tpu.memory_space<vmem>>, %arg5: memref<128x384xbf16, #tpu.memory_space<vmem>>, %arg6: memref<1x384xf32, #tpu.memory_space<vmem>>, %arg7: memref<16x384xbf16, #tpu.memory_space<vmem>>, %arg8: memref<16x128xbf16, #tpu.memory_space<vmem>>) attributes {dimension_semantics = [#tpu.dimension_semantics<parallel>, #tpu.dimension_semantics<arbitrary>], iteration_bounds = array<i64: 1, 1>, scalar_prefetch = 0 : i64, scratch_operands = 1 : i64, tpu.core_type = #tpu.core_type<tc>, window_params = [{transform_indices = @transform_0, window_bounds = array<i64: 16, 128>}, {pipeline_mode = #tpu.pipeline_mode<synchronous>, transform_indices = @transform_1, window_bounds = array<i64: 1, 128>}, {pipeline_mode = #tpu.pipeline_mode<synchronous>, transform_indices = @transform_2, window_bounds = array<i64: 1, 128>}, {transform_indices = @transform_3, window_bounds = array<i64: 128, 384>}, {transform_indices = @transform_4, window_bounds = array<i64: 1, 384>}, {transform_indices = @transform_5, window_bounds = array<i64: 16, 384>}]} {
    %c0_i32 = arith.constant 0 : i32
    %0 = arith.cmpi eq, %arg1, %c0_i32 : i32
    %1 = arith.extui %0 : i1 to i32
    %c0_i32_0 = arith.constant 0 : i32
    %2 = arith.cmpi ne, %1, %c0_i32_0 : i32
    scf.if %2 {
      %c0_8 = arith.constant 0 : index
      %c0_9 = arith.constant 0 : index
      %11 = vector.load %arg2[%c0_8, %c0_9] : memref<16x128xf32, #tpu.memory_space<vmem>>, vector<16x128xf32>
      %cst_10 = arith.constant dense<0.000000e+00> : vector<16xf32>
      %12 = vector.multi_reduction <add>, %11, %cst_10 [1] : vector<16x128xf32> to vector<16xf32>
      %13 = vector.shape_cast %12 : vector<16xf32> to vector<16x1xf32>
      %cst_11 = arith.constant 1.280000e+02 : f32
      %14 = vector.broadcast %cst_11 : f32 to vector<16x1xf32>
      %15 = arith.divf %13, %14 : vector<16x1xf32>
      %16 = vector.broadcast %15 : vector<16x1xf32> to vector<16x128xf32>
      %17 = arith.subf %11, %16 : vector<16x128xf32>
      %18 = arith.mulf %17, %17 : vector<16x128xf32>
      %cst_12 = arith.constant dense<0.000000e+00> : vector<16xf32>
      %19 = vector.multi_reduction <add>, %18, %cst_12 [1] : vector<16x128xf32> to vector<16xf32>
      %20 = vector.shape_cast %19 : vector<16xf32> to vector<16x1xf32>
      %cst_13 = arith.constant 1.280000e+02 : f32
      %21 = vector.broadcast %cst_13 : f32 to vector<16x1xf32>
      %22 = arith.divf %20, %21 : vector<16x1xf32>
      %23 = vector.broadcast %15 : vector<16x1xf32> to vector<16x128xf32>
      %24 = arith.subf %11, %23 : vector<16x128xf32>
      %cst_14 = arith.constant 9.99999974E-6 : f32
      %25 = vector.broadcast %cst_14 : f32 to vector<16x1xf32>
      %26 = arith.addf %22, %25 : vector<16x1xf32>
      %27 = math.rsqrt %26 : vector<16x1xf32>
      %28 = vector.broadcast %27 : vector<16x1xf32> to vector<16x128xf32>
      %29 = arith.mulf %24, %28 : vector<16x128xf32>
      %c0_15 = arith.constant 0 : index
      %c0_16 = arith.constant 0 : index
      %30 = vector.load %arg3[%c0_15, %c0_16] : memref<1x128xf32, #tpu.memory_space<vmem>>, vector<1x128xf32>
      %31 = vector.broadcast %30 : vector<1x128xf32> to vector<16x128xf32>
      %32 = arith.mulf %29, %31 : vector<16x128xf32>
      %c0_17 = arith.constant 0 : index
      %c0_18 = arith.constant 0 : index
      %33 = vector.load %arg4[%c0_17, %c0_18] : memref<1x128xf32, #tpu.memory_space<vmem>>, vector<1x128xf32>
      %34 = vector.broadcast %33 : vector<1x128xf32> to vector<16x128xf32>
      %35 = arith.addf %32, %34 : vector<16x128xf32>
      %36 = arith.truncf %35 : vector<16x128xf32> to vector<16x128xbf16>
      %c0_19 = arith.constant 0 : index
      %c0_20 = arith.constant 0 : index
      %37 = vector.load %arg8[%c0_19, %c0_20] : memref<16x128xbf16, #tpu.memory_space<vmem>>, vector<16x128xbf16>
      tpu.vector_store %arg8[%c0_19, %c0_20], %36 {strides = array<i32>} : memref<16x128xbf16, #tpu.memory_space<vmem>>, vector<16x128xbf16>,
    } else {
    }
    %c0 = arith.constant 0 : index
    %c0_1 = arith.constant 0 : index
    %3 = vector.load %arg8[%c0, %c0_1] : memref<16x128xbf16, #tpu.memory_space<vmem>>, vector<16x128xbf16>
    %c0_2 = arith.constant 0 : index
    %c0_3 = arith.constant 0 : index
    %4 = vector.load %arg5[%c0_2, %c0_3] : memref<128x384xbf16, #tpu.memory_space<vmem>>, vector<128x384xbf16>
    %cst = arith.constant dense<0.000000e+00> : vector<16x384xf32>
    %5 = tpu.matmul %3, %4, %cst {dimension_numbers = #tpu.dot_dimension_numbers<[1], [0], [0], [1], [0, 0, 1, 1], [], []>} : vector<16x128xbf16>, vector<128x384xbf16>, vector<16x384xf32> -> vector<16x384xf32>
    %c0_4 = arith.constant 0 : index
    %c0_5 = arith.constant 0 : index
    %6 = vector.load %arg6[%c0_4, %c0_5] : memref<1x384xf32, #tpu.memory_space<vmem>>, vector<1x384xf32>
    %7 = vector.broadcast %6 : vector<1x384xf32> to vector<16x384xf32>
    %8 = arith.addf %5, %7 : vector<16x384xf32>
    %9 = arith.truncf %8 : vector<16x384xf32> to vector<16x384xbf16>
    %c0_6 = arith.constant 0 : index
    %c0_7 = arith.constant 0 : index
    %10 = vector.load %arg7[%c0_6, %c0_7] : memref<16x384xbf16, #tpu.memory_space<vmem>>, vector<16x384xbf16>
    tpu.vector_store %arg7[%c0_6, %c0_7], %9 {strides = array<i32>} : memref<16x384xbf16, #tpu.memory_space<vmem>>, vector<16x384xbf16>,
    return
  }
  func.func @transform_0(%arg0: i32, %arg1: i32) -> (i32, i32) {
    %c0_i32 = arith.constant 0 : i32
    %c0_i32_0 = arith.constant 0 : i32
    return %arg0, %c0_i32 : i32, i32
  }
  func.func @transform_1(%arg0: i32, %arg1: i32) -> (i32, i32) {
    %c0_i32 = arith.constant 0 : i32
    %c0_i32_0 = arith.constant 0 : i32
    %c0_i32_1 = arith.constant 0 : i32
    return %c0_i32, %c0_i32_0 : i32, i32
  }
  func.func @transform_2(%arg0: i32, %arg1: i32) -> (i32, i32) {
    %c0_i32 = arith.constant 0 : i32
    %c0_i32_0 = arith.constant 0 : i32
    %c0_i32_1 = arith.constant 0 : i32
    return %c0_i32, %c0_i32_0 : i32, i32
  }
  func.func @transform_3(%arg0: i32, %arg1: i32) -> (i32, i32) {
    %c0_i32 = arith.constant 0 : i32
    %c0_i32_0 = arith.constant 0 : i32
    return %c0_i32, %arg1 : i32, i32
  }
  func.func @transform_4(%arg0: i32, %arg1: i32) -> (i32, i32) {
    %c0_i32 = arith.constant 0 : i32
    %c0_i32_0 = arith.constant 0 : i32
    return %c0_i32, %arg1 : i32, i32
  }
  func.func @transform_5(%arg0: i32, %arg1: i32) -> (i32, i32) {
    %c0_i32 = arith.constant 0 : i32
    return %arg0, %arg1 : i32, i32
  }
}

module attributes {stable_mosaic.version = 11 : i64} {
  func.func @_matmul_residual_kernel(%arg0: i32, %arg1: i32, %arg2: i32, %arg3: memref<16x128xbf16, #tpu.memory_space<vmem>>, %arg4: memref<128x128xbf16, #tpu.memory_space<vmem>>, %arg5: memref<1x128xf32, #tpu.memory_space<vmem>>, %arg6: memref<16x128xf32, #tpu.memory_space<vmem>>, %arg7: memref<16x128xf32, #tpu.memory_space<vmem>>, %arg8: memref<16x128xf32, #tpu.memory_space<vmem>>) attributes {dimension_semantics = [#tpu.dimension_semantics<parallel>, #tpu.dimension_semantics<parallel>, #tpu.dimension_semantics<arbitrary>], iteration_bounds = array<i64: 1, 1, 1>, scalar_prefetch = 0 : i64, scratch_operands = 1 : i64, tpu.core_type = #tpu.core_type<tc>, window_params = [{transform_indices = @transform_0, window_bounds = array<i64: 16, 128>}, {transform_indices = @transform_1, window_bounds = array<i64: 128, 128>}, {transform_indices = @transform_2, window_bounds = array<i64: 1, 128>}, {transform_indices = @transform_3, window_bounds = array<i64: 16, 128>}, {transform_indices = @transform_4, window_bounds = array<i64: 16, 128>}]} {
    %c0_i32 = arith.constant 0 : i32
    %0 = arith.cmpi eq, %arg2, %c0_i32 : i32
    %1 = arith.extui %0 : i1 to i32
    %c0_i32_0 = arith.constant 0 : i32
    %2 = arith.cmpi ne, %1, %c0_i32_0 : i32
    scf.if %2 {
      %cst_10 = arith.constant 0.000000e+00 : f32
      %12 = vector.broadcast %cst_10 : f32 to vector<16x128xf32>
      %c0_11 = arith.constant 0 : index
      %c0_12 = arith.constant 0 : index
      %13 = vector.load %arg8[%c0_11, %c0_12] : memref<16x128xf32, #tpu.memory_space<vmem>>, vector<16x128xf32>
      tpu.vector_store %arg8[%c0_11, %c0_12], %12 {strides = array<i32>} : memref<16x128xf32, #tpu.memory_space<vmem>>, vector<16x128xf32>,
    } else {
    }
    %c0 = arith.constant 0 : index
    %c0_1 = arith.constant 0 : index
    %3 = vector.load %arg8[%c0, %c0_1] : memref<16x128xf32, #tpu.memory_space<vmem>>, vector<16x128xf32>
    %c0_2 = arith.constant 0 : index
    %c0_3 = arith.constant 0 : index
    %4 = vector.load %arg3[%c0_2, %c0_3] : memref<16x128xbf16, #tpu.memory_space<vmem>>, vector<16x128xbf16>
    %c0_4 = arith.constant 0 : index
    %c0_5 = arith.constant 0 : index
    %5 = vector.load %arg4[%c0_4, %c0_5] : memref<128x128xbf16, #tpu.memory_space<vmem>>, vector<128x128xbf16>
    %cst = arith.constant dense<0.000000e+00> : vector<16x128xf32>
    %6 = tpu.matmul %4, %5, %cst {dimension_numbers = #tpu.dot_dimension_numbers<[1], [0], [0], [1], [0, 0, 1, 1], [], []>} : vector<16x128xbf16>, vector<128x128xbf16>, vector<16x128xf32> -> vector<16x128xf32>
    %7 = arith.addf %3, %6 : vector<16x128xf32>
    %c0_6 = arith.constant 0 : index
    %c0_7 = arith.constant 0 : index
    %8 = vector.load %arg8[%c0_6, %c0_7] : memref<16x128xf32, #tpu.memory_space<vmem>>, vector<16x128xf32>
    tpu.vector_store %arg8[%c0_6, %c0_7], %7 {strides = array<i32>} : memref<16x128xf32, #tpu.memory_space<vmem>>, vector<16x128xf32>,
    %c0_i32_8 = arith.constant 0 : i32
    %9 = arith.cmpi eq, %arg2, %c0_i32_8 : i32
    %10 = arith.extui %9 : i1 to i32
    %c0_i32_9 = arith.constant 0 : i32
    %11 = arith.cmpi ne, %10, %c0_i32_9 : i32
    scf.if %11 {
      %c0_10 = arith.constant 0 : index
      %c0_11 = arith.constant 0 : index
      %12 = vector.load %arg8[%c0_10, %c0_11] : memref<16x128xf32, #tpu.memory_space<vmem>>, vector<16x128xf32>
      %c0_12 = arith.constant 0 : index
      %c0_13 = arith.constant 0 : index
      %13 = vector.load %arg5[%c0_12, %c0_13] : memref<1x128xf32, #tpu.memory_space<vmem>>, vector<1x128xf32>
      %14 = vector.broadcast %13 : vector<1x128xf32> to vector<16x128xf32>
      %15 = arith.addf %12, %14 : vector<16x128xf32>
      %c0_14 = arith.constant 0 : index
      %c0_15 = arith.constant 0 : index
      %16 = vector.load %arg6[%c0_14, %c0_15] : memref<16x128xf32, #tpu.memory_space<vmem>>, vector<16x128xf32>
      %17 = arith.addf %15, %16 : vector<16x128xf32>
      %c0_16 = arith.constant 0 : index
      %c0_17 = arith.constant 0 : index
      %18 = vector.load %arg7[%c0_16, %c0_17] : memref<16x128xf32, #tpu.memory_space<vmem>>, vector<16x128xf32>
      tpu.vector_store %arg7[%c0_16, %c0_17], %17 {strides = array<i32>} : memref<16x128xf32, #tpu.memory_space<vmem>>, vector<16x128xf32>,
    } else {
    }
    return
  }
  func.func @transform_0(%arg0: i32, %arg1: i32, %arg2: i32) -> (i32, i32) {
    %c0_i32 = arith.constant 0 : i32
    return %arg0, %arg2 : i32, i32
  }
  func.func @transform_1(%arg0: i32, %arg1: i32, %arg2: i32) -> (i32, i32) {
    %c0_i32 = arith.constant 0 : i32
    return %arg2, %arg1 : i32, i32
  }
  func.func @transform_2(%arg0: i32, %arg1: i32, %arg2: i32) -> (i32, i32) {
    %c0_i32 = arith.constant 0 : i32
    %c0_i32_0 = arith.constant 0 : i32
    return %c0_i32, %arg1 : i32, i32
  }
  func.func @transform_3(%arg0: i32, %arg1: i32, %arg2: i32) -> (i32, i32) {
    %c0_i32 = arith.constant 0 : i32
    return %arg0, %arg1 : i32, i32
  }
  func.func @transform_4(%arg0: i32, %arg1: i32, %arg2: i32) -> (i32, i32) {
    %c0_i32 = arith.constant 0 : i32
    return %arg0, %arg1 : i32, i32
  }
}

module attributes {stable_mosaic.version = 11 : i64} {
  func.func @_ln_matmul_kernel(%arg0: i32, %arg1: i32, %arg2: memref<16x128xf32, #tpu.memory_space<vmem>>, %arg3: memref<1x128xf32, #tpu.memory_space<vmem>>, %arg4: memref<1x128xf32, #tpu.memory_space<vmem>>, %arg5: memref<128x128xbf16, #tpu.memory_space<vmem>>, %arg6: memref<1x128xf32, #tpu.memory_space<vmem>>, %arg7: memref<16x128xbf16, #tpu.memory_space<vmem>>, %arg8: memref<16x128xbf16, #tpu.memory_space<vmem>>) attributes {dimension_semantics = [#tpu.dimension_semantics<parallel>, #tpu.dimension_semantics<arbitrary>], iteration_bounds = array<i64: 1, 1>, scalar_prefetch = 0 : i64, scratch_operands = 1 : i64, tpu.core_type = #tpu.core_type<tc>, window_params = [{transform_indices = @transform_0, window_bounds = array<i64: 16, 128>}, {pipeline_mode = #tpu.pipeline_mode<synchronous>, transform_indices = @transform_1, window_bounds = array<i64: 1, 128>}, {pipeline_mode = #tpu.pipeline_mode<synchronous>, transform_indices = @transform_2, window_bounds = array<i64: 1, 128>}, {transform_indices = @transform_3, window_bounds = array<i64: 128, 128>}, {transform_indices = @transform_4, window_bounds = array<i64: 1, 128>}, {transform_indices = @transform_5, window_bounds = array<i64: 16, 128>}]} {
    %c0_i32 = arith.constant 0 : i32
    %0 = arith.cmpi eq, %arg1, %c0_i32 : i32
    %1 = arith.extui %0 : i1 to i32
    %c0_i32_0 = arith.constant 0 : i32
    %2 = arith.cmpi ne, %1, %c0_i32_0 : i32
    scf.if %2 {
      %c0_8 = arith.constant 0 : index
      %c0_9 = arith.constant 0 : index
      %11 = vector.load %arg2[%c0_8, %c0_9] : memref<16x128xf32, #tpu.memory_space<vmem>>, vector<16x128xf32>
      %cst_10 = arith.constant dense<0.000000e+00> : vector<16xf32>
      %12 = vector.multi_reduction <add>, %11, %cst_10 [1] : vector<16x128xf32> to vector<16xf32>
      %13 = vector.shape_cast %12 : vector<16xf32> to vector<16x1xf32>
      %cst_11 = arith.constant 1.280000e+02 : f32
      %14 = vector.broadcast %cst_11 : f32 to vector<16x1xf32>
      %15 = arith.divf %13, %14 : vector<16x1xf32>
      %16 = vector.broadcast %15 : vector<16x1xf32> to vector<16x128xf32>
      %17 = arith.subf %11, %16 : vector<16x128xf32>
      %18 = arith.mulf %17, %17 : vector<16x128xf32>
      %cst_12 = arith.constant dense<0.000000e+00> : vector<16xf32>
      %19 = vector.multi_reduction <add>, %18, %cst_12 [1] : vector<16x128xf32> to vector<16xf32>
      %20 = vector.shape_cast %19 : vector<16xf32> to vector<16x1xf32>
      %cst_13 = arith.constant 1.280000e+02 : f32
      %21 = vector.broadcast %cst_13 : f32 to vector<16x1xf32>
      %22 = arith.divf %20, %21 : vector<16x1xf32>
      %23 = vector.broadcast %15 : vector<16x1xf32> to vector<16x128xf32>
      %24 = arith.subf %11, %23 : vector<16x128xf32>
      %cst_14 = arith.constant 9.99999974E-6 : f32
      %25 = vector.broadcast %cst_14 : f32 to vector<16x1xf32>
      %26 = arith.addf %22, %25 : vector<16x1xf32>
      %27 = math.rsqrt %26 : vector<16x1xf32>
      %28 = vector.broadcast %27 : vector<16x1xf32> to vector<16x128xf32>
      %29 = arith.mulf %24, %28 : vector<16x128xf32>
      %c0_15 = arith.constant 0 : index
      %c0_16 = arith.constant 0 : index
      %30 = vector.load %arg3[%c0_15, %c0_16] : memref<1x128xf32, #tpu.memory_space<vmem>>, vector<1x128xf32>
      %31 = vector.broadcast %30 : vector<1x128xf32> to vector<16x128xf32>
      %32 = arith.mulf %29, %31 : vector<16x128xf32>
      %c0_17 = arith.constant 0 : index
      %c0_18 = arith.constant 0 : index
      %33 = vector.load %arg4[%c0_17, %c0_18] : memref<1x128xf32, #tpu.memory_space<vmem>>, vector<1x128xf32>
      %34 = vector.broadcast %33 : vector<1x128xf32> to vector<16x128xf32>
      %35 = arith.addf %32, %34 : vector<16x128xf32>
      %36 = arith.truncf %35 : vector<16x128xf32> to vector<16x128xbf16>
      %c0_19 = arith.constant 0 : index
      %c0_20 = arith.constant 0 : index
      %37 = vector.load %arg8[%c0_19, %c0_20] : memref<16x128xbf16, #tpu.memory_space<vmem>>, vector<16x128xbf16>
      tpu.vector_store %arg8[%c0_19, %c0_20], %36 {strides = array<i32>} : memref<16x128xbf16, #tpu.memory_space<vmem>>, vector<16x128xbf16>,
    } else {
    }
    %c0 = arith.constant 0 : index
    %c0_1 = arith.constant 0 : index
    %3 = vector.load %arg8[%c0, %c0_1] : memref<16x128xbf16, #tpu.memory_space<vmem>>, vector<16x128xbf16>
    %c0_2 = arith.constant 0 : index
    %c0_3 = arith.constant 0 : index
    %4 = vector.load %arg5[%c0_2, %c0_3] : memref<128x128xbf16, #tpu.memory_space<vmem>>, vector<128x128xbf16>
    %cst = arith.constant dense<0.000000e+00> : vector<16x128xf32>
    %5 = tpu.matmul %3, %4, %cst {dimension_numbers = #tpu.dot_dimension_numbers<[1], [0], [0], [1], [0, 0, 1, 1], [], []>} : vector<16x128xbf16>, vector<128x128xbf16>, vector<16x128xf32> -> vector<16x128xf32>
    %c0_4 = arith.constant 0 : index
    %c0_5 = arith.constant 0 : index
    %6 = vector.load %arg6[%c0_4, %c0_5] : memref<1x128xf32, #tpu.memory_space<vmem>>, vector<1x128xf32>
    %7 = vector.broadcast %6 : vector<1x128xf32> to vector<16x128xf32>
    %8 = arith.addf %5, %7 : vector<16x128xf32>
    %9 = arith.truncf %8 : vector<16x128xf32> to vector<16x128xbf16>
    %c0_6 = arith.constant 0 : index
    %c0_7 = arith.constant 0 : index
    %10 = vector.load %arg7[%c0_6, %c0_7] : memref<16x128xbf16, #tpu.memory_space<vmem>>, vector<16x128xbf16>
    tpu.vector_store %arg7[%c0_6, %c0_7], %9 {strides = array<i32>} : memref<16x128xbf16, #tpu.memory_space<vmem>>, vector<16x128xbf16>,
    return
  }
  func.func @transform_0(%arg0: i32, %arg1: i32) -> (i32, i32) {
    %c0_i32 = arith.constant 0 : i32
    %c0_i32_0 = arith.constant 0 : i32
    return %arg0, %c0_i32 : i32, i32
  }
  func.func @transform_1(%arg0: i32, %arg1: i32) -> (i32, i32) {
    %c0_i32 = arith.constant 0 : i32
    %c0_i32_0 = arith.constant 0 : i32
    %c0_i32_1 = arith.constant 0 : i32
    return %c0_i32, %c0_i32_0 : i32, i32
  }
  func.func @transform_2(%arg0: i32, %arg1: i32) -> (i32, i32) {
    %c0_i32 = arith.constant 0 : i32
    %c0_i32_0 = arith.constant 0 : i32
    %c0_i32_1 = arith.constant 0 : i32
    return %c0_i32, %c0_i32_0 : i32, i32
  }
  func.func @transform_3(%arg0: i32, %arg1: i32) -> (i32, i32) {
    %c0_i32 = arith.constant 0 : i32
    %c0_i32_0 = arith.constant 0 : i32
    return %c0_i32, %arg1 : i32, i32
  }
  func.func @transform_4(%arg0: i32, %arg1: i32) -> (i32, i32) {
    %c0_i32 = arith.constant 0 : i32
    %c0_i32_0 = arith.constant 0 : i32
    return %c0_i32, %arg1 : i32, i32
  }
  func.func @transform_5(%arg0: i32, %arg1: i32) -> (i32, i32) {
    %c0_i32 = arith.constant 0 : i32
    return %arg0, %arg1 : i32, i32
  }
}

module attributes {stable_mosaic.version = 11 : i64} {
  func.func @_ln_matmul_kernel(%arg0: i32, %arg1: i32, %arg2: memref<16x128xf32, #tpu.memory_space<vmem>>, %arg3: memref<1x128xf32, #tpu.memory_space<vmem>>, %arg4: memref<1x128xf32, #tpu.memory_space<vmem>>, %arg5: memref<128x256xbf16, #tpu.memory_space<vmem>>, %arg6: memref<1x256xf32, #tpu.memory_space<vmem>>, %arg7: memref<16x256xbf16, #tpu.memory_space<vmem>>, %arg8: memref<16x128xbf16, #tpu.memory_space<vmem>>) attributes {dimension_semantics = [#tpu.dimension_semantics<parallel>, #tpu.dimension_semantics<arbitrary>], iteration_bounds = array<i64: 1, 1>, scalar_prefetch = 0 : i64, scratch_operands = 1 : i64, tpu.core_type = #tpu.core_type<tc>, window_params = [{transform_indices = @transform_0, window_bounds = array<i64: 16, 128>}, {pipeline_mode = #tpu.pipeline_mode<synchronous>, transform_indices = @transform_1, window_bounds = array<i64: 1, 128>}, {pipeline_mode = #tpu.pipeline_mode<synchronous>, transform_indices = @transform_2, window_bounds = array<i64: 1, 128>}, {transform_indices = @transform_3, window_bounds = array<i64: 128, 256>}, {transform_indices = @transform_4, window_bounds = array<i64: 1, 256>}, {transform_indices = @transform_5, window_bounds = array<i64: 16, 256>}]} {
    %c0_i32 = arith.constant 0 : i32
    %0 = arith.cmpi eq, %arg1, %c0_i32 : i32
    %1 = arith.extui %0 : i1 to i32
    %c0_i32_0 = arith.constant 0 : i32
    %2 = arith.cmpi ne, %1, %c0_i32_0 : i32
    scf.if %2 {
      %c0_8 = arith.constant 0 : index
      %c0_9 = arith.constant 0 : index
      %11 = vector.load %arg2[%c0_8, %c0_9] : memref<16x128xf32, #tpu.memory_space<vmem>>, vector<16x128xf32>
      %cst_10 = arith.constant dense<0.000000e+00> : vector<16xf32>
      %12 = vector.multi_reduction <add>, %11, %cst_10 [1] : vector<16x128xf32> to vector<16xf32>
      %13 = vector.shape_cast %12 : vector<16xf32> to vector<16x1xf32>
      %cst_11 = arith.constant 1.280000e+02 : f32
      %14 = vector.broadcast %cst_11 : f32 to vector<16x1xf32>
      %15 = arith.divf %13, %14 : vector<16x1xf32>
      %16 = vector.broadcast %15 : vector<16x1xf32> to vector<16x128xf32>
      %17 = arith.subf %11, %16 : vector<16x128xf32>
      %18 = arith.mulf %17, %17 : vector<16x128xf32>
      %cst_12 = arith.constant dense<0.000000e+00> : vector<16xf32>
      %19 = vector.multi_reduction <add>, %18, %cst_12 [1] : vector<16x128xf32> to vector<16xf32>
      %20 = vector.shape_cast %19 : vector<16xf32> to vector<16x1xf32>
      %cst_13 = arith.constant 1.280000e+02 : f32
      %21 = vector.broadcast %cst_13 : f32 to vector<16x1xf32>
      %22 = arith.divf %20, %21 : vector<16x1xf32>
      %23 = vector.broadcast %15 : vector<16x1xf32> to vector<16x128xf32>
      %24 = arith.subf %11, %23 : vector<16x128xf32>
      %cst_14 = arith.constant 9.99999974E-6 : f32
      %25 = vector.broadcast %cst_14 : f32 to vector<16x1xf32>
      %26 = arith.addf %22, %25 : vector<16x1xf32>
      %27 = math.rsqrt %26 : vector<16x1xf32>
      %28 = vector.broadcast %27 : vector<16x1xf32> to vector<16x128xf32>
      %29 = arith.mulf %24, %28 : vector<16x128xf32>
      %c0_15 = arith.constant 0 : index
      %c0_16 = arith.constant 0 : index
      %30 = vector.load %arg3[%c0_15, %c0_16] : memref<1x128xf32, #tpu.memory_space<vmem>>, vector<1x128xf32>
      %31 = vector.broadcast %30 : vector<1x128xf32> to vector<16x128xf32>
      %32 = arith.mulf %29, %31 : vector<16x128xf32>
      %c0_17 = arith.constant 0 : index
      %c0_18 = arith.constant 0 : index
      %33 = vector.load %arg4[%c0_17, %c0_18] : memref<1x128xf32, #tpu.memory_space<vmem>>, vector<1x128xf32>
      %34 = vector.broadcast %33 : vector<1x128xf32> to vector<16x128xf32>
      %35 = arith.addf %32, %34 : vector<16x128xf32>
      %36 = arith.truncf %35 : vector<16x128xf32> to vector<16x128xbf16>
      %c0_19 = arith.constant 0 : index
      %c0_20 = arith.constant 0 : index
      %37 = vector.load %arg8[%c0_19, %c0_20] : memref<16x128xbf16, #tpu.memory_space<vmem>>, vector<16x128xbf16>
      tpu.vector_store %arg8[%c0_19, %c0_20], %36 {strides = array<i32>} : memref<16x128xbf16, #tpu.memory_space<vmem>>, vector<16x128xbf16>,
    } else {
    }
    %c0 = arith.constant 0 : index
    %c0_1 = arith.constant 0 : index
    %3 = vector.load %arg8[%c0, %c0_1] : memref<16x128xbf16, #tpu.memory_space<vmem>>, vector<16x128xbf16>
    %c0_2 = arith.constant 0 : index
    %c0_3 = arith.constant 0 : index
    %4 = vector.load %arg5[%c0_2, %c0_3] : memref<128x256xbf16, #tpu.memory_space<vmem>>, vector<128x256xbf16>
    %cst = arith.constant dense<0.000000e+00> : vector<16x256xf32>
    %5 = tpu.matmul %3, %4, %cst {dimension_numbers = #tpu.dot_dimension_numbers<[1], [0], [0], [1], [0, 0, 1, 1], [], []>} : vector<16x128xbf16>, vector<128x256xbf16>, vector<16x256xf32> -> vector<16x256xf32>
    %c0_4 = arith.constant 0 : index
    %c0_5 = arith.constant 0 : index
    %6 = vector.load %arg6[%c0_4, %c0_5] : memref<1x256xf32, #tpu.memory_space<vmem>>, vector<1x256xf32>
    %7 = vector.broadcast %6 : vector<1x256xf32> to vector<16x256xf32>
    %8 = arith.addf %5, %7 : vector<16x256xf32>
    %9 = arith.truncf %8 : vector<16x256xf32> to vector<16x256xbf16>
    %c0_6 = arith.constant 0 : index
    %c0_7 = arith.constant 0 : index
    %10 = vector.load %arg7[%c0_6, %c0_7] : memref<16x256xbf16, #tpu.memory_space<vmem>>, vector<16x256xbf16>
    tpu.vector_store %arg7[%c0_6, %c0_7], %9 {strides = array<i32>} : memref<16x256xbf16, #tpu.memory_space<vmem>>, vector<16x256xbf16>,
    return
  }
  func.func @transform_0(%arg0: i32, %arg1: i32) -> (i32, i32) {
    %c0_i32 = arith.constant 0 : i32
    %c0_i32_0 = arith.constant 0 : i32
    return %arg0, %c0_i32 : i32, i32
  }
  func.func @transform_1(%arg0: i32, %arg1: i32) -> (i32, i32) {
    %c0_i32 = arith.constant 0 : i32
    %c0_i32_0 = arith.constant 0 : i32
    %c0_i32_1 = arith.constant 0 : i32
    return %c0_i32, %c0_i32_0 : i32, i32
  }
  func.func @transform_2(%arg0: i32, %arg1: i32) -> (i32, i32) {
    %c0_i32 = arith.constant 0 : i32
    %c0_i32_0 = arith.constant 0 : i32
    %c0_i32_1 = arith.constant 0 : i32
    return %c0_i32, %c0_i32_0 : i32, i32
  }
  func.func @transform_3(%arg0: i32, %arg1: i32) -> (i32, i32) {
    %c0_i32 = arith.constant 0 : i32
    %c0_i32_0 = arith.constant 0 : i32
    return %c0_i32, %arg1 : i32, i32
  }
  func.func @transform_4(%arg0: i32, %arg1: i32) -> (i32, i32) {
    %c0_i32 = arith.constant 0 : i32
    %c0_i32_0 = arith.constant 0 : i32
    return %c0_i32, %arg1 : i32, i32
  }
  func.func @transform_5(%arg0: i32, %arg1: i32) -> (i32, i32) {
    %c0_i32 = arith.constant 0 : i32
    return %arg0, %arg1 : i32, i32
  }
}

module attributes {stable_mosaic.version = 11 : i64} {
  func.func @_fused_mlp_kernel(%arg0: i32, %arg1: i32, %arg2: memref<16x128xf32, #tpu.memory_space<vmem>>, %arg3: memref<1x128xf32, #tpu.memory_space<vmem>>, %arg4: memref<1x128xf32, #tpu.memory_space<vmem>>, %arg5: memref<128x512xbf16, #tpu.memory_space<vmem>>, %arg6: memref<1x512xf32, #tpu.memory_space<vmem>>, %arg7: memref<512x128xbf16, #tpu.memory_space<vmem>>, %arg8: memref<1x128xf32, #tpu.memory_space<vmem>>, %arg9: memref<16x128xf32, #tpu.memory_space<vmem>>, %arg10: memref<16x128xf32, #tpu.memory_space<vmem>>, %arg11: memref<16x128xbf16, #tpu.memory_space<vmem>>, %arg12: memref<16x128xf32, #tpu.memory_space<vmem>>) attributes {dimension_semantics = [#tpu.dimension_semantics<parallel>, #tpu.dimension_semantics<arbitrary>], iteration_bounds = array<i64: 1, 1>, scalar_prefetch = 0 : i64, scratch_operands = 2 : i64, tpu.core_type = #tpu.core_type<tc>, window_params = [{transform_indices = @transform_0, window_bounds = array<i64: 16, 128>}, {pipeline_mode = #tpu.pipeline_mode<synchronous>, transform_indices = @transform_1, window_bounds = array<i64: 1, 128>}, {pipeline_mode = #tpu.pipeline_mode<synchronous>, transform_indices = @transform_2, window_bounds = array<i64: 1, 128>}, {transform_indices = @transform_3, window_bounds = array<i64: 128, 512>}, {transform_indices = @transform_4, window_bounds = array<i64: 1, 512>}, {transform_indices = @transform_5, window_bounds = array<i64: 512, 128>}, {pipeline_mode = #tpu.pipeline_mode<synchronous>, transform_indices = @transform_6, window_bounds = array<i64: 1, 128>}, {transform_indices = @transform_7, window_bounds = array<i64: 16, 128>}, {transform_indices = @transform_8, window_bounds = array<i64: 16, 128>}]} {
    %c0_i32 = arith.constant 0 : i32
    %0 = arith.cmpi eq, %arg1, %c0_i32 : i32
    %1 = arith.extui %0 : i1 to i32
    %c0_i32_0 = arith.constant 0 : i32
    %2 = arith.cmpi ne, %1, %c0_i32_0 : i32
    scf.if %2 {
      %c0_19 = arith.constant 0 : index
      %c0_20 = arith.constant 0 : index
      %31 = vector.load %arg2[%c0_19, %c0_20] : memref<16x128xf32, #tpu.memory_space<vmem>>, vector<16x128xf32>
      %cst_21 = arith.constant dense<0.000000e+00> : vector<16xf32>
      %32 = vector.multi_reduction <add>, %31, %cst_21 [1] : vector<16x128xf32> to vector<16xf32>
      %33 = vector.shape_cast %32 : vector<16xf32> to vector<16x1xf32>
      %cst_22 = arith.constant 1.280000e+02 : f32
      %34 = vector.broadcast %cst_22 : f32 to vector<16x1xf32>
      %35 = arith.divf %33, %34 : vector<16x1xf32>
      %36 = vector.broadcast %35 : vector<16x1xf32> to vector<16x128xf32>
      %37 = arith.subf %31, %36 : vector<16x128xf32>
      %38 = arith.mulf %37, %37 : vector<16x128xf32>
      %cst_23 = arith.constant dense<0.000000e+00> : vector<16xf32>
      %39 = vector.multi_reduction <add>, %38, %cst_23 [1] : vector<16x128xf32> to vector<16xf32>
      %40 = vector.shape_cast %39 : vector<16xf32> to vector<16x1xf32>
      %cst_24 = arith.constant 1.280000e+02 : f32
      %41 = vector.broadcast %cst_24 : f32 to vector<16x1xf32>
      %42 = arith.divf %40, %41 : vector<16x1xf32>
      %43 = vector.broadcast %35 : vector<16x1xf32> to vector<16x128xf32>
      %44 = arith.subf %31, %43 : vector<16x128xf32>
      %cst_25 = arith.constant 9.99999974E-6 : f32
      %45 = vector.broadcast %cst_25 : f32 to vector<16x1xf32>
      %46 = arith.addf %42, %45 : vector<16x1xf32>
      %47 = math.rsqrt %46 : vector<16x1xf32>
      %48 = vector.broadcast %47 : vector<16x1xf32> to vector<16x128xf32>
      %49 = arith.mulf %44, %48 : vector<16x128xf32>
      %c0_26 = arith.constant 0 : index
      %c0_27 = arith.constant 0 : index
      %50 = vector.load %arg3[%c0_26, %c0_27] : memref<1x128xf32, #tpu.memory_space<vmem>>, vector<1x128xf32>
      %51 = vector.broadcast %50 : vector<1x128xf32> to vector<16x128xf32>
      %52 = arith.mulf %49, %51 : vector<16x128xf32>
      %c0_28 = arith.constant 0 : index
      %c0_29 = arith.constant 0 : index
      %53 = vector.load %arg4[%c0_28, %c0_29] : memref<1x128xf32, #tpu.memory_space<vmem>>, vector<1x128xf32>
      %54 = vector.broadcast %53 : vector<1x128xf32> to vector<16x128xf32>
      %55 = arith.addf %52, %54 : vector<16x128xf32>
      %56 = arith.truncf %55 : vector<16x128xf32> to vector<16x128xbf16>
      %c0_30 = arith.constant 0 : index
      %c0_31 = arith.constant 0 : index
      %57 = vector.load %arg11[%c0_30, %c0_31] : memref<16x128xbf16, #tpu.memory_space<vmem>>, vector<16x128xbf16>
      tpu.vector_store %arg11[%c0_30, %c0_31], %56 {strides = array<i32>} : memref<16x128xbf16, #tpu.memory_space<vmem>>, vector<16x128xbf16>,
      %cst_32 = arith.constant 0.000000e+00 : f32
      %58 = vector.broadcast %cst_32 : f32 to vector<16x128xf32>
      %c0_33 = arith.constant 0 : index
      %c0_34 = arith.constant 0 : index
      %59 = vector.load %arg12[%c0_33, %c0_34] : memref<16x128xf32, #tpu.memory_space<vmem>>, vector<16x128xf32>
      tpu.vector_store %arg12[%c0_33, %c0_34], %58 {strides = array<i32>} : memref<16x128xf32, #tpu.memory_space<vmem>>, vector<16x128xf32>,
    } else {
    }
    %c0 = arith.constant 0 : index
    %c0_1 = arith.constant 0 : index
    %3 = vector.load %arg11[%c0, %c0_1] : memref<16x128xbf16, #tpu.memory_space<vmem>>, vector<16x128xbf16>
    %c0_2 = arith.constant 0 : index
    %c0_3 = arith.constant 0 : index
    %4 = vector.load %arg5[%c0_2, %c0_3] : memref<128x512xbf16, #tpu.memory_space<vmem>>, vector<128x512xbf16>
    %cst = arith.constant dense<0.000000e+00> : vector<16x512xf32>
    %5 = tpu.matmul %3, %4, %cst {dimension_numbers = #tpu.dot_dimension_numbers<[1], [0], [0], [1], [0, 0, 1, 1], [], []>} : vector<16x128xbf16>, vector<128x512xbf16>, vector<16x512xf32> -> vector<16x512xf32>
    %c0_4 = arith.constant 0 : index
    %c0_5 = arith.constant 0 : index
    %6 = vector.load %arg6[%c0_4, %c0_5] : memref<1x512xf32, #tpu.memory_space<vmem>>, vector<1x512xf32>
    %7 = vector.broadcast %6 : vector<1x512xf32> to vector<16x512xf32>
    %8 = arith.addf %5, %7 : vector<16x512xf32>
    %cst_6 = arith.constant 5.000000e-01 : f32
    %9 = vector.broadcast %cst_6 : f32 to vector<16x512xf32>
    %10 = arith.mulf %9, %8 : vector<16x512xf32>
    %cst_7 = arith.constant 4.471500e-02 : f32
    %11 = vector.broadcast %cst_7 : f32 to vector<16x512xf32>
    %12 = arith.mulf %11, %8 : vector<16x512xf32>
    %13 = arith.mulf %12, %8 : vector<16x512xf32>
    %14 = arith.mulf %13, %8 : vector<16x512xf32>
    %15 = arith.addf %8, %14 : vector<16x512xf32>
    %cst_8 = arith.constant 0.797884583 : f32
    %16 = vector.broadcast %cst_8 : f32 to vector<16x512xf32>
    %17 = arith.mulf %16, %15 : vector<16x512xf32>
    %18 = math.tanh %17 : vector<16x512xf32>
    %cst_9 = arith.constant 1.000000e+00 : f32
    %19 = vector.broadcast %cst_9 : f32 to vector<16x512xf32>
    %20 = arith.addf %19, %18 : vector<16x512xf32>
    %21 = arith.mulf %10, %20 : vector<16x512xf32>
    %c0_10 = arith.constant 0 : index
    %c0_11 = arith.constant 0 : index
    %22 = vector.load %arg12[%c0_10, %c0_11] : memref<16x128xf32, #tpu.memory_space<vmem>>, vector<16x128xf32>
    %23 = arith.truncf %21 : vector<16x512xf32> to vector<16x512xbf16>
    %c0_12 = arith.constant 0 : index
    %c0_13 = arith.constant 0 : index
    %24 = vector.load %arg7[%c0_12, %c0_13] : memref<512x128xbf16, #tpu.memory_space<vmem>>, vector<512x128xbf16>
    %cst_14 = arith.constant dense<0.000000e+00> : vector<16x128xf32>
    %25 = tpu.matmul %23, %24, %cst_14 {dimension_numbers = #tpu.dot_dimension_numbers<[1], [0], [0], [1], [0, 0, 1, 1], [], []>} : vector<16x512xbf16>, vector<512x128xbf16>, vector<16x128xf32> -> vector<16x128xf32>
    %26 = arith.addf %22, %25 : vector<16x128xf32>
    %c0_15 = arith.constant 0 : index
    %c0_16 = arith.constant 0 : index
    %27 = vector.load %arg12[%c0_15, %c0_16] : memref<16x128xf32, #tpu.memory_space<vmem>>, vector<16x128xf32>
    tpu.vector_store %arg12[%c0_15, %c0_16], %26 {strides = array<i32>} : memref<16x128xf32, #tpu.memory_space<vmem>>, vector<16x128xf32>,
    %c0_i32_17 = arith.constant 0 : i32
    %28 = arith.cmpi eq, %arg1, %c0_i32_17 : i32
    %29 = arith.extui %28 : i1 to i32
    %c0_i32_18 = arith.constant 0 : i32
    %30 = arith.cmpi ne, %29, %c0_i32_18 : i32
    scf.if %30 {
      %c0_19 = arith.constant 0 : index
      %c0_20 = arith.constant 0 : index
      %31 = vector.load %arg12[%c0_19, %c0_20] : memref<16x128xf32, #tpu.memory_space<vmem>>, vector<16x128xf32>
      %c0_21 = arith.constant 0 : index
      %c0_22 = arith.constant 0 : index
      %32 = vector.load %arg8[%c0_21, %c0_22] : memref<1x128xf32, #tpu.memory_space<vmem>>, vector<1x128xf32>
      %33 = vector.broadcast %32 : vector<1x128xf32> to vector<16x128xf32>
      %34 = arith.addf %31, %33 : vector<16x128xf32>
      %c0_23 = arith.constant 0 : index
      %c0_24 = arith.constant 0 : index
      %35 = vector.load %arg9[%c0_23, %c0_24] : memref<16x128xf32, #tpu.memory_space<vmem>>, vector<16x128xf32>
      %36 = arith.addf %34, %35 : vector<16x128xf32>
      %c0_25 = arith.constant 0 : index
      %c0_26 = arith.constant 0 : index
      %37 = vector.load %arg10[%c0_25, %c0_26] : memref<16x128xf32, #tpu.memory_space<vmem>>, vector<16x128xf32>
      tpu.vector_store %arg10[%c0_25, %c0_26], %36 {strides = array<i32>} : memref<16x128xf32, #tpu.memory_space<vmem>>, vector<16x128xf32>,
    } else {
    }
    return
  }
  func.func @transform_0(%arg0: i32, %arg1: i32) -> (i32, i32) {
    %c0_i32 = arith.constant 0 : i32
    %c0_i32_0 = arith.constant 0 : i32
    return %arg0, %c0_i32 : i32, i32
  }
  func.func @transform_1(%arg0: i32, %arg1: i32) -> (i32, i32) {
    %c0_i32 = arith.constant 0 : i32
    %c0_i32_0 = arith.constant 0 : i32
    %c0_i32_1 = arith.constant 0 : i32
    return %c0_i32, %c0_i32_0 : i32, i32
  }
  func.func @transform_2(%arg0: i32, %arg1: i32) -> (i32, i32) {
    %c0_i32 = arith.constant 0 : i32
    %c0_i32_0 = arith.constant 0 : i32
    %c0_i32_1 = arith.constant 0 : i32
    return %c0_i32, %c0_i32_0 : i32, i32
  }
  func.func @transform_3(%arg0: i32, %arg1: i32) -> (i32, i32) {
    %c0_i32 = arith.constant 0 : i32
    %c0_i32_0 = arith.constant 0 : i32
    return %c0_i32, %arg1 : i32, i32
  }
  func.func @transform_4(%arg0: i32, %arg1: i32) -> (i32, i32) {
    %c0_i32 = arith.constant 0 : i32
    %c0_i32_0 = arith.constant 0 : i32
    return %c0_i32, %arg1 : i32, i32
  }
  func.func @transform_5(%arg0: i32, %arg1: i32) -> (i32, i32) {
    %c0_i32 = arith.constant 0 : i32
    %c0_i32_0 = arith.constant 0 : i32
    return %arg1, %c0_i32 : i32, i32
  }
  func.func @transform_6(%arg0: i32, %arg1: i32) -> (i32, i32) {
    %c0_i32 = arith.constant 0 : i32
    %c0_i32_0 = arith.constant 0 : i32
    %c0_i32_1 = arith.constant 0 : i32
    return %c0_i32, %c0_i32_0 : i32, i32
  }
  func.func @transform_7(%arg0: i32, %arg1: i32) -> (i32, i32) {
    %c0_i32 = arith.constant 0 : i32
    %c0_i32_0 = arith.constant 0 : i32
    return %arg0, %c0_i32 : i32, i32
  }
  func.func @transform_8(%arg0: i32, %arg1: i32) -> (i32, i32) {
    %c0_i32 = arith.constant 0 : i32
    %c0_i32_0 = arith.constant 0 : i32
    return %arg0, %c0_i32 : i32, i32
  }
}

module attributes {stable_mosaic.version = 11 : i64} {
  func.func @_ln_kernel(%arg0: i32, %arg1: memref<16x128xf32, #tpu.memory_space<vmem>>, %arg2: memref<1x128xf32, #tpu.memory_space<vmem>>, %arg3: memref<1x128xf32, #tpu.memory_space<vmem>>, %arg4: memref<16x128xbf16, #tpu.memory_space<vmem>>) attributes {dimension_semantics = [#tpu.dimension_semantics<parallel>], iteration_bounds = array<i64: 1>, scalar_prefetch = 0 : i64, scratch_operands = 0 : i64, tpu.core_type = #tpu.core_type<tc>, window_params = [{transform_indices = @transform_0, window_bounds = array<i64: 16, 128>}, {pipeline_mode = #tpu.pipeline_mode<synchronous>, transform_indices = @transform_1, window_bounds = array<i64: 1, 128>}, {pipeline_mode = #tpu.pipeline_mode<synchronous>, transform_indices = @transform_2, window_bounds = array<i64: 1, 128>}, {transform_indices = @transform_3, window_bounds = array<i64: 16, 128>}]} {
    %c0 = arith.constant 0 : index
    %c0_0 = arith.constant 0 : index
    %0 = vector.load %arg1[%c0, %c0_0] : memref<16x128xf32, #tpu.memory_space<vmem>>, vector<16x128xf32>
    %cst = arith.constant dense<0.000000e+00> : vector<16xf32>
    %1 = vector.multi_reduction <add>, %0, %cst [1] : vector<16x128xf32> to vector<16xf32>
    %2 = vector.shape_cast %1 : vector<16xf32> to vector<16x1xf32>
    %cst_1 = arith.constant 1.280000e+02 : f32
    %3 = vector.broadcast %cst_1 : f32 to vector<16x1xf32>
    %4 = arith.divf %2, %3 : vector<16x1xf32>
    %5 = vector.broadcast %4 : vector<16x1xf32> to vector<16x128xf32>
    %6 = arith.subf %0, %5 : vector<16x128xf32>
    %7 = arith.mulf %6, %6 : vector<16x128xf32>
    %cst_2 = arith.constant dense<0.000000e+00> : vector<16xf32>
    %8 = vector.multi_reduction <add>, %7, %cst_2 [1] : vector<16x128xf32> to vector<16xf32>
    %9 = vector.shape_cast %8 : vector<16xf32> to vector<16x1xf32>
    %cst_3 = arith.constant 1.280000e+02 : f32
    %10 = vector.broadcast %cst_3 : f32 to vector<16x1xf32>
    %11 = arith.divf %9, %10 : vector<16x1xf32>
    %12 = vector.broadcast %4 : vector<16x1xf32> to vector<16x128xf32>
    %13 = arith.subf %0, %12 : vector<16x128xf32>
    %cst_4 = arith.constant 9.99999974E-6 : f32
    %14 = vector.broadcast %cst_4 : f32 to vector<16x1xf32>
    %15 = arith.addf %11, %14 : vector<16x1xf32>
    %16 = math.rsqrt %15 : vector<16x1xf32>
    %17 = vector.broadcast %16 : vector<16x1xf32> to vector<16x128xf32>
    %18 = arith.mulf %13, %17 : vector<16x128xf32>
    %c0_5 = arith.constant 0 : index
    %c0_6 = arith.constant 0 : index
    %19 = vector.load %arg2[%c0_5, %c0_6] : memref<1x128xf32, #tpu.memory_space<vmem>>, vector<1x128xf32>
    %20 = vector.broadcast %19 : vector<1x128xf32> to vector<16x128xf32>
    %21 = arith.mulf %18, %20 : vector<16x128xf32>
    %c0_7 = arith.constant 0 : index
    %c0_8 = arith.constant 0 : index
    %22 = vector.load %arg3[%c0_7, %c0_8] : memref<1x128xf32, #tpu.memory_space<vmem>>, vector<1x128xf32>
    %23 = vector.broadcast %22 : vector<1x128xf32> to vector<16x128xf32>
    %24 = arith.addf %21, %23 : vector<16x128xf32>
    %25 = arith.truncf %24 : vector<16x128xf32> to vector<16x128xbf16>
    %c0_9 = arith.constant 0 : index
    %c0_10 = arith.constant 0 : index
    %26 = vector.load %arg4[%c0_9, %c0_10] : memref<16x128xbf16, #tpu.memory_space<vmem>>, vector<16x128xbf16>
    tpu.vector_store %arg4[%c0_9, %c0_10], %25 {strides = array<i32>} : memref<16x128xbf16, #tpu.memory_space<vmem>>, vector<16x128xbf16>,
    return
  }
  func.func @transform_0(%arg0: i32) -> (i32, i32) {
    %c0_i32 = arith.constant 0 : i32
    %c0_i32_0 = arith.constant 0 : i32
    return %arg0, %c0_i32 : i32, i32
  }
  func.func @transform_1(%arg0: i32) -> (i32, i32) {
    %c0_i32 = arith.constant 0 : i32
    %c0_i32_0 = arith.constant 0 : i32
    %c0_i32_1 = arith.constant 0 : i32
    return %c0_i32, %c0_i32_0 : i32, i32
  }
  func.func @transform_2(%arg0: i32) -> (i32, i32) {
    %c0_i32 = arith.constant 0 : i32
    %c0_i32_0 = arith.constant 0 : i32
    %c0_i32_1 = arith.constant 0 : i32
    return %c0_i32, %c0_i32_0 : i32, i32
  }
  func.func @transform_3(%arg0: i32) -> (i32, i32) {
    %c0_i32 = arith.constant 0 : i32
    %c0_i32_0 = arith.constant 0 : i32
    return %arg0, %c0_i32 : i32, i32
  }
}

module attributes {stable_mosaic.version = 11 : i64} {
  func.func @_attn_kernel(%arg0: i32, %arg1: i32, %arg2: i32, %arg3: memref<1x8x128xbf16, #tpu.memory_space<vmem>>, %arg4: memref<1x8x128xbf16, #tpu.memory_space<vmem>>, %arg5: memref<1x8x128xbf16, #tpu.memory_space<vmem>>, %arg6: memref<1x1x8xf32, #tpu.memory_space<vmem>>, %arg7: memref<1x8x128xbf16, #tpu.memory_space<vmem>>) attributes {dimension_semantics = [#tpu.dimension_semantics<parallel>, #tpu.dimension_semantics<parallel>, #tpu.dimension_semantics<parallel>], iteration_bounds = array<i64: 2, 1, 1>, scalar_prefetch = 0 : i64, scratch_operands = 0 : i64, tpu.core_type = #tpu.core_type<tc>, window_params = [{transform_indices = @transform_0, window_bounds = array<i64: 1, 8, 128>}, {transform_indices = @transform_1, window_bounds = array<i64: 1, 8, 128>}, {transform_indices = @transform_2, window_bounds = array<i64: 1, 8, 128>}, {transform_indices = @transform_3, window_bounds = array<i64: 1, 1, 8>}, {transform_indices = @transform_4, window_bounds = array<i64: 1, 8, 128>}]} {
    %c0 = arith.constant 0 : index
    %c0_0 = arith.constant 0 : index
    %c0_1 = arith.constant 0 : index
    %0 = vector.load %arg3[%c0, %c0_0, %c0_1] : memref<1x8x128xbf16, #tpu.memory_space<vmem>>, vector<1x8x128xbf16>
    %1 = vector.shape_cast %0 : vector<1x8x128xbf16> to vector<8x128xbf16>
    %c0_2 = arith.constant 0 : index
    %c0_3 = arith.constant 0 : index
    %c0_4 = arith.constant 0 : index
    %2 = vector.load %arg4[%c0_2, %c0_3, %c0_4] : memref<1x8x128xbf16, #tpu.memory_space<vmem>>, vector<1x8x128xbf16>
    %3 = vector.shape_cast %2 : vector<1x8x128xbf16> to vector<8x128xbf16>
    %c0_5 = arith.constant 0 : index
    %c0_6 = arith.constant 0 : index
    %c0_7 = arith.constant 0 : index
    %4 = vector.load %arg5[%c0_5, %c0_6, %c0_7] : memref<1x8x128xbf16, #tpu.memory_space<vmem>>, vector<1x8x128xbf16>
    %5 = vector.shape_cast %4 : vector<1x8x128xbf16> to vector<8x128xbf16>
    %c0_8 = arith.constant 0 : index
    %c0_9 = arith.constant 0 : index
    %c0_10 = arith.constant 0 : index
    %6 = vector.load %arg6[%c0_8, %c0_9, %c0_10] : memref<1x1x8xf32, #tpu.memory_space<vmem>>, vector<1x1x8xf32>
    %7 = vector.shape_cast %6 : vector<1x1x8xf32> to vector<1x8xf32>
    %8 = vector.extract_strided_slice %1 {offsets = [0, 0], sizes = [8, 64], strides = [1, 1]} : vector<8x128xbf16> to vector<8x64xbf16>
    %9 = vector.extract_strided_slice %3 {offsets = [0, 0], sizes = [8, 64], strides = [1, 1]} : vector<8x128xbf16> to vector<8x64xbf16>
    %10 = vector.extract_strided_slice %5 {offsets = [0, 0], sizes = [8, 64], strides = [1, 1]} : vector<8x128xbf16> to vector<8x64xbf16>
    %cst = arith.constant dense<0.000000e+00> : vector<8x8xf32>
    %11 = tpu.matmul %8, %9, %cst {dimension_numbers = #tpu.dot_dimension_numbers<[1], [1], [0], [0], [0, 0, 1, 0], [], []>} : vector<8x64xbf16>, vector<8x64xbf16>, vector<8x8xf32> -> vector<8x8xf32>
    %cst_11 = arith.constant 1.250000e-01 : f32
    %12 = vector.broadcast %cst_11 : f32 to vector<8x8xf32>
    %13 = arith.mulf %11, %12 : vector<8x8xf32>
    %14 = vector.broadcast %7 : vector<1x8xf32> to vector<8x8xf32>
    %15 = arith.addf %13, %14 : vector<8x8xf32>
    %cst_12 = arith.constant dense<0xFF800000> : vector<8xf32>
    %16 = vector.multi_reduction <maximumf>, %15, %cst_12 [1] : vector<8x8xf32> to vector<8xf32>
    %17 = vector.shape_cast %16 : vector<8xf32> to vector<8x1xf32>
    %18 = vector.broadcast %17 : vector<8x1xf32> to vector<8x8xf32>
    %19 = arith.subf %15, %18 : vector<8x8xf32>
    %20 = math.exp %19 : vector<8x8xf32>
    %cst_13 = arith.constant dense<0.000000e+00> : vector<8xf32>
    %21 = vector.multi_reduction <add>, %20, %cst_13 [1] : vector<8x8xf32> to vector<8xf32>
    %22 = vector.shape_cast %21 : vector<8xf32> to vector<8x1xf32>
    %23 = tpu.reciprocal %22 {approx = true} : vector<8x1xf32> -> vector<8x1xf32>
    %24 = arith.truncf %20 : vector<8x8xf32> to vector<8x8xbf16>
    %cst_14 = arith.constant dense<0.000000e+00> : vector<8x64xf32>
    %25 = tpu.matmul %24, %10, %cst_14 {dimension_numbers = #tpu.dot_dimension_numbers<[1], [0], [0], [1], [0, 0, 1, 1], [], []>} : vector<8x8xbf16>, vector<8x64xbf16>, vector<8x64xf32> -> vector<8x64xf32>
    %26 = vector.broadcast %23 : vector<8x1xf32> to vector<8x64xf32>
    %27 = arith.mulf %25, %26 : vector<8x64xf32>
    %28 = vector.extract_strided_slice %1 {offsets = [0, 64], sizes = [8, 64], strides = [1, 1]} : vector<8x128xbf16> to vector<8x64xbf16>
    %29 = vector.extract_strided_slice %3 {offsets = [0, 64], sizes = [8, 64], strides = [1, 1]} : vector<8x128xbf16> to vector<8x64xbf16>
    %30 = vector.extract_strided_slice %5 {offsets = [0, 64], sizes = [8, 64], strides = [1, 1]} : vector<8x128xbf16> to vector<8x64xbf16>
    %cst_15 = arith.constant dense<0.000000e+00> : vector<8x8xf32>
    %31 = tpu.matmul %28, %29, %cst_15 {dimension_numbers = #tpu.dot_dimension_numbers<[1], [1], [0], [0], [0, 0, 1, 0], [], []>} : vector<8x64xbf16>, vector<8x64xbf16>, vector<8x8xf32> -> vector<8x8xf32>
    %cst_16 = arith.constant 1.250000e-01 : f32
    %32 = vector.broadcast %cst_16 : f32 to vector<8x8xf32>
    %33 = arith.mulf %31, %32 : vector<8x8xf32>
    %34 = vector.broadcast %7 : vector<1x8xf32> to vector<8x8xf32>
    %35 = arith.addf %33, %34 : vector<8x8xf32>
    %cst_17 = arith.constant dense<0xFF800000> : vector<8xf32>
    %36 = vector.multi_reduction <maximumf>, %35, %cst_17 [1] : vector<8x8xf32> to vector<8xf32>
    %37 = vector.shape_cast %36 : vector<8xf32> to vector<8x1xf32>
    %38 = vector.broadcast %37 : vector<8x1xf32> to vector<8x8xf32>
    %39 = arith.subf %35, %38 : vector<8x8xf32>
    %40 = math.exp %39 : vector<8x8xf32>
    %cst_18 = arith.constant dense<0.000000e+00> : vector<8xf32>
    %41 = vector.multi_reduction <add>, %40, %cst_18 [1] : vector<8x8xf32> to vector<8xf32>
    %42 = vector.shape_cast %41 : vector<8xf32> to vector<8x1xf32>
    %43 = tpu.reciprocal %42 {approx = true} : vector<8x1xf32> -> vector<8x1xf32>
    %44 = arith.truncf %40 : vector<8x8xf32> to vector<8x8xbf16>
    %cst_19 = arith.constant dense<0.000000e+00> : vector<8x64xf32>
    %45 = tpu.matmul %44, %30, %cst_19 {dimension_numbers = #tpu.dot_dimension_numbers<[1], [0], [0], [1], [0, 0, 1, 1], [], []>} : vector<8x8xbf16>, vector<8x64xbf16>, vector<8x64xf32> -> vector<8x64xf32>
    %46 = vector.broadcast %43 : vector<8x1xf32> to vector<8x64xf32>
    %47 = arith.mulf %45, %46 : vector<8x64xf32>
    %48 = tpu.concatenate %27, %47 in 1 : vector<8x64xf32>, vector<8x64xf32> -> vector<8x128xf32>
    %49 = arith.truncf %48 : vector<8x128xf32> to vector<8x128xbf16>
    %c0_20 = arith.constant 0 : index
    %c0_21 = arith.constant 0 : index
    %c0_22 = arith.constant 0 : index
    %50 = vector.load %arg7[%c0_20, %c0_21, %c0_22] : memref<1x8x128xbf16, #tpu.memory_space<vmem>>, vector<1x8x128xbf16>
    %51 = vector.shape_cast %50 : vector<1x8x128xbf16> to vector<8x128xbf16>
    %52 = vector.shape_cast %49 : vector<8x128xbf16> to vector<1x8x128xbf16>
    tpu.vector_store %arg7[%c0_20, %c0_21, %c0_22], %52 {strides = array<i32>} : memref<1x8x128xbf16, #tpu.memory_space<vmem>>, vector<1x8x128xbf16>,
    return
  }
  func.func @transform_0(%arg0: i32, %arg1: i32, %arg2: i32) -> (i32, i32, i32) {
    %c0_i32 = arith.constant 0 : i32
    return %arg0, %arg2, %arg1 : i32, i32, i32
  }
  func.func @transform_1(%arg0: i32, %arg1: i32, %arg2: i32) -> (i32, i32, i32) {
    %c0_i32 = arith.constant 0 : i32
    %c0_i32_0 = arith.constant 0 : i32
    return %arg0, %c0_i32, %arg1 : i32, i32, i32
  }
  func.func @transform_2(%arg0: i32, %arg1: i32, %arg2: i32) -> (i32, i32, i32) {
    %c1_i32 = arith.constant 1 : i32
    %0 = arith.addi %c1_i32, %arg1 : i32
    %c0_i32 = arith.constant 0 : i32
    %c0_i32_0 = arith.constant 0 : i32
    return %arg0, %c0_i32, %0 : i32, i32, i32
  }
  func.func @transform_3(%arg0: i32, %arg1: i32, %arg2: i32) -> (i32, i32, i32) {
    %c0_i32 = arith.constant 0 : i32
    %c0_i32_0 = arith.constant 0 : i32
    %c0_i32_1 = arith.constant 0 : i32
    return %arg0, %c0_i32, %c0_i32_0 : i32, i32, i32
  }
  func.func @transform_4(%arg0: i32, %arg1: i32, %arg2: i32) -> (i32, i32, i32) {
    %c0_i32 = arith.constant 0 : i32
    return %arg0, %arg2, %arg1 : i32, i32, i32
  }
}

module attributes {stable_mosaic.version = 11 : i64} {
  func.func @_matmul_kernel(%arg0: i32, %arg1: i32, %arg2: memref<16x128xbf16, #tpu.memory_space<vmem>>, %arg3: memref<128x512xbf16, #tpu.memory_space<vmem>>, %arg4: memref<16x512xf32, #tpu.memory_space<vmem>>) attributes {dimension_semantics = [#tpu.dimension_semantics<parallel>, #tpu.dimension_semantics<arbitrary>], iteration_bounds = array<i64: 1, 1>, scalar_prefetch = 0 : i64, scratch_operands = 0 : i64, tpu.core_type = #tpu.core_type<tc>, window_params = [{transform_indices = @transform_0, window_bounds = array<i64: 16, 128>}, {transform_indices = @transform_1, window_bounds = array<i64: 128, 512>}, {transform_indices = @transform_2, window_bounds = array<i64: 16, 512>}]} {
    %c0 = arith.constant 0 : index
    %c0_0 = arith.constant 0 : index
    %0 = vector.load %arg2[%c0, %c0_0] : memref<16x128xbf16, #tpu.memory_space<vmem>>, vector<16x128xbf16>
    %c0_1 = arith.constant 0 : index
    %c0_2 = arith.constant 0 : index
    %1 = vector.load %arg3[%c0_1, %c0_2] : memref<128x512xbf16, #tpu.memory_space<vmem>>, vector<128x512xbf16>
    %cst = arith.constant dense<0.000000e+00> : vector<16x512xf32>
    %2 = tpu.matmul %0, %1, %cst {dimension_numbers = #tpu.dot_dimension_numbers<[1], [0], [0], [1], [0, 0, 1, 1], [], []>} : vector<16x128xbf16>, vector<128x512xbf16>, vector<16x512xf32> -> vector<16x512xf32>
    %c0_3 = arith.constant 0 : index
    %c0_4 = arith.constant 0 : index
    %3 = vector.load %arg4[%c0_3, %c0_4] : memref<16x512xf32, #tpu.memory_space<vmem>>, vector<16x512xf32>
    tpu.vector_store %arg4[%c0_3, %c0_4], %2 {strides = array<i32>} : memref<16x512xf32, #tpu.memory_space<vmem>>, vector<16x512xf32>,
    return
  }
  func.func @transform_0(%arg0: i32, %arg1: i32) -> (i32, i32) {
    %c0_i32 = arith.constant 0 : i32
    %c0_i32_0 = arith.constant 0 : i32
    return %arg1, %c0_i32 : i32, i32
  }
  func.func @transform_1(%arg0: i32, %arg1: i32) -> (i32, i32) {
    %c0_i32 = arith.constant 0 : i32
    %c0_i32_0 = arith.constant 0 : i32
    return %c0_i32, %arg0 : i32, i32
  }
  func.func @transform_2(%arg0: i32, %arg1: i32) -> (i32, i32) {
    %c0_i32 = arith.constant 0 : i32
    return %arg1, %arg0 : i32, i32
  }
}

</mosaic_0001>

<llo_original>
// kernel: cross_attention_gpt2_forward.30
$region0: #{cross_attention_gpt2_forward.30}
  #allocation0 [shape = 'u32[]', space=smem, size = 0x4, offset = 0x4, fixed_abs, tag = 'smem constant byte address 0x4 - core index']
  #allocation1 [shape = 'u32[144,128]{1,0:T(1,128)}', space=vmem, size = 0x12000, scoped, tag = 'internal scratch']
  #allocation2 [shape = 'f32[16,128]{1,0:T(8,128)}', space=vmem, size = 0x2000, scoped, tag = 'scratch operand']
  %s0 = inlined_call_operand.vmem [shape: bf16[16,128], index: 0, kind: input, shape index: {}]
  %s1 = inlined_call_operand.vmem [shape: bf16[128,128], index: 1, kind: input, shape index: {}]
  %s2 = inlined_call_operand.vmem [shape: f32[1,128], index: 2, kind: input, shape index: {}]
  %s3 = inlined_call_operand.vmem [shape: f32[16,128], index: 3, kind: input, shape index: {}]
  %s4 = inlined_call_operand.vmem [shape: f32[16,128], index: 4, kind: output, shape index: {}]
  %s5 = sld [smem:[#allocation0]]
  $region34: #{cross_attention_gpt2_forward.30} parent=0
    _
  %s7 = ssub.s32 1, %s5
  %s8 = scalar_select 0, %s7, %s5
  // Predicated region
  $region2: #{cross_attention_gpt2_forward.30} parent=0 // pred_check
    _
  $region3: #{cross_attention_gpt2_forward.30} parent=0 // pred_check_branch
    %10 = sbr.rel (0) target = $region5
  $region4: #{cross_attention_gpt2_forward.30} parent=0 // pred_region
    _
  $region5: #{cross_attention_gpt2_forward.30} parent=0 // pred_fallthru
    _
  // Predicated region
  $region6: #{cross_attention_gpt2_forward.30} parent=0 // pred_check
    _
  $region7: #{cross_attention_gpt2_forward.30} parent=0 // pred_check_branch
    %12 = sbr.rel (0) target = $region9
  $region8: #{cross_attention_gpt2_forward.30} parent=0 // pred_region
    _
  $region9: #{cross_attention_gpt2_forward.30} parent=0 // pred_fallthru
    _
  // Predicated region
  $region10: #{cross_attention_gpt2_forward.30} parent=0 // pred_check
    _
  $region11: #{cross_attention_gpt2_forward.30} parent=0 // pred_check_branch
    %14 = sbr.rel (0) target = $region13
  $region12: #{cross_attention_gpt2_forward.30} parent=0 // pred_region
    _
  $region13: #{cross_attention_gpt2_forward.30} parent=0 // pred_fallthru
    _
  // Predicated region
  $region14: #{cross_attention_gpt2_forward.30} parent=0 // pred_check
    _
  $region15: #{cross_attention_gpt2_forward.30} parent=0 // pred_check_branch
    %16 = sbr.rel (0) target = $region17
  $region16: #{cross_attention_gpt2_forward.30} parent=0 // pred_region
    _
  $region17: #{cross_attention_gpt2_forward.30} parent=0 // pred_fallthru
    _
  %p18 = scmp.eq.s32.totalorder 0, 0
  // Predicated region
  $region18: #{cross_attention_gpt2_forward.30} parent=0 // pred_check
    %p19 = pneg %p18
  $region19: #{cross_attention_gpt2_forward.30} parent=0 // pred_check_branch
    %21 = sbr.rel (%p19) target = $region21
  $region20: #{cross_attention_gpt2_forward.30} parent=0 // pred_region
    %22 = vst [vmem:[#allocation2] sm:$0xff] 0.0
    %23 = vst [vmem:[#allocation2 + $0x8] sm:$0xff] 0.0
  $region21: #{cross_attention_gpt2_forward.30} parent=0 // pred_fallthru
    _
  %v24 = vld [vmem:[#allocation2] sm:$0xff]
  %v25 = vld [vmem:[#allocation2 + $0x8] sm:$0xff]
  %v26 = vld [vmem:[%s0] sm:$0xf]
  %v27 = vld [vmem:[%s0 + $0x4] sm:$0xf]
  %v28 = vld [vmem:[%s1] sm:$0xf]
  %v29 = vld [vmem:[%s1 + $0x4] sm:$0xf]
  %v30 = vld [vmem:[%s1 + $0x8] sm:$0xf]
  %v31 = vld [vmem:[%s1 + $0xc] sm:$0xf]
  %v32 = vld [vmem:[%s1 + $0x10] sm:$0xf]
  %v33 = vld [vmem:[%s1 + $0x14] sm:$0xf]
  %v34 = vld [vmem:[%s1 + $0x18] sm:$0xf]
  %v35 = vld [vmem:[%s1 + $0x1c] sm:$0xf]
  %v36 = vld [vmem:[%s1 + $0x20] sm:$0xf]
  %v37 = vld [vmem:[%s1 + $0x24] sm:$0xf]
  %v38 = vld [vmem:[%s1 + $0x28] sm:$0xf]
  %v39 = vld [vmem:[%s1 + $0x2c] sm:$0xf]
  %v40 = vld [vmem:[%s1 + $0x30] sm:$0xf]
  %v41 = vld [vmem:[%s1 + $0x34] sm:$0xf]
  %v42 = vld [vmem:[%s1 + $0x38] sm:$0xf]
  %v43 = vld [vmem:[%s1 + $0x3c] sm:$0xf]
  %v46 = vunpack.c.l.b16 %v26
  %v47 = vunpack.c.l.b16 %v27
  %v48 = vpack.c.b16 %v47, %v46
  %v66 = vunpack.c.l.b16 %v28
  %v67 = vunpack.c.l.b16 %v29
  %v68 = vunpack.c.l.b16 %v30
  %v69 = vunpack.c.l.b16 %v31
  %v70 = vunpack.c.l.b16 %v32
  %v71 = vunpack.c.l.b16 %v33
  %v72 = vunpack.c.l.b16 %v34
  %v73 = vunpack.c.l.b16 %v35
  %v74 = vunpack.c.l.b16 %v36
  %v75 = vunpack.c.l.b16 %v37
  %v76 = vunpack.c.l.b16 %v38
  %v77 = vunpack.c.l.b16 %v39
  %v78 = vunpack.c.l.b16 %v40
  %v79 = vunpack.c.l.b16 %v41
  %v80 = vunpack.c.l.b16 %v42
  %v81 = vunpack.c.l.b16 %v43
  %v82 = vpack.c.b16 %v67, %v66
  %v83 = vpack.c.b16 %v69, %v68
  %v84 = vpack.c.b16 %v71, %v70
  %v85 = vpack.c.b16 %v73, %v72
  %v86 = vpack.c.b16 %v75, %v74
  %v87 = vpack.c.b16 %v77, %v76
  %v88 = vpack.c.b16 %v79, %v78
  %v89 = vpack.c.b16 %v81, %v80
  %98 = vmatprep.subr.bf16.mxu0 0
  %99 = vmatpush1.bf16.msra.mxu0 %v89
  %100 = vmatprep.subr.bf16.mxu0 0
  %101 = vmatpush1.bf16.msra.mxu0 %v88
  %102 = vmatprep.subr.bf16.mxu0 0
  %103 = vmatpush1.bf16.msra.mxu0 %v87
  %104 = vmatprep.subr.bf16.mxu0 0
  %105 = vmatpush1.bf16.msra.mxu0 %v86
  %106 = vmatprep.subr.bf16.mxu0 0
  %107 = vmatpush1.bf16.msra.mxu0 %v85
  %108 = vmatprep.subr.bf16.mxu0 0
  %109 = vmatpush1.bf16.msra.mxu0 %v84
  %110 = vmatprep.subr.bf16.mxu0 0
  %111 = vmatpush1.bf16.msra.mxu0 %v83
  %112 = vmatprep.subr.bf16.mxu0 0
  %113 = vmatpush1.bf16.msra.mxu0 %v82
  %114 = vmatprep.subr.bf16.mxu0 0
  %115 = vmatpush2.bf16.msra.mxu0 0
  %116 = vmatprep.subr.bf16.mxu0 0
  %117 = vmatpush2.bf16.msra.mxu0 0
  %118 = vmatprep.subr.bf16.mxu0 0
  %119 = vmatpush2.bf16.msra.mxu0 0
  %120 = vmatprep.subr.bf16.mxu0 0
  %121 = vmatpush2.bf16.msra.mxu0 0
  %122 = vmatprep.subr.bf16.mxu0 0
  %123 = vmatpush2.bf16.msra.mxu0 0
  %124 = vmatprep.subr.bf16.mxu0 0
  %125 = vmatpush2.bf16.msra.mxu0 0
  %126 = vmatprep.subr.bf16.mxu0 0
  %127 = vmatpush2.bf16.msra.mxu0 0
  %128 = vmatprep.subr.bf16.mxu0 0
  %129 = vmatpush2.bf16.msra.mxu0 0
  %130 = vmatprep.mubr.bf16.mxu0 0
  %131 = vmatmul.mubr.bf16.gmra.mxu0 %v48
  %v132 = vpop.f32.mrf.mxu0
  %v133 = vadd.f32 0.0, %v132
  %v134 = vpop.f32.mrf.mxu0
  %v135 = vpop.f32.mrf.mxu0
  %v136 = vadd.f32 0.0, %v135
  %v137 = vpop.f32.mrf.mxu0
  %138 = vdwg.mxu0
  %v139 = vadd.f32 %v24, %v133
  %v140 = vadd.f32 %v25, %v136
  %141 = vst [vmem:[#allocation2] sm:$0xff] %v139
  %142 = vst [vmem:[#allocation2 + $0x8] sm:$0xff] %v140
  // Predicated region
  $region22: #{cross_attention_gpt2_forward.30} parent=0 // pred_check
    %p143 = pneg %p18
  $region23: #{cross_attention_gpt2_forward.30} parent=0 // pred_check_branch
    %145 = sbr.rel (%p143) target = $region25
  $region24: #{cross_attention_gpt2_forward.30} parent=0 // pred_region
    %v146 = vld [vmem:[#allocation2] sm:$0xff]
    %v147 = vld [vmem:[#allocation2 + $0x8] sm:$0xff]
    %v148 = vld [vmem:[%s2] sm:$0x1]
    %v150 = vlaneseq
    %v151 = vshrl.u32 %v150, 7
    %v152 = vsub.s32 0, %v151
    %v153 = vrot.slane %v148, %v152
    %v155 = vadd.f32 %v146, %v153
    %v156 = vadd.f32 %v147, %v153
    %v157 = vld [vmem:[%s3] sm:$0xff]
    %v158 = vld [vmem:[%s3 + $0x8] sm:$0xff]
    %v159 = vadd.f32 %v155, %v157
    %v160 = vadd.f32 %v156, %v158
    %161 = vst [vmem:[%s4] sm:$0xff] %v159
    %162 = vst [vmem:[%s4 + $0x8] sm:$0xff] %v160
  $region25: #{cross_attention_gpt2_forward.30} parent=0 // pred_fallthru
    _
  // Predicated region
  $region26: #{cross_attention_gpt2_forward.30} parent=0 // pred_check
    _
  $region27: #{cross_attention_gpt2_forward.30} parent=0 // pred_check_branch
    %164 = sbr.rel (0) target = $region29
  $region28: #{cross_attention_gpt2_forward.30} parent=0 // pred_region
    _
  $region29: #{cross_attention_gpt2_forward.30} parent=0 // pred_fallthru
    _
  // Predicated region
  $region30: #{cross_attention_gpt2_forward.30} parent=0 // pred_check
    _
  $region31: #{cross_attention_gpt2_forward.30} parent=0 // pred_check_branch
    %166 = sbr.rel (0) target = $region33
  $region32: #{cross_attention_gpt2_forward.30} parent=0 // pred_region
    _
  $region33: #{cross_attention_gpt2_forward.30} parent=0 // pred_fallthru
    _

// kernel: cross_attention_gpt2_forward.31
$region0: #{cross_attention_gpt2_forward.31}
  #allocation0 [shape = 'u32[]', space=smem, size = 0x4, offset = 0x4, fixed_abs, tag = 'smem constant byte address 0x4 - core index']
  #allocation1 [shape = 'u32[144,128]{1,0:T(1,128)}', space=vmem, size = 0x12000, scoped, tag = 'internal scratch']
  #allocation2 [shape = 'bf16[16,128]{1,0:T(8,128)(2,1)}', space=vmem, size = 0x1000, scoped, tag = 'scratch operand']
  %s0 = inlined_call_operand.vmem [shape: f32[16,128], index: 0, kind: input, shape index: {}]
  %s1 = inlined_call_operand.vmem [shape: f32[1,128], index: 1, kind: input, shape index: {}]
  %s2 = inlined_call_operand.vmem [shape: f32[1,128], index: 2, kind: input, shape index: {}]
  %s3 = inlined_call_operand.vmem [shape: bf16[128,128], index: 3, kind: input, shape index: {}]
  %s4 = inlined_call_operand.vmem [shape: f32[1,128], index: 4, kind: input, shape index: {}]
  %s5 = inlined_call_operand.vmem [shape: bf16[16,128], index: 5, kind: output, shape index: {}]
  %s6 = sld [smem:[#allocation0]]
  $region34: #{cross_attention_gpt2_forward.31} parent=0
    _
  %s8 = ssub.s32 1, %s6
  %s9 = scalar_select 0, %s8, %s6
  // Predicated region
  $region2: #{cross_attention_gpt2_forward.31} parent=0 // pred_check
    _
  $region3: #{cross_attention_gpt2_forward.31} parent=0 // pred_check_branch
    %11 = sbr.rel (0) target = $region5
  $region4: #{cross_attention_gpt2_forward.31} parent=0 // pred_region
    _
  $region5: #{cross_attention_gpt2_forward.31} parent=0 // pred_fallthru
    _
  // Predicated region
  $region6: #{cross_attention_gpt2_forward.31} parent=0 // pred_check
    _
  $region7: #{cross_attention_gpt2_forward.31} parent=0 // pred_check_branch
    %13 = sbr.rel (0) target = $region9
  $region8: #{cross_attention_gpt2_forward.31} parent=0 // pred_region
    _
  $region9: #{cross_attention_gpt2_forward.31} parent=0 // pred_fallthru
    _
  // Predicated region
  $region10: #{cross_attention_gpt2_forward.31} parent=0 // pred_check
    _
  $region11: #{cross_attention_gpt2_forward.31} parent=0 // pred_check_branch
    %15 = sbr.rel (0) target = $region13
  $region12: #{cross_attention_gpt2_forward.31} parent=0 // pred_region
    _
  $region13: #{cross_attention_gpt2_forward.31} parent=0 // pred_fallthru
    _
  // Predicated region
  $region14: #{cross_attention_gpt2_forward.31} parent=0 // pred_check
    _
  $region15: #{cross_attention_gpt2_forward.31} parent=0 // pred_check_branch
    %17 = sbr.rel (0) target = $region17
  $region16: #{cross_attention_gpt2_forward.31} parent=0 // pred_region
    _
  $region17: #{cross_attention_gpt2_forward.31} parent=0 // pred_fallthru
    _
  // Predicated region
  $region18: #{cross_attention_gpt2_forward.31} parent=0 // pred_check
    _
  $region19: #{cross_attention_gpt2_forward.31} parent=0 // pred_check_branch
    %19 = sbr.rel (0) target = $region21
  $region20: #{cross_attention_gpt2_forward.31} parent=0 // pred_region
    _
  $region21: #{cross_attention_gpt2_forward.31} parent=0 // pred_fallthru
    _
  %p21 = scmp.eq.s32.totalorder 0, 0
  // Predicated region
  $region22: #{cross_attention_gpt2_forward.31} parent=0 // pred_check
    %p22 = pneg %p21
  $region23: #{cross_attention_gpt2_forward.31} parent=0 // pred_check_branch
    %24 = sbr.rel (%p22) target = $region25
  $region24: #{cross_attention_gpt2_forward.31} parent=0 // pred_region
    %v25 = vld [vmem:[%s0] sm:$0xff]
    %v26 = vld [vmem:[%s0 + $0x8] sm:$0xff]
    %27 = vadd.xlane.f32.xlu0 %v25
    %v28 = vpop.xlane.xlu0 %27
    %29 = vadd.xlane.f32.xlu0 %v26
    %v30 = vpop.xlane.xlu0 %29
    %v31 = vrcp.pop 128.0
    %v32 = vmul.f32 %v28, %v31
    %v33 = vmul.f32 %v30, %v31
    %v34 = vsub.f32 %v25, %v32
    %v35 = vsub.f32 %v26, %v33
    %v36 = vmul.f32 %v34, %v34
    %v37 = vmul.f32 %v35, %v35
    %38 = vadd.xlane.f32.xlu0 %v36
    %v39 = vpop.xlane.xlu0 %38
    %40 = vadd.xlane.f32.xlu0 %v37
    %v41 = vpop.xlane.xlu0 %40
    %v42 = vmul.f32 %v39, %v31
    %v43 = vmul.f32 %v41, %v31
    %v44 = vadd.f32 %v42, 1e-05
    %v45 = vadd.f32 %v43, 1e-05
    %v46 = vrsqrt.pop %v44
    %v47 = vrsqrt.pop %v45
    %v48 = vmul.f32 %v34, %v46
    %v49 = vmul.f32 %v35, %v47
    %v50 = vld [vmem:[%s1] sm:$0x1]
    %v52 = vlaneseq
    %v53 = vshrl.u32 %v52, 7
    %v54 = vsub.s32 0, %v53
    %v55 = vrot.slane %v50, %v54
    %v57 = vmul.f32 %v48, %v55
    %v58 = vmul.f32 %v49, %v55
    %v59 = vld [vmem:[%s2] sm:$0x1]
    %v61 = vlaneseq
    %v62 = vshrl.u32 %v61, 7
    %v63 = vsub.s32 0, %v62
    %v64 = vrot.slane %v59, %v63
    %v66 = vadd.f32 %v57, %v64
    %v67 = vadd.f32 %v58, %v64
    %v68 = vpack.c.bf16 %v67, %v66
    %v70 = vunpack.c.l.b16 %v68
    %v71 = vunpack.c.h.b16 %v68
    %v72 = vpack.c.b16 %v70, %v70
    %v73 = vpack.c.b16 %v71, %v71
    %76 = vst [vmem:[#allocation2] sm:$0xf] %v72
    %77 = vst [vmem:[#allocation2 + $0x4] sm:$0xf] %v73
  $region25: #{cross_attention_gpt2_forward.31} parent=0 // pred_fallthru
    _
  %v78 = vld [vmem:[#allocation2] sm:$0xf]
  %v79 = vld [vmem:[#allocation2 + $0x4] sm:$0xf]
  %v80 = vld [vmem:[%s3] sm:$0xf]
  %v81 = vld [vmem:[%s3 + $0x4] sm:$0xf]
  %v82 = vld [vmem:[%s3 + $0x8] sm:$0xf]
  %v83 = vld [vmem:[%s3 + $0xc] sm:$0xf]
  %v84 = vld [vmem:[%s3 + $0x10] sm:$0xf]
  %v85 = vld [vmem:[%s3 + $0x14] sm:$0xf]
  %v86 = vld [vmem:[%s3 + $0x18] sm:$0xf]
  %v87 = vld [vmem:[%s3 + $0x1c] sm:$0xf]
  %v88 = vld [vmem:[%s3 + $0x20] sm:$0xf]
  %v89 = vld [vmem:[%s3 + $0x24] sm:$0xf]
  %v90 = vld [vmem:[%s3 + $0x28] sm:$0xf]
  %v91 = vld [vmem:[%s3 + $0x2c] sm:$0xf]
  %v92 = vld [vmem:[%s3 + $0x30] sm:$0xf]
  %v93 = vld [vmem:[%s3 + $0x34] sm:$0xf]
  %v94 = vld [vmem:[%s3 + $0x38] sm:$0xf]
  %v95 = vld [vmem:[%s3 + $0x3c] sm:$0xf]
  %v96 = vld [vmem:[%s4] sm:$0x1]
  %v98 = vlaneseq
  %v99 = vshrl.u32 %v98, 7
  %v100 = vsub.s32 0, %v99
  %v101 = vrot.slane %v96, %v100
  %v105 = vunpack.c.l.b16 %v78
  %v106 = vunpack.c.l.b16 %v79
  %v107 = vpack.c.b16 %v106, %v105
  %v125 = vunpack.c.l.b16 %v80
  %v126 = vunpack.c.l.b16 %v81
  %v127 = vunpack.c.l.b16 %v82
  %v128 = vunpack.c.l.b16 %v83
  %v129 = vunpack.c.l.b16 %v84
  %v130 = vunpack.c.l.b16 %v85
  %v131 = vunpack.c.l.b16 %v86
  %v132 = vunpack.c.l.b16 %v87
  %v133 = vunpack.c.l.b16 %v88
  %v134 = vunpack.c.l.b16 %v89
  %v135 = vunpack.c.l.b16 %v90
  %v136 = vunpack.c.l.b16 %v91
  %v137 = vunpack.c.l.b16 %v92
  %v138 = vunpack.c.l.b16 %v93
  %v139 = vunpack.c.l.b16 %v94
  %v140 = vunpack.c.l.b16 %v95
  %v141 = vpack.c.b16 %v126, %v125
  %v142 = vpack.c.b16 %v128, %v127
  %v143 = vpack.c.b16 %v130, %v129
  %v144 = vpack.c.b16 %v132, %v131
  %v145 = vpack.c.b16 %v134, %v133
  %v146 = vpack.c.b16 %v136, %v135
  %v147 = vpack.c.b16 %v138, %v137
  %v148 = vpack.c.b16 %v140, %v139
  %157 = vmatprep.subr.bf16.mxu0 0
  %158 = vmatpush1.bf16.msra.mxu0 %v148
  %159 = vmatprep.subr.bf16.mxu0 0
  %160 = vmatpush1.bf16.msra.mxu0 %v147
  %161 = vmatprep.subr.bf16.mxu0 0
  %162 = vmatpush1.bf16.msra.mxu0 %v146
  %163 = vmatprep.subr.bf16.mxu0 0
  %164 = vmatpush1.bf16.msra.mxu0 %v145
  %165 = vmatprep.subr.bf16.mxu0 0
  %166 = vmatpush1.bf16.msra.mxu0 %v144
  %167 = vmatprep.subr.bf16.mxu0 0
  %168 = vmatpush1.bf16.msra.mxu0 %v143
  %169 = vmatprep.subr.bf16.mxu0 0
  %170 = vmatpush1.bf16.msra.mxu0 %v142
  %171 = vmatprep.subr.bf16.mxu0 0
  %172 = vmatpush1.bf16.msra.mxu0 %v141
  %173 = vmatprep.subr.bf16.mxu0 0
  %174 = vmatpush2.bf16.msra.mxu0 0
  %175 = vmatprep.subr.bf16.mxu0 0
  %176 = vmatpush2.bf16.msra.mxu0 0
  %177 = vmatprep.subr.bf16.mxu0 0
  %178 = vmatpush2.bf16.msra.mxu0 0
  %179 = vmatprep.subr.bf16.mxu0 0
  %180 = vmatpush2.bf16.msra.mxu0 0
  %181 = vmatprep.subr.bf16.mxu0 0
  %182 = vmatpush2.bf16.msra.mxu0 0
  %183 = vmatprep.subr.bf16.mxu0 0
  %184 = vmatpush2.bf16.msra.mxu0 0
  %185 = vmatprep.subr.bf16.mxu0 0
  %186 = vmatpush2.bf16.msra.mxu0 0
  %187 = vmatprep.subr.bf16.mxu0 0
  %188 = vmatpush2.bf16.msra.mxu0 0
  %189 = vmatprep.mubr.bf16.mxu0 0
  %190 = vmatmul.mubr.bf16.gmra.mxu0 %v107
  %v191 = vpop.f32.mrf.mxu0
  %v192 = vadd.f32 %v101, %v191
  %v193 = vpop.f32.mrf.mxu0
  %v194 = vpop.f32.mrf.mxu0
  %v195 = vadd.f32 %v101, %v194
  %v196 = vpop.f32.mrf.mxu0
  %197 = vdwg.mxu0
  %v198 = vpack.c.bf16 %v195, %v192
  %v200 = vunpack.c.l.b16 %v198
  %v201 = vunpack.c.h.b16 %v198
  %v202 = vpack.c.b16 %v200, %v200
  %v203 = vpack.c.b16 %v201, %v201
  %206 = vst [vmem:[%s5] sm:$0xf] %v202
  %207 = vst [vmem:[%s5 + $0x4] sm:$0xf] %v203
  // Predicated region
  $region26: #{cross_attention_gpt2_forward.31} parent=0 // pred_check
    _
  $region27: #{cross_attention_gpt2_forward.31} parent=0 // pred_check_branch
    %209 = sbr.rel (0) target = $region29
  $region28: #{cross_attention_gpt2_forward.31} parent=0 // pred_region
    _
  $region29: #{cross_attention_gpt2_forward.31} parent=0 // pred_fallthru
    _
  // Predicated region
  $region30: #{cross_attention_gpt2_forward.31} parent=0 // pred_check
    _
  $region31: #{cross_attention_gpt2_forward.31} parent=0 // pred_check_branch
    %211 = sbr.rel (0) target = $region33
  $region32: #{cross_attention_gpt2_forward.31} parent=0 // pred_region
    _
  $region33: #{cross_attention_gpt2_forward.31} parent=0 // pred_fallthru
    _

// kernel: cross_attention_gpt2_forward.29
$region0: #{cross_attention_gpt2_forward.29}
  #allocation0 [shape = 'u32[]', space=smem, size = 0x4, offset = 0x4, fixed_abs, tag = 'smem constant byte address 0x4 - core index']
  #allocation1 [shape = 'u32[144,128]{1,0:T(1,128)}', space=vmem, size = 0x12000, scoped, tag = 'internal scratch']
  %s0 = inlined_call_operand.vmem [shape: bf16[2,8,384], index: 0, kind: input, shape index: {}, may-alias: {0,1,2}]
  %s1 = inlined_call_operand.vmem [shape: bf16[2,8,384], index: 1, kind: input, shape index: {}, may-alias: {0,1,2}]
  %s2 = inlined_call_operand.vmem [shape: bf16[2,8,384], index: 2, kind: input, shape index: {}, may-alias: {0,1,2}]
  %s3 = inlined_call_operand.vmem [shape: f32[2,1,8], index: 3, kind: input, shape index: {}]
  %s4 = inlined_call_operand.vmem [shape: bf16[2,8,128], index: 4, kind: output, shape index: {}]
  %s5 = sld [smem:[#allocation0]]
  $region49: #{cross_attention_gpt2_forward.29} parent=0
    _
  %s7 = ssub.s32 1, %s5
  %s8 = scalar_select 0, %s7, %s5
  loop: start=0, step=1, limit=4
  $region2: #{cross_attention_gpt2_forward.29} parent=0 // loop_pre_header
    _
  $region3: #{cross_attention_gpt2_forward.29} parent=0 // loop_header
    %s10 = sphi 0, %s14
    %p11 = scmp.ge.s32.totalorder %s10, 4
    %s17 = sphi 0, %s36
    %s18 = sphi 0, %s32
    %s19 = sphi 0, %s28
    %s20 = sphi 0, %s17
    %s21 = sphi 0, %s18
    %s22 = sphi 0, %s19
    %s23 = sphi 0, %s20
    %s24 = sphi 0, %s21
    %s25 = sphi 0, %s22
    %s43 = sphi 0, %s45
    %s46 = sphi 0, %s43
    %s47 = sphi 0, %s46
    %s63 = sphi 0, %s47
    %s73 = sphi 0, %s75
    %s76 = sphi 0, %s73
    %s77 = sphi 0, %s76
    %s93 = sphi 0, %s77
    %s103 = sphi 0, %s105
    %s106 = sphi 0, %s103
    %s107 = sphi 0, %s106
    %s123 = sphi 0, %s107
    %s129 = sphi 0, %s131
    %s132 = sphi 0, %s129
    %s133 = sphi 0, %s132
    %s149 = sphi 0, %s133
    %s159 = sphi 0, %s161
    %s162 = sphi 0, %s159
    %s163 = sphi 0, %s162
    %s179 = sphi 0, %s163
  $region4: #{cross_attention_gpt2_forward.29} parent=0 // loop_header_branch
    %13 = sbr.rel (%p11) target = $region8
  $region5: #{cross_attention_gpt2_forward.29} parent=0 // loop_body
    %s15 = ssub.s32 %s10, 1
    %s16 = ssub.s32 %s10, 2
    %s26 = sadd.s32 1, %s19
    %p27 = scmp.ge.s32.totalorder %s26, 1
    %s28 = scalar_select %p27, 0, %s26
    %s29 = sadd.s32 1, %s18
    %s30 = scalar_select %p27, %s29, %s18
    %p31 = scmp.ge.s32.totalorder %s30, 1
    %s32 = scalar_select %p31, 0, %s30
    %s33 = sadd.s32 1, %s17
    %s34 = scalar_select %p31, %s33, %s17
    %p35 = scmp.ge.s32.totalorder %s34, 2
    %s36 = scalar_select %p35, 0, %s34
    %s37 = ssub.s32 %s17, %s36
    %s38 = ssub.s32 %s19, %s28
    %s39 = sor.u32 %s37, %s38
    %s40 = ssub.s32 %s18, %s32
    %s41 = sor.u32 %s39, %s40
    %p42 = scmp.eq.s32.totalorder %s41, 0
    %s44 = sadd.s32 %s43, 1
    %s45 = scalar_select %p42, %s43, %s44
    %p48 = pneg %p42
    %p49 = scmp.eq.s32.totalorder %s10, 1
    %p50 = por %p48, %p49
    %p51 = scmp.ne.s32.totalorder %s43, %s46
    %p52 = scmp.eq.s32.totalorder %s10, 0
    %p53 = por %p51, %p52
    %p54 = scmp.ne.s32.totalorder %s43, %s46
    %p55 = scmp.eq.s32.totalorder %s15, 1
    %p56 = por %p54, %p55
    %p57 = scmp.ne.s32.totalorder %s46, %s47
    %p58 = scmp.eq.s32.totalorder %s15, 0
    %p59 = por %p57, %p58
    %p60 = scmp.ne.s32.totalorder %s46, %s47
    %p61 = scmp.eq.s32.totalorder %s16, 1
    %p62 = por %p60, %p61
    %p64 = scmp.ne.s32.totalorder %s47, %s63
    %p65 = scmp.eq.s32.totalorder %s16, 0
    %p66 = por %p64, %p65
    %s67 = sadd.s32 %s18, 1
    %s68 = sadd.s32 %s32, 1
    %s69 = ssub.s32 %s17, %s36
    %s70 = ssub.s32 %s67, %s68
    %s71 = sor.u32 %s69, %s70
    %p72 = scmp.eq.s32.totalorder %s71, 0
    %s74 = sadd.s32 %s73, 1
    %s75 = scalar_select %p72, %s73, %s74
    %p78 = pneg %p72
    %p79 = scmp.eq.s32.totalorder %s10, 1
    %p80 = por %p78, %p79
    %p81 = scmp.ne.s32.totalorder %s73, %s76
    %p82 = scmp.eq.s32.totalorder %s10, 0
    %p83 = por %p81, %p82
    %p84 = scmp.ne.s32.totalorder %s73, %s76
    %p85 = scmp.eq.s32.totalorder %s15, 1
    %p86 = por %p84, %p85
    %p87 = scmp.ne.s32.totalorder %s76, %s77
    %p88 = scmp.eq.s32.totalorder %s15, 0
    %p89 = por %p87, %p88
    %p90 = scmp.ne.s32.totalorder %s76, %s77
    %p91 = scmp.eq.s32.totalorder %s16, 1
    %p92 = por %p90, %p91
    %p94 = scmp.ne.s32.totalorder %s77, %s93
    %p95 = scmp.eq.s32.totalorder %s16, 0
    %p96 = por %p94, %p95
    %s97 = sadd.s32 %s18, 2
    %s98 = sadd.s32 %s32, 2
    %s99 = ssub.s32 %s17, %s36
    %s100 = ssub.s32 %s97, %s98
    %s101 = sor.u32 %s99, %s100
    %p102 = scmp.eq.s32.totalorder %s101, 0
    %s104 = sadd.s32 %s103, 1
    %s105 = scalar_select %p102, %s103, %s104
    %p108 = pneg %p102
    %p109 = scmp.eq.s32.totalorder %s10, 1
    %p110 = por %p108, %p109
    %p111 = scmp.ne.s32.totalorder %s103, %s106
    %p112 = scmp.eq.s32.totalorder %s10, 0
    %p113 = por %p111, %p112
    %p114 = scmp.ne.s32.totalorder %s103, %s106
    %p115 = scmp.eq.s32.totalorder %s15, 1
    %p116 = por %p114, %p115
    %p117 = scmp.ne.s32.totalorder %s106, %s107
    %p118 = scmp.eq.s32.totalorder %s15, 0
    %p119 = por %p117, %p118
    %p120 = scmp.ne.s32.totalorder %s106, %s107
    %p121 = scmp.eq.s32.totalorder %s16, 1
    %p122 = por %p120, %p121
    %p124 = scmp.ne.s32.totalorder %s107, %s123
    %p125 = scmp.eq.s32.totalorder %s16, 0
    %p126 = por %p124, %p125
    %s127 = ssub.s32 %s17, %s36
    %p128 = scmp.eq.s32.totalorder %s127, 0
    %s130 = sadd.s32 %s129, 1
    %s131 = scalar_select %p128, %s129, %s130
    %p134 = pneg %p128
    %p135 = scmp.eq.s32.totalorder %s10, 1
    %p136 = por %p134, %p135
    %p137 = scmp.ne.s32.totalorder %s129, %s132
    %p138 = scmp.eq.s32.totalorder %s10, 0
    %p139 = por %p137, %p138
    %p140 = scmp.ne.s32.totalorder %s129, %s132
    %p141 = scmp.eq.s32.totalorder %s15, 1
    %p142 = por %p140, %p141
    %p143 = scmp.ne.s32.totalorder %s132, %s133
    %p144 = scmp.eq.s32.totalorder %s15, 0
    %p145 = por %p143, %p144
    %p146 = scmp.ne.s32.totalorder %s132, %s133
    %p147 = scmp.eq.s32.totalorder %s16, 1
    %p148 = por %p146, %p147
    %p150 = scmp.ne.s32.totalorder %s133, %s149
    %p151 = scmp.eq.s32.totalorder %s16, 0
    %p152 = por %p150, %p151
    %s153 = ssub.s32 %s17, %s36
    %s154 = ssub.s32 %s19, %s28
    %s155 = sor.u32 %s153, %s154
    %s156 = ssub.s32 %s18, %s32
    %s157 = sor.u32 %s155, %s156
    %p158 = scmp.eq.s32.totalorder %s157, 0
    %s160 = sadd.s32 %s159, 1
    %s161 = scalar_select %p158, %s159, %s160
    %p164 = pneg %p158
    %p165 = scmp.eq.s32.totalorder %s10, 1
    %p166 = por %p164, %p165
    %p167 = scmp.ne.s32.totalorder %s159, %s162
    %p168 = scmp.eq.s32.totalorder %s10, 0
    %p169 = por %p167, %p168
    %p170 = scmp.ne.s32.totalorder %s159, %s162
    %p171 = scmp.eq.s32.totalorder %s15, 1
    %p172 = por %p170, %p171
    %p173 = scmp.ne.s32.totalorder %s162, %s163
    %p174 = scmp.eq.s32.totalorder %s15, 0
    %p175 = por %p173, %p174
    %p176 = scmp.ne.s32.totalorder %s162, %s163
    %p177 = scmp.eq.s32.totalorder %s16, 1
    %p178 = por %p176, %p177
    %p180 = scmp.ne.s32.totalorder %s163, %s179
    %p181 = scmp.eq.s32.totalorder %s16, 0
    %p182 = por %p180, %p181
    %p183 = scmp.le.s32.totalorder 1, %s10
    %p184 = scmp.lt.s32.totalorder %s10, 3
    %p185 = pnand %p183, %p184
    %p186 = pneg %p185
    // Predicated region
    $region9: #{cross_attention_gpt2_forward.29} parent=5 // pred_check
      _
    $region10: #{cross_attention_gpt2_forward.29} parent=5 // pred_check_branch
      %188 = sbr.rel (%p185) target = $region12
    $region11: #{cross_attention_gpt2_forward.29} parent=5 // pred_region
      %s189 = ssub.s32 %s10, 1
    $region12: #{cross_attention_gpt2_forward.29} parent=5 // pred_fallthru
      _
    %p190 = scmp.lt.s32.totalorder %s10, 2
    // Predicated region
    $region13: #{cross_attention_gpt2_forward.29} parent=5 // pred_check
      %p191 = pneg %p190
    $region14: #{cross_attention_gpt2_forward.29} parent=5 // pred_check_branch
      %193 = sbr.rel (%p191) target = $region16
    $region15: #{cross_attention_gpt2_forward.29} parent=5 // pred_region
      // Predicated region
      $region17: #{cross_attention_gpt2_forward.29} parent=15 // pred_check
        %p194 = pneg %p53
      $region18: #{cross_attention_gpt2_forward.29} parent=15 // pred_check_branch
        %196 = sbr.rel (%p194) target = $region20
      $region19: #{cross_attention_gpt2_forward.29} parent=15 // pred_region
        %p197 = scmp.lt.s32.totalorder %s17, 1
        %s198 = scalar_select %p197, %s17, 1
        %p199 = scmp.lt.s32.totalorder %s19, 0
        %s200 = scalar_select %p199, %s19, 0
        %p201 = scmp.lt.s32.totalorder %s18, 2
        %s202 = scalar_select %p201, %s18, 2
        %s203 = smul.addr %s200, 3
        %s204 = sadd.s32 %s202, %s203
        %s205 = smul.addr %s198, 3
        %s206 = sadd.s32 %s204, %s205
        %s207 = smul.addr %s206, 4
        %s208 = scalar_lea.vmem %s0, %s207
      $region20: #{cross_attention_gpt2_forward.29} parent=15 // pred_fallthru
        _
      // Predicated region
      $region21: #{cross_attention_gpt2_forward.29} parent=15 // pred_check
        %p209 = pneg %p83
      $region22: #{cross_attention_gpt2_forward.29} parent=15 // pred_check_branch
        %211 = sbr.rel (%p209) target = $region24
      $region23: #{cross_attention_gpt2_forward.29} parent=15 // pred_region
        %s212 = sadd.s32 %s18, 1
        %p213 = scmp.lt.s32.totalorder %s17, 1
        %s214 = scalar_select %p213, %s17, 1
        %p215 = scmp.lt.s32.totalorder %s212, 2
        %s216 = scalar_select %p215, %s212, 2
        %s217 = smul.addr %s214, 3
        %s218 = sadd.s32 %s216, %s217
        %s219 = smul.addr %s218, 4
        %s220 = scalar_lea.vmem %s1, %s219
        %s221 = sadd.s32 %s18, 1
      $region24: #{cross_attention_gpt2_forward.29} parent=15 // pred_fallthru
        _
      // Predicated region
      $region25: #{cross_attention_gpt2_forward.29} parent=15 // pred_check
        %p222 = pneg %p113
      $region26: #{cross_attention_gpt2_forward.29} parent=15 // pred_check_branch
        %224 = sbr.rel (%p222) target = $region28
      $region27: #{cross_attention_gpt2_forward.29} parent=15 // pred_region
        %s225 = sadd.s32 %s18, 2
        %p226 = scmp.lt.s32.totalorder %s17, 1
        %s227 = scalar_select %p226, %s17, 1
        %p228 = scmp.lt.s32.totalorder %s225, 2
        %s229 = scalar_select %p228, %s225, 2
        %s230 = smul.addr %s227, 3
        %s231 = sadd.s32 %s229, %s230
        %s232 = smul.addr %s231, 4
        %s233 = scalar_lea.vmem %s2, %s232
        %s234 = sadd.s32 %s18, 2
      $region28: #{cross_attention_gpt2_forward.29} parent=15 // pred_fallthru
        _
      // Predicated region
      $region29: #{cross_attention_gpt2_forward.29} parent=15 // pred_check
        %p235 = pneg %p139
      $region30: #{cross_attention_gpt2_forward.29} parent=15 // pred_check_branch
        %237 = sbr.rel (%p235) target = $region32
      $region31: #{cross_attention_gpt2_forward.29} parent=15 // pred_region
        %p238 = scmp.lt.s32.totalorder %s17, 1
        %s239 = scalar_select %p238, %s17, 1
        %s240 = scalar_lea.vmem %s3, %s239
      $region32: #{cross_attention_gpt2_forward.29} parent=15 // pred_fallthru
        _
    $region16: #{cross_attention_gpt2_forward.29} parent=5 // pred_fallthru
      _
    %p241 = scmp.le.s32.totalorder 1, %s10
    %p242 = scmp.lt.s32.totalorder %s10, 3
    %p243 = pnand %p241, %p242
    %p244 = pneg %p243
    // Predicated region
    $region33: #{cross_attention_gpt2_forward.29} parent=5 // pred_check
      _
    $region34: #{cross_attention_gpt2_forward.29} parent=5 // pred_check_branch
      %246 = sbr.rel (%p243) target = $region36
    $region35: #{cross_attention_gpt2_forward.29} parent=5 // pred_region
      %s247 = ssub.s32 %s10, 1
      %p248 = scmp.lt.s32.totalorder %s20, 1
      %s249 = scalar_select %p248, %s20, 1
      %p250 = scmp.lt.s32.totalorder %s22, 0
      %s251 = scalar_select %p250, %s22, 0
      %p252 = scmp.lt.s32.totalorder %s21, 2
      %s253 = scalar_select %p252, %s21, 2
      %s254 = smul.addr %s251, 3
      %s255 = sadd.s32 %s253, %s254
      %s256 = smul.addr %s249, 3
      %s257 = sadd.s32 %s255, %s256
      %s258 = smul.addr %s257, 4
      %s259 = scalar_lea.vmem %s0, %s258
      %p260 = pneg %p59
      %p261 = pneg %p56
      %s262 = sadd.s32 %s21, 1
      %p263 = scmp.lt.s32.totalorder %s20, 1
      %s264 = scalar_select %p263, %s20, 1
      %p265 = scmp.lt.s32.totalorder %s262, 2
      %s266 = scalar_select %p265, %s262, 2
      %s267 = smul.addr %s264, 3
      %s268 = sadd.s32 %s266, %s267
      %s269 = smul.addr %s268, 4
      %s270 = scalar_lea.vmem %s1, %s269
      %p271 = pneg %p89
      %p272 = pneg %p86
      %s273 = sadd.s32 %s21, 2
      %p274 = scmp.lt.s32.totalorder %s20, 1
      %s275 = scalar_select %p274, %s20, 1
      %p276 = scmp.lt.s32.totalorder %s273, 2
      %s277 = scalar_select %p276, %s273, 2
      %s278 = smul.addr %s275, 3
      %s279 = sadd.s32 %s277, %s278
      %s280 = smul.addr %s279, 4
      %s281 = scalar_lea.vmem %s2, %s280
      %p282 = pneg %p119
      %p283 = pneg %p116
      %p284 = scmp.lt.s32.totalorder %s20, 1
      %s285 = scalar_select %p284, %s20, 1
      %s286 = scalar_lea.vmem %s3, %s285
      %p287 = pneg %p145
      %p288 = pneg %p142
      %p289 = pneg %p175
      %p290 = pneg %p172
      %p291 = scmp.lt.s32.totalorder %s20, 1
      %s292 = scalar_select %p291, %s20, 1
      %p293 = scmp.lt.s32.totalorder %s22, 0
      %s294 = scalar_select %p293, %s22, 0
      %p295 = scmp.lt.s32.totalorder %s21, 0
      %s296 = scalar_select %p295, %s21, 0
      %s297 = sadd.s32 %s296, %s294
      %s298 = sadd.s32 %s297, %s292
      %s299 = smul.addr %s298, 4
      %s300 = scalar_lea.vmem %s4, %s299
      %p301 = scmp.lt.s32.totalorder %s20, 1
      %s302 = scalar_select %p301, %s20, 1
      %p303 = scmp.lt.s32.totalorder %s22, 0
      %s304 = scalar_select %p303, %s22, 0
      %p305 = scmp.lt.s32.totalorder %s21, 2
      %s306 = scalar_select %p305, %s21, 2
      %s307 = smul.addr %s304, 3
      %s308 = sadd.s32 %s306, %s307
      %s309 = smul.addr %s302, 3
      %s310 = sadd.s32 %s308, %s309
      %s311 = smul.addr %s310, 4
      %s312 = scalar_lea.vmem %s0, %s311
      %s313 = sadd.s32 %s21, 1
      %p314 = scmp.lt.s32.totalorder %s20, 1
      %s315 = scalar_select %p314, %s20, 1
      %p316 = scmp.lt.s32.totalorder %s313, 2
      %s317 = scalar_select %p316, %s313, 2
      %s318 = smul.addr %s315, 3
      %s319 = sadd.s32 %s317, %s318
      %s320 = smul.addr %s319, 4
      %s321 = scalar_lea.vmem %s1, %s320
      %s322 = sadd.s32 %s21, 1
      %s323 = sadd.s32 %s21, 2
      %p324 = scmp.lt.s32.totalorder %s20, 1
      %s325 = scalar_select %p324, %s20, 1
      %p326 = scmp.lt.s32.totalorder %s323, 2
      %s327 = scalar_select %p326, %s323, 2
      %s328 = smul.addr %s325, 3
      %s329 = sadd.s32 %s327, %s328
      %s330 = smul.addr %s329, 4
      %s331 = scalar_lea.vmem %s2, %s330
      %s332 = sadd.s32 %s21, 2
      %p333 = scmp.lt.s32.totalorder %s20, 1
      %s334 = scalar_select %p333, %s20, 1
      %s335 = scalar_lea.vmem %s3, %s334
      %p336 = scmp.lt.s32.totalorder %s20, 1
      %s337 = scalar_select %p336, %s20, 1
      %p338 = scmp.lt.s32.totalorder %s22, 0
      %s339 = scalar_select %p338, %s22, 0
      %p340 = scmp.lt.s32.totalorder %s21, 0
      %s341 = scalar_select %p340, %s21, 0
      %s342 = sadd.s32 %s341, %s339
      %s343 = sadd.s32 %s342, %s337
      %s344 = smul.addr %s343, 4
      %s345 = scalar_lea.vmem %s4, %s344
      %v347 = vld [vmem:[%s312] sm:$0xf]
      %v348 = vld [vmem:[%s321] sm:$0xf]
      %v349 = vld [vmem:[%s331] sm:$0xf]
      %v350 = vld [vmem:[%s335] sm:$0x1]
      %s351 = smul.u32 %s22, 8
      %vm352 = vcmask 523264
      %v354 = vsel %vm352, %v347, 0
      %v357 = vsel %vm352, %v348, 0
      %359 = vmatprep.subr.bf16.mxu0 0
      %360 = vmatpush1.bf16.xpose.msra.mxu0 0
      %361 = vmatprep.subr.bf16.mxu0 0
      %362 = vmatpush1.bf16.xpose.msra.mxu0 0
      %363 = vmatprep.subr.bf16.mxu0 0
      %364 = vmatpush1.bf16.xpose.msra.mxu0 0
      %365 = vmatprep.subr.bf16.mxu0 0
      %366 = vmatpush1.bf16.xpose.msra.mxu0 0
      %367 = vmatprep.subr.bf16.mxu0 0
      %368 = vmatpush1.bf16.xpose.msra.mxu0 0
      %369 = vmatprep.subr.bf16.mxu0 0
      %370 = vmatpush1.bf16.xpose.msra.mxu0 0
      %371 = vmatprep.subr.bf16.mxu0 0
      %372 = vmatpush1.bf16.xpose.msra.mxu0 0
      %373 = vmatprep.subr.bf16.mxu0 0
      %374 = vmatpush1.bf16.xpose.msra.mxu0 %v357
      %375 = vmatprep.subr.bf16.mxu0 0
      %376 = vmatpush2.bf16.xpose.msra.mxu0 0
      %377 = vmatprep.subr.bf16.mxu0 0
      %378 = vmatpush2.bf16.xpose.msra.mxu0 0
      %379 = vmatprep.subr.bf16.mxu0 0
      %380 = vmatpush2.bf16.xpose.msra.mxu0 0
      %381 = vmatprep.subr.bf16.mxu0 0
      %382 = vmatpush2.bf16.xpose.msra.mxu0 0
      %383 = vmatprep.subr.bf16.mxu0 0
      %384 = vmatpush2.bf16.xpose.msra.mxu0 0
      %385 = vmatprep.subr.bf16.mxu0 0
      %386 = vmatpush2.bf16.xpose.msra.mxu0 0
      %387 = vmatprep.subr.bf16.mxu0 0
      %388 = vmatpush2.bf16.xpose.msra.mxu0 0
      %389 = vmatprep.subr.bf16.mxu0 0
      %390 = vmatpush2.bf16.xpose.msra.mxu0 0
      %391 = vmatprep.mubr.bf16.mxu0 0
      %392 = vmatmul.mubr.bf16.gmra.mxu0 %v354
      %v393 = vpop.f32.mrf.mxu0
      %v394 = vadd.f32 0.0, %v393
      %v395 = vpop.f32.mrf.mxu0
      %v396 = vpop.f32.mrf.mxu0
      %v397 = vpop.f32.mrf.mxu0
      %398 = vdwg.mxu0
      %v399 = vmul.f32 %v394, 0.125
      %v400 = vlaneseq
      %v401 = vshrl.u32 %v400, 7
      %v402 = vstv %s351
      %v403 = vadd.s32 %v401, %v402
      %v404 = vlaneseq
      %v405 = vand.u32 %v404, 127
      %vm406 = vcmp.le.s32.totalorder %v405, %v403
      %v408 = vlaneseq
      %v409 = vshrl.u32 %v408, 7
      %v410 = vsub.s32 0, %v409
      %v411 = vrot.slane %v350, %v410
      %v413 = vadd.f32 %v399, %v411
      %v414 = vsel %vm406, %v413, -3.4028235e+38
      %vm415 = vcmask 64512
      %v416 = vsel %vm415, %v414, -inf
      %417 = vmax.xlane.f32.xlu0 %v416
      %v418 = vpop.xlane.xlu0 %417
      %v419 = vsub.f32 %v414, %v418
      %v420 = vmul.f32 %v419, 1.442695
      %v421 = vpow.pop %v420
      %v422 = vsel %vm415, %v421, 0.0
      %423 = vadd.xlane.f32.xlu0 %v422
      %v424 = vpop.xlane.xlu0 %423
      %v425 = vrcp.pop %v424
      %v426 = vpack.c.bf16 %v421, %v421
      %v428 = vsel %vm415, %v426, 0
      %vm430 = vcmask 1043456
      %v432 = vsel %vm430, %v349, 0
      %434 = vmatprep.subr.bf16.mxu0 0
      %435 = vmatpush1.bf16.msra.mxu0 0
      %436 = vmatprep.subr.bf16.mxu0 0
      %437 = vmatpush1.bf16.msra.mxu0 0
      %438 = vmatprep.subr.bf16.mxu0 0
      %439 = vmatpush1.bf16.msra.mxu0 0
      %440 = vmatprep.subr.bf16.mxu0 0
      %441 = vmatpush1.bf16.msra.mxu0 0
      %442 = vmatprep.subr.bf16.mxu0 0
      %443 = vmatpush1.bf16.msra.mxu0 0
      %444 = vmatprep.subr.bf16.mxu0 0
      %445 = vmatpush1.bf16.msra.mxu0 0
      %446 = vmatprep.subr.bf16.mxu0 0
      %447 = vmatpush1.bf16.msra.mxu0 0
      %448 = vmatprep.subr.bf16.mxu0 0
      %449 = vmatpush1.bf16.msra.mxu0 %v432
      %450 = vmatprep.subr.bf16.mxu0 0
      %451 = vmatpush2.bf16.msra.mxu0 0
      %452 = vmatprep.subr.bf16.mxu0 0
      %453 = vmatpush2.bf16.msra.mxu0 0
      %454 = vmatprep.subr.bf16.mxu0 0
      %455 = vmatpush2.bf16.msra.mxu0 0
      %456 = vmatprep.subr.bf16.mxu0 0
      %457 = vmatpush2.bf16.msra.mxu0 0
      %458 = vmatprep.subr.bf16.mxu0 0
      %459 = vmatpush2.bf16.msra.mxu0 0
      %460 = vmatprep.subr.bf16.mxu0 0
      %461 = vmatpush2.bf16.msra.mxu0 0
      %462 = vmatprep.subr.bf16.mxu0 0
      %463 = vmatpush2.bf16.msra.mxu0 0
      %464 = vmatprep.subr.bf16.mxu0 0
      %465 = vmatpush2.bf16.msra.mxu0 0
      %466 = vmatprep.mubr.bf16.mxu0 0
      %467 = vmatmul.mubr.bf16.gmra.mxu0 %v428
      %v468 = vpop.f32.mrf.mxu0
      %v469 = vadd.f32 0.0, %v468
      %v470 = vpop.f32.mrf.mxu0
      %v471 = vpop.f32.mrf.mxu0
      %v472 = vpop.f32.mrf.mxu0
      %473 = vdwg.mxu0
      %v474 = vmul.f32 %v469, %v425
      %v476 = vunpack.c.l.b16 %v347
      %v477 = vpack.c.b16 %v476, %v476
      %478 = vrot.lane.b32.xlu0 %v477, 64
      %v479 = vpop.permute.xlu0 %478
      %v481 = vunpack.c.l.b16 %v348
      %v482 = vpack.c.b16 %v481, %v481
      %483 = vrot.lane.b32.xlu0 %v482, 64
      %v484 = vpop.permute.xlu0 %483
      %v486 = vsel %vm352, %v479, 0
      %v489 = vsel %vm352, %v484, 0
      %491 = vmatprep.subr.bf16.mxu0 0
      %492 = vmatpush1.bf16.xpose.msra.mxu0 0
      %493 = vmatprep.subr.bf16.mxu0 0
      %494 = vmatpush1.bf16.xpose.msra.mxu0 0
      %495 = vmatprep.subr.bf16.mxu0 0
      %496 = vmatpush1.bf16.xpose.msra.mxu0 0
      %497 = vmatprep.subr.bf16.mxu0 0
      %498 = vmatpush1.bf16.xpose.msra.mxu0 0
      %499 = vmatprep.subr.bf16.mxu0 0
      %500 = vmatpush1.bf16.xpose.msra.mxu0 0
      %501 = vmatprep.subr.bf16.mxu0 0
      %502 = vmatpush1.bf16.xpose.msra.mxu0 0
      %503 = vmatprep.subr.bf16.mxu0 0
      %504 = vmatpush1.bf16.xpose.msra.mxu0 0
      %505 = vmatprep.subr.bf16.mxu0 0
      %506 = vmatpush1.bf16.xpose.msra.mxu0 %v489
      %507 = vmatprep.subr.bf16.mxu0 0
      %508 = vmatpush2.bf16.xpose.msra.mxu0 0
      %509 = vmatprep.subr.bf16.mxu0 0
      %510 = vmatpush2.bf16.xpose.msra.mxu0 0
      %511 = vmatprep.subr.bf16.mxu0 0
      %512 = vmatpush2.bf16.xpose.msra.mxu0 0
      %513 = vmatprep.subr.bf16.mxu0 0
      %514 = vmatpush2.bf16.xpose.msra.mxu0 0
      %515 = vmatprep.subr.bf16.mxu0 0
      %516 = vmatpush2.bf16.xpose.msra.mxu0 0
      %517 = vmatprep.subr.bf16.mxu0 0
      %518 = vmatpush2.bf16.xpose.msra.mxu0 0
      %519 = vmatprep.subr.bf16.mxu0 0
      %520 = vmatpush2.bf16.xpose.msra.mxu0 0
      %521 = vmatprep.subr.bf16.mxu0 0
      %522 = vmatpush2.bf16.xpose.msra.mxu0 0
      %523 = vmatprep.mubr.bf16.mxu0 0
      %524 = vmatmul.mubr.bf16.gmra.mxu0 %v486
      %v525 = vpop.f32.mrf.mxu0
      %v526 = vadd.f32 0.0, %v525
      %v527 = vpop.f32.mrf.mxu0
      %v528 = vpop.f32.mrf.mxu0
      %v529 = vpop.f32.mrf.mxu0
      %530 = vdwg.mxu0
      %v531 = vmul.f32 %v526, 0.125
      %v532 = vadd.f32 %v531, %v411
      %v533 = vsel %vm406, %v532, -3.4028235e+38
      %v534 = vsel %vm415, %v533, -inf
      %535 = vmax.xlane.f32.xlu0 %v534
      %v536 = vpop.xlane.xlu0 %535
      %v537 = vsub.f32 %v533, %v536
      %v538 = vmul.f32 %v537, 1.442695
      %v539 = vpow.pop %v538
      %v540 = vsel %vm415, %v539, 0.0
      %541 = vadd.xlane.f32.xlu0 %v540
      %v542 = vpop.xlane.xlu0 %541
      %v543 = vrcp.pop %v542
      %v544 = vpack.c.bf16 %v539, %v539
      %v546 = vunpack.c.l.b16 %v349
      %v547 = vpack.c.b16 %v546, %v546
      %548 = vrot.lane.b32.xlu0 %v547, 64
      %v549 = vpop.permute.xlu0 %548
      %v551 = vsel %vm415, %v544, 0
      %v554 = vsel %vm430, %v549, 0
      %556 = vmatprep.subr.bf16.mxu0 0
      %557 = vmatpush1.bf16.msra.mxu0 0
      %558 = vmatprep.subr.bf16.mxu0 0
      %559 = vmatpush1.bf16.msra.mxu0 0
      %560 = vmatprep.subr.bf16.mxu0 0
      %561 = vmatpush1.bf16.msra.mxu0 0
      %562 = vmatprep.subr.bf16.mxu0 0
      %563 = vmatpush1.bf16.msra.mxu0 0
      %564 = vmatprep.subr.bf16.mxu0 0
      %565 = vmatpush1.bf16.msra.mxu0 0
      %566 = vmatprep.subr.bf16.mxu0 0
      %567 = vmatpush1.bf16.msra.mxu0 0
      %568 = vmatprep.subr.bf16.mxu0 0
      %569 = vmatpush1.bf16.msra.mxu0 0
      %570 = vmatprep.subr.bf16.mxu0 0
      %571 = vmatpush1.bf16.msra.mxu0 %v554
      %572 = vmatprep.subr.bf16.mxu0 0
      %573 = vmatpush2.bf16.msra.mxu0 0
      %574 = vmatprep.subr.bf16.mxu0 0
      %575 = vmatpush2.bf16.msra.mxu0 0
      %576 = vmatprep.subr.bf16.mxu0 0
      %577 = vmatpush2.bf16.msra.mxu0 0
      %578 = vmatprep.subr.bf16.mxu0 0
      %579 = vmatpush2.bf16.msra.mxu0 0
      %580 = vmatprep.subr.bf16.mxu0 0
      %581 = vmatpush2.bf16.msra.mxu0 0
      %582 = vmatprep.subr.bf16.mxu0 0
      %583 = vmatpush2.bf16.msra.mxu0 0
      %584 = vmatprep.subr.bf16.mxu0 0
      %585 = vmatpush2.bf16.msra.mxu0 0
      %586 = vmatprep.subr.bf16.mxu0 0
      %587 = vmatpush2.bf16.msra.mxu0 0
      %588 = vmatprep.mubr.bf16.mxu0 0
      %589 = vmatmul.mubr.bf16.gmra.mxu0 %v551
      %v590 = vpop.f32.mrf.mxu0
      %v591 = vadd.f32 0.0, %v590
      %v592 = vpop.f32.mrf.mxu0
      %v593 = vpop.f32.mrf.mxu0
      %v594 = vpop.f32.mrf.mxu0
      %595 = vdwg.mxu0
      %v596 = vmul.f32 %v591, %v543
      %598 = vrot.lane.b32.xlu0 %v596, 64
      %v599 = vpop.permute.xlu0 %598
      %v601 = vsel %vm352, %v474, %v599
      %v602 = vpack.c.bf16 %v601, %v601
      %603 = vst [vmem:[%s345] sm:$0xf] %v602
      %p604 = scmp.lt.s32.totalorder %s20, 1
      %s605 = scalar_select %p604, %s20, 1
      %p606 = scmp.lt.s32.totalorder %s22, 0
      %s607 = scalar_select %p606, %s22, 0
      %p608 = scmp.lt.s32.totalorder %s21, 0
      %s609 = scalar_select %p608, %s21, 0
      %s610 = sadd.s32 %s609, %s607
      %s611 = sadd.s32 %s610, %s605
      %s612 = smul.addr %s611, 4
      %s613 = scalar_lea.vmem %s4, %s612
      // Predicated region
      $region37: #{cross_attention_gpt2_forward.29} parent=35 // pred_check
        %p614 = pneg %p172
      $region38: #{cross_attention_gpt2_forward.29} parent=35 // pred_check_branch
        %616 = sbr.rel (%p614) target = $region40
      $region39: #{cross_attention_gpt2_forward.29} parent=35 // pred_region
        _
      $region40: #{cross_attention_gpt2_forward.29} parent=35 // pred_fallthru
        _
    $region36: #{cross_attention_gpt2_forward.29} parent=5 // pred_fallthru
      _
    %p617 = scmp.le.s32.totalorder 2, %s10
    // Predicated region
    $region41: #{cross_attention_gpt2_forward.29} parent=5 // pred_check
      %p618 = pneg %p617
    $region42: #{cross_attention_gpt2_forward.29} parent=5 // pred_check_branch
      %620 = sbr.rel (%p618) target = $region44
    $region43: #{cross_attention_gpt2_forward.29} parent=5 // pred_region
      %s621 = ssub.s32 %s10, 2
      // Predicated region
      $region45: #{cross_attention_gpt2_forward.29} parent=43 // pred_check
        %p622 = pneg %p178
      $region46: #{cross_attention_gpt2_forward.29} parent=43 // pred_check_branch
        %624 = sbr.rel (%p622) target = $region48
      $region47: #{cross_attention_gpt2_forward.29} parent=43 // pred_region
        %p625 = scmp.lt.s32.totalorder %s23, 1
        %s626 = scalar_select %p625, %s23, 1
        %p627 = scmp.lt.s32.totalorder %s25, 0
        %s628 = scalar_select %p627, %s25, 0
        %p629 = scmp.lt.s32.totalorder %s24, 0
        %s630 = scalar_select %p629, %s24, 0
        %s631 = sadd.s32 %s630, %s628
        %s632 = sadd.s32 %s631, %s626
        %s633 = smul.addr %s632, 4
        %s634 = scalar_lea.vmem %s4, %s633
      $region48: #{cross_attention_gpt2_forward.29} parent=43 // pred_fallthru
        _
    $region44: #{cross_attention_gpt2_forward.29} parent=5 // pred_fallthru
      _
  $region6: #{cross_attention_gpt2_forward.29} parent=0 // loop_footer
    %s14 = sadd.s32 1, %s10
  $region7: #{cross_attention_gpt2_forward.29} parent=0 // loop_footer_branch
    %9 = sbr.rel target = $region3
  $region8: #{cross_attention_gpt2_forward.29} parent=0 // loop_exit
    _

// kernel: cross_attention_gpt2_forward.28
$region0: #{cross_attention_gpt2_forward.28}
  #allocation0 [shape = 'u32[]', space=smem, size = 0x4, offset = 0x4, fixed_abs, tag = 'smem constant byte address 0x4 - core index']
  #allocation1 [shape = 'u32[144,128]{1,0:T(1,128)}', space=vmem, size = 0x12000, scoped, tag = 'internal scratch']
  #allocation2 [shape = 'bf16[16,128]{1,0:T(8,128)(2,1)}', space=vmem, size = 0x1000, scoped, tag = 'scratch operand']
  %s0 = inlined_call_operand.vmem [shape: f32[16,128], index: 0, kind: input, shape index: {}]
  %s1 = inlined_call_operand.vmem [shape: f32[1,128], index: 1, kind: input, shape index: {}]
  %s2 = inlined_call_operand.vmem [shape: f32[1,128], index: 2, kind: input, shape index: {}]
  %s3 = inlined_call_operand.vmem [shape: bf16[128,384], index: 3, kind: input, shape index: {}]
  %s4 = inlined_call_operand.vmem [shape: f32[1,384], index: 4, kind: input, shape index: {}]
  %s5 = inlined_call_operand.vmem [shape: bf16[16,384], index: 5, kind: output, shape index: {}]
  %s6 = sld [smem:[#allocation0]]
  $region34: #{cross_attention_gpt2_forward.28} parent=0
    _
  %s8 = ssub.s32 1, %s6
  %s9 = scalar_select 0, %s8, %s6
  // Predicated region
  $region2: #{cross_attention_gpt2_forward.28} parent=0 // pred_check
    _
  $region3: #{cross_attention_gpt2_forward.28} parent=0 // pred_check_branch
    %11 = sbr.rel (0) target = $region5
  $region4: #{cross_attention_gpt2_forward.28} parent=0 // pred_region
    _
  $region5: #{cross_attention_gpt2_forward.28} parent=0 // pred_fallthru
    _
  // Predicated region
  $region6: #{cross_attention_gpt2_forward.28} parent=0 // pred_check
    _
  $region7: #{cross_attention_gpt2_forward.28} parent=0 // pred_check_branch
    %13 = sbr.rel (0) target = $region9
  $region8: #{cross_attention_gpt2_forward.28} parent=0 // pred_region
    _
  $region9: #{cross_attention_gpt2_forward.28} parent=0 // pred_fallthru
    _
  // Predicated region
  $region10: #{cross_attention_gpt2_forward.28} parent=0 // pred_check
    _
  $region11: #{cross_attention_gpt2_forward.28} parent=0 // pred_check_branch
    %15 = sbr.rel (0) target = $region13
  $region12: #{cross_attention_gpt2_forward.28} parent=0 // pred_region
    _
  $region13: #{cross_attention_gpt2_forward.28} parent=0 // pred_fallthru
    _
  // Predicated region
  $region14: #{cross_attention_gpt2_forward.28} parent=0 // pred_check
    _
  $region15: #{cross_attention_gpt2_forward.28} parent=0 // pred_check_branch
    %17 = sbr.rel (0) target = $region17
  $region16: #{cross_attention_gpt2_forward.28} parent=0 // pred_region
    _
  $region17: #{cross_attention_gpt2_forward.28} parent=0 // pred_fallthru
    _
  // Predicated region
  $region18: #{cross_attention_gpt2_forward.28} parent=0 // pred_check
    _
  $region19: #{cross_attention_gpt2_forward.28} parent=0 // pred_check_branch
    %19 = sbr.rel (0) target = $region21
  $region20: #{cross_attention_gpt2_forward.28} parent=0 // pred_region
    _
  $region21: #{cross_attention_gpt2_forward.28} parent=0 // pred_fallthru
    _
  %p21 = scmp.eq.s32.totalorder 0, 0
  // Predicated region
  $region22: #{cross_attention_gpt2_forward.28} parent=0 // pred_check
    %p22 = pneg %p21
  $region23: #{cross_attention_gpt2_forward.28} parent=0 // pred_check_branch
    %24 = sbr.rel (%p22) target = $region25
  $region24: #{cross_attention_gpt2_forward.28} parent=0 // pred_region
    %v25 = vld [vmem:[%s0] sm:$0xff]
    %v26 = vld [vmem:[%s0 + $0x8] sm:$0xff]
    %27 = vadd.xlane.f32.xlu0 %v25
    %v28 = vpop.xlane.xlu0 %27
    %29 = vadd.xlane.f32.xlu0 %v26
    %v30 = vpop.xlane.xlu0 %29
    %v31 = vrcp.pop 128.0
    %v32 = vmul.f32 %v28, %v31
    %v33 = vmul.f32 %v30, %v31
    %v34 = vsub.f32 %v25, %v32
    %v35 = vsub.f32 %v26, %v33
    %v36 = vmul.f32 %v34, %v34
    %v37 = vmul.f32 %v35, %v35
    %38 = vadd.xlane.f32.xlu0 %v36
    %v39 = vpop.xlane.xlu0 %38
    %40 = vadd.xlane.f32.xlu0 %v37
    %v41 = vpop.xlane.xlu0 %40
    %v42 = vmul.f32 %v39, %v31
    %v43 = vmul.f32 %v41, %v31
    %v44 = vadd.f32 %v42, 1e-05
    %v45 = vadd.f32 %v43, 1e-05
    %v46 = vrsqrt.pop %v44
    %v47 = vrsqrt.pop %v45
    %v48 = vmul.f32 %v34, %v46
    %v49 = vmul.f32 %v35, %v47
    %v50 = vld [vmem:[%s1] sm:$0x1]
    %v52 = vlaneseq
    %v53 = vshrl.u32 %v52, 7
    %v54 = vsub.s32 0, %v53
    %v55 = vrot.slane %v50, %v54
    %v57 = vmul.f32 %v48, %v55
    %v58 = vmul.f32 %v49, %v55
    %v59 = vld [vmem:[%s2] sm:$0x1]
    %v61 = vlaneseq
    %v62 = vshrl.u32 %v61, 7
    %v63 = vsub.s32 0, %v62
    %v64 = vrot.slane %v59, %v63
    %v66 = vadd.f32 %v57, %v64
    %v67 = vadd.f32 %v58, %v64
    %v68 = vpack.c.bf16 %v67, %v66
    %v70 = vunpack.c.l.b16 %v68
    %v71 = vunpack.c.h.b16 %v68
    %v72 = vpack.c.b16 %v70, %v70
    %v73 = vpack.c.b16 %v71, %v71
    %76 = vst [vmem:[#allocation2] sm:$0xf] %v72
    %77 = vst [vmem:[#allocation2 + $0x4] sm:$0xf] %v73
  $region25: #{cross_attention_gpt2_forward.28} parent=0 // pred_fallthru
    _
  %v78 = vld [vmem:[#allocation2] sm:$0xf]
  %v79 = vld [vmem:[#allocation2 + $0x4] sm:$0xf]
  %v80 = vld [vmem:[%s3] sm:$0xff]
  %v81 = vld [vmem:[%s3 + $0x8] sm:$0xf]
  %v82 = vld [vmem:[%s3 + $0xc] sm:$0xff]
  %v83 = vld [vmem:[%s3 + $0x14] sm:$0xf]
  %v84 = vld [vmem:[%s3 + $0x18] sm:$0xff]
  %v85 = vld [vmem:[%s3 + $0x20] sm:$0xf]
  %v86 = vld [vmem:[%s3 + $0x24] sm:$0xff]
  %v87 = vld [vmem:[%s3 + $0x2c] sm:$0xf]
  %v88 = vld [vmem:[%s3 + $0x30] sm:$0xff]
  %v89 = vld [vmem:[%s3 + $0x38] sm:$0xf]
  %v90 = vld [vmem:[%s3 + $0x3c] sm:$0xff]
  %v91 = vld [vmem:[%s3 + $0x44] sm:$0xf]
  %v92 = vld [vmem:[%s3 + $0x48] sm:$0xff]
  %v93 = vld [vmem:[%s3 + $0x50] sm:$0xf]
  %v94 = vld [vmem:[%s3 + $0x54] sm:$0xff]
  %v95 = vld [vmem:[%s3 + $0x5c] sm:$0xf]
  %v96 = vld [vmem:[%s3 + $0x60] sm:$0xff]
  %v97 = vld [vmem:[%s3 + $0x68] sm:$0xf]
  %v98 = vld [vmem:[%s3 + $0x6c] sm:$0xff]
  %v99 = vld [vmem:[%s3 + $0x74] sm:$0xf]
  %v100 = vld [vmem:[%s3 + $0x78] sm:$0xff]
  %v101 = vld [vmem:[%s3 + $0x80] sm:$0xf]
  %v102 = vld [vmem:[%s3 + $0x84] sm:$0xff]
  %v103 = vld [vmem:[%s3 + $0x8c] sm:$0xf]
  %v104 = vld [vmem:[%s3 + $0x90] sm:$0xff]
  %v105 = vld [vmem:[%s3 + $0x98] sm:$0xf]
  %v106 = vld [vmem:[%s3 + $0x9c] sm:$0xff]
  %v107 = vld [vmem:[%s3 + $0xa4] sm:$0xf]
  %v108 = vld [vmem:[%s3 + $0xa8] sm:$0xff]
  %v109 = vld [vmem:[%s3 + $0xb0] sm:$0xf]
  %v110 = vld [vmem:[%s3 + $0xb4] sm:$0xff]
  %v111 = vld [vmem:[%s3 + $0xbc] sm:$0xf]
  %v112 = vld [vmem:[%s4] sm:$0x7]
  %v114 = vlaneseq
  %v115 = vshrl.u32 %v114, 7
  %v116 = vsub.s32 0, %v115
  %v117 = vrot.slane %v112, %v116
  %v118 = vlaneseq
  %v119 = vshrl.u32 %v118, 7
  %v120 = vsub.s32 1, %v119
  %v121 = vrot.slane %v112, %v120
  %v122 = vlaneseq
  %v123 = vshrl.u32 %v122, 7
  %v124 = vsub.s32 2, %v123
  %v125 = vrot.slane %v112, %v124
  %v131 = vunpack.c.l.b16 %v78
  %v132 = vunpack.c.l.b16 %v79
  %v133 = vpack.c.b16 %v132, %v131
  %v167 = vunpack.c.l.b16 %v80
  %v168 = vunpack.c.h.b16 %v80
  %v169 = vunpack.c.l.b16 %v81
  %v170 = vunpack.c.l.b16 %v82
  %v171 = vunpack.c.h.b16 %v82
  %v172 = vunpack.c.l.b16 %v83
  %v173 = vunpack.c.l.b16 %v84
  %v174 = vunpack.c.h.b16 %v84
  %v175 = vunpack.c.l.b16 %v85
  %v176 = vunpack.c.l.b16 %v86
  %v177 = vunpack.c.h.b16 %v86
  %v178 = vunpack.c.l.b16 %v87
  %v179 = vunpack.c.l.b16 %v88
  %v180 = vunpack.c.h.b16 %v88
  %v181 = vunpack.c.l.b16 %v89
  %v182 = vunpack.c.l.b16 %v90
  %v183 = vunpack.c.h.b16 %v90
  %v184 = vunpack.c.l.b16 %v91
  %v185 = vunpack.c.l.b16 %v92
  %v186 = vunpack.c.h.b16 %v92
  %v187 = vunpack.c.l.b16 %v93
  %v188 = vunpack.c.l.b16 %v94
  %v189 = vunpack.c.h.b16 %v94
  %v190 = vunpack.c.l.b16 %v95
  %v191 = vunpack.c.l.b16 %v96
  %v192 = vunpack.c.h.b16 %v96
  %v193 = vunpack.c.l.b16 %v97
  %v194 = vunpack.c.l.b16 %v98
  %v195 = vunpack.c.h.b16 %v98
  %v196 = vunpack.c.l.b16 %v99
  %v197 = vunpack.c.l.b16 %v100
  %v198 = vunpack.c.h.b16 %v100
  %v199 = vunpack.c.l.b16 %v101
  %v200 = vunpack.c.l.b16 %v102
  %v201 = vunpack.c.h.b16 %v102
  %v202 = vunpack.c.l.b16 %v103
  %v203 = vunpack.c.l.b16 %v104
  %v204 = vunpack.c.h.b16 %v104
  %v205 = vunpack.c.l.b16 %v105
  %v206 = vunpack.c.l.b16 %v106
  %v207 = vunpack.c.h.b16 %v106
  %v208 = vunpack.c.l.b16 %v107
  %v209 = vunpack.c.l.b16 %v108
  %v210 = vunpack.c.h.b16 %v108
  %v211 = vunpack.c.l.b16 %v109
  %v212 = vunpack.c.l.b16 %v110
  %v213 = vunpack.c.h.b16 %v110
  %v214 = vunpack.c.l.b16 %v111
  %v215 = vpack.c.b16 %v170, %v167
  %v216 = vpack.c.b16 %v171, %v168
  %v217 = vpack.c.b16 %v172, %v169
  %v218 = vpack.c.b16 %v176, %v173
  %v219 = vpack.c.b16 %v177, %v174
  %v220 = vpack.c.b16 %v178, %v175
  %v221 = vpack.c.b16 %v182, %v179
  %v222 = vpack.c.b16 %v183, %v180
  %v223 = vpack.c.b16 %v184, %v181
  %v224 = vpack.c.b16 %v188, %v185
  %v225 = vpack.c.b16 %v189, %v186
  %v226 = vpack.c.b16 %v190, %v187
  %v227 = vpack.c.b16 %v194, %v191
  %v228 = vpack.c.b16 %v195, %v192
  %v229 = vpack.c.b16 %v196, %v193
  %v230 = vpack.c.b16 %v200, %v197
  %v231 = vpack.c.b16 %v201, %v198
  %v232 = vpack.c.b16 %v202, %v199
  %v233 = vpack.c.b16 %v206, %v203
  %v234 = vpack.c.b16 %v207, %v204
  %v235 = vpack.c.b16 %v208, %v205
  %v236 = vpack.c.b16 %v212, %v209
  %v237 = vpack.c.b16 %v213, %v210
  %v238 = vpack.c.b16 %v214, %v211
  %263 = vmatprep.subr.bf16.mxu0 %v237
  %264 = vmatpush1.bf16.msra.mxu0 %v236
  %265 = vmatprep.subr.bf16.mxu0 %v234
  %266 = vmatpush1.bf16.msra.mxu0 %v233
  %267 = vmatprep.subr.bf16.mxu0 %v231
  %268 = vmatpush1.bf16.msra.mxu0 %v230
  %269 = vmatprep.subr.bf16.mxu0 %v228
  %270 = vmatpush1.bf16.msra.mxu0 %v227
  %271 = vmatprep.subr.bf16.mxu0 %v225
  %272 = vmatpush1.bf16.msra.mxu0 %v224
  %273 = vmatprep.subr.bf16.mxu0 %v222
  %274 = vmatpush1.bf16.msra.mxu0 %v221
  %275 = vmatprep.subr.bf16.mxu0 %v219
  %276 = vmatpush1.bf16.msra.mxu0 %v218
  %277 = vmatprep.subr.bf16.mxu0 %v216
  %278 = vmatpush1.bf16.msra.mxu0 %v215
  %279 = vmatprep.subr.bf16.mxu0 0
  %280 = vmatpush2.bf16.msra.mxu0 0
  %281 = vmatprep.subr.bf16.mxu0 0
  %282 = vmatpush2.bf16.msra.mxu0 0
  %283 = vmatprep.subr.bf16.mxu0 0
  %284 = vmatpush2.bf16.msra.mxu0 0
  %285 = vmatprep.subr.bf16.mxu0 0
  %286 = vmatpush2.bf16.msra.mxu0 0
  %287 = vmatprep.subr.bf16.mxu0 0
  %288 = vmatpush2.bf16.msra.mxu0 0
  %289 = vmatprep.subr.bf16.mxu0 0
  %290 = vmatpush2.bf16.msra.mxu0 0
  %291 = vmatprep.subr.bf16.mxu0 0
  %292 = vmatpush2.bf16.msra.mxu0 0
  %293 = vmatprep.subr.bf16.mxu0 0
  %294 = vmatpush2.bf16.msra.mxu0 0
  %295 = vmatprep.mubr.bf16.mxu0 0
  %296 = vmatmul.mubr.bf16.gmra.mxu0 %v133
  %v297 = vpop.f32.mrf.mxu0
  %v298 = vadd.f32 %v117, %v297
  %v299 = vpop.f32.mrf.mxu0
  %v300 = vadd.f32 %v121, %v299
  %v301 = vpop.f32.mrf.mxu0
  %v302 = vadd.f32 %v117, %v301
  %v303 = vpop.f32.mrf.mxu0
  %v304 = vadd.f32 %v121, %v303
  %305 = vdwg.mxu0
  %306 = vmatprep.subr.bf16.mxu0 0
  %307 = vmatpush1.bf16.msra.mxu0 %v238
  %308 = vmatprep.subr.bf16.mxu0 0
  %309 = vmatpush1.bf16.msra.mxu0 %v235
  %310 = vmatprep.subr.bf16.mxu0 0
  %311 = vmatpush1.bf16.msra.mxu0 %v232
  %312 = vmatprep.subr.bf16.mxu0 0
  %313 = vmatpush1.bf16.msra.mxu0 %v229
  %314 = vmatprep.subr.bf16.mxu0 0
  %315 = vmatpush1.bf16.msra.mxu0 %v226
  %316 = vmatprep.subr.bf16.mxu0 0
  %317 = vmatpush1.bf16.msra.mxu0 %v223
  %318 = vmatprep.subr.bf16.mxu0 0
  %319 = vmatpush1.bf16.msra.mxu0 %v220
  %320 = vmatprep.subr.bf16.mxu0 0
  %321 = vmatpush1.bf16.msra.mxu0 %v217
  %322 = vmatprep.subr.bf16.mxu0 0
  %323 = vmatpush2.bf16.msra.mxu0 0
  %324 = vmatprep.subr.bf16.mxu0 0
  %325 = vmatpush2.bf16.msra.mxu0 0
  %326 = vmatprep.subr.bf16.mxu0 0
  %327 = vmatpush2.bf16.msra.mxu0 0
  %328 = vmatprep.subr.bf16.mxu0 0
  %329 = vmatpush2.bf16.msra.mxu0 0
  %330 = vmatprep.subr.bf16.mxu0 0
  %331 = vmatpush2.bf16.msra.mxu0 0
  %332 = vmatprep.subr.bf16.mxu0 0
  %333 = vmatpush2.bf16.msra.mxu0 0
  %334 = vmatprep.subr.bf16.mxu0 0
  %335 = vmatpush2.bf16.msra.mxu0 0
  %336 = vmatprep.subr.bf16.mxu0 0
  %337 = vmatpush2.bf16.msra.mxu0 0
  %338 = vmatprep.mubr.bf16.mxu0 0
  %339 = vmatmul.mubr.bf16.gmra.mxu0 %v133
  %v340 = vpop.f32.mrf.mxu0
  %v341 = vadd.f32 %v125, %v340
  %v342 = vpop.f32.mrf.mxu0
  %v343 = vpop.f32.mrf.mxu0
  %v344 = vadd.f32 %v125, %v343
  %v345 = vpop.f32.mrf.mxu0
  %346 = vdwg.mxu0
  %v347 = vpack.c.bf16 %v302, %v298
  %v348 = vpack.c.bf16 %v304, %v300
  %v349 = vpack.c.bf16 %v344, %v341
  %v353 = vunpack.c.l.b16 %v347
  %v354 = vunpack.c.l.b16 %v348
  %v355 = vunpack.c.l.b16 %v349
  %v356 = vunpack.c.h.b16 %v347
  %v357 = vunpack.c.h.b16 %v348
  %v358 = vunpack.c.h.b16 %v349
  %v359 = vpack.c.b16 %v354, %v353
  %v360 = vpack.c.b16 %v355, %v355
  %v361 = vpack.c.b16 %v357, %v356
  %v362 = vpack.c.b16 %v358, %v358
  %367 = vst [vmem:[%s5] sm:$0xff] %v359
  %368 = vst [vmem:[%s5 + $0x8] sm:$0xf] %v360
  %369 = vst [vmem:[%s5 + $0xc] sm:$0xff] %v361
  %370 = vst [vmem:[%s5 + $0x14] sm:$0xf] %v362
  // Predicated region
  $region26: #{cross_attention_gpt2_forward.28} parent=0 // pred_check
    _
  $region27: #{cross_attention_gpt2_forward.28} parent=0 // pred_check_branch
    %372 = sbr.rel (0) target = $region29
  $region28: #{cross_attention_gpt2_forward.28} parent=0 // pred_region
    _
  $region29: #{cross_attention_gpt2_forward.28} parent=0 // pred_fallthru
    _
  // Predicated region
  $region30: #{cross_attention_gpt2_forward.28} parent=0 // pred_check
    _
  $region31: #{cross_attention_gpt2_forward.28} parent=0 // pred_check_branch
    %374 = sbr.rel (0) target = $region33
  $region32: #{cross_attention_gpt2_forward.28} parent=0 // pred_region
    _
  $region33: #{cross_attention_gpt2_forward.28} parent=0 // pred_fallthru
    _

// kernel: cross_attention_gpt2_forward.48
$region0: #{cross_attention_gpt2_forward.48}
  #allocation0 [shape = 'u32[]', space=smem, size = 0x4, offset = 0x4, fixed_abs, tag = 'smem constant byte address 0x4 - core index']
  #allocation1 [shape = 'u32[144,128]{1,0:T(1,128)}', space=vmem, size = 0x12000, scoped, tag = 'internal scratch']
  %s0 = inlined_call_operand.vmem [shape: f32[16,128], index: 0, kind: input, shape index: {}]
  %s1 = inlined_call_operand.vmem [shape: f32[1,128], index: 1, kind: input, shape index: {}]
  %s2 = inlined_call_operand.vmem [shape: f32[1,128], index: 2, kind: input, shape index: {}]
  %s3 = inlined_call_operand.vmem [shape: bf16[16,128], index: 3, kind: output, shape index: {}]
  %s4 = sld [smem:[#allocation0]]
  $region22: #{cross_attention_gpt2_forward.48} parent=0
    _
  %s6 = ssub.s32 1, %s4
  %s7 = scalar_select 0, %s6, %s4
  // Predicated region
  $region2: #{cross_attention_gpt2_forward.48} parent=0 // pred_check
    _
  $region3: #{cross_attention_gpt2_forward.48} parent=0 // pred_check_branch
    %9 = sbr.rel (0) target = $region5
  $region4: #{cross_attention_gpt2_forward.48} parent=0 // pred_region
    _
  $region5: #{cross_attention_gpt2_forward.48} parent=0 // pred_fallthru
    _
  // Predicated region
  $region6: #{cross_attention_gpt2_forward.48} parent=0 // pred_check
    _
  $region7: #{cross_attention_gpt2_forward.48} parent=0 // pred_check_branch
    %11 = sbr.rel (0) target = $region9
  $region8: #{cross_attention_gpt2_forward.48} parent=0 // pred_region
    _
  $region9: #{cross_attention_gpt2_forward.48} parent=0 // pred_fallthru
    _
  // Predicated region
  $region10: #{cross_attention_gpt2_forward.48} parent=0 // pred_check
    _
  $region11: #{cross_attention_gpt2_forward.48} parent=0 // pred_check_branch
    %13 = sbr.rel (0) target = $region13
  $region12: #{cross_attention_gpt2_forward.48} parent=0 // pred_region
    _
  $region13: #{cross_attention_gpt2_forward.48} parent=0 // pred_fallthru
    _
  %v14 = vld [vmem:[%s0] sm:$0xff]
  %v15 = vld [vmem:[%s0 + $0x8] sm:$0xff]
  %16 = vadd.xlane.f32.xlu0 %v14
  %v17 = vpop.xlane.xlu0 %16
  %18 = vadd.xlane.f32.xlu0 %v15
  %v19 = vpop.xlane.xlu0 %18
  %v20 = vrcp.pop 128.0
  %v21 = vmul.f32 %v17, %v20
  %v22 = vmul.f32 %v19, %v20
  %v23 = vsub.f32 %v14, %v21
  %v24 = vsub.f32 %v15, %v22
  %v25 = vmul.f32 %v23, %v23
  %v26 = vmul.f32 %v24, %v24
  %27 = vadd.xlane.f32.xlu0 %v25
  %v28 = vpop.xlane.xlu0 %27
  %29 = vadd.xlane.f32.xlu0 %v26
  %v30 = vpop.xlane.xlu0 %29
  %v31 = vmul.f32 %v28, %v20
  %v32 = vmul.f32 %v30, %v20
  %v33 = vadd.f32 %v31, 1e-05
  %v34 = vadd.f32 %v32, 1e-05
  %v35 = vrsqrt.pop %v33
  %v36 = vrsqrt.pop %v34
  %v37 = vmul.f32 %v23, %v35
  %v38 = vmul.f32 %v24, %v36
  %v39 = vld [vmem:[%s1] sm:$0x1]
  %v41 = vlaneseq
  %v42 = vshrl.u32 %v41, 7
  %v43 = vsub.s32 0, %v42
  %v44 = vrot.slane %v39, %v43
  %v46 = vmul.f32 %v37, %v44
  %v47 = vmul.f32 %v38, %v44
  %v48 = vld [vmem:[%s2] sm:$0x1]
  %v50 = vlaneseq
  %v51 = vshrl.u32 %v50, 7
  %v52 = vsub.s32 0, %v51
  %v53 = vrot.slane %v48, %v52
  %v55 = vadd.f32 %v46, %v53
  %v56 = vadd.f32 %v47, %v53
  %v57 = vpack.c.bf16 %v56, %v55
  %v59 = vunpack.c.l.b16 %v57
  %v60 = vunpack.c.h.b16 %v57
  %v61 = vpack.c.b16 %v59, %v59
  %v62 = vpack.c.b16 %v60, %v60
  %65 = vst [vmem:[%s3] sm:$0xf] %v61
  %66 = vst [vmem:[%s3 + $0x4] sm:$0xf] %v62
  // Predicated region
  $region14: #{cross_attention_gpt2_forward.48} parent=0 // pred_check
    _
  $region15: #{cross_attention_gpt2_forward.48} parent=0 // pred_check_branch
    %68 = sbr.rel (0) target = $region17
  $region16: #{cross_attention_gpt2_forward.48} parent=0 // pred_region
    _
  $region17: #{cross_attention_gpt2_forward.48} parent=0 // pred_fallthru
    _
  // Predicated region
  $region18: #{cross_attention_gpt2_forward.48} parent=0 // pred_check
    _
  $region19: #{cross_attention_gpt2_forward.48} parent=0 // pred_check_branch
    %70 = sbr.rel (0) target = $region21
  $region20: #{cross_attention_gpt2_forward.48} parent=0 // pred_region
    _
  $region21: #{cross_attention_gpt2_forward.48} parent=0 // pred_fallthru
    _

// kernel: cross_attention_gpt2_forward.32
$region0: #{cross_attention_gpt2_forward.32}
  #allocation0 [shape = 'u32[]', space=smem, size = 0x4, offset = 0x4, fixed_abs, tag = 'smem constant byte address 0x4 - core index']
  #allocation1 [shape = 'u32[144,128]{1,0:T(1,128)}', space=vmem, size = 0x12000, scoped, tag = 'internal scratch']
  #allocation2 [shape = 'bf16[16,128]{1,0:T(8,128)(2,1)}', space=vmem, size = 0x1000, scoped, tag = 'scratch operand']
  %s0 = inlined_call_operand.vmem [shape: f32[16,128], index: 0, kind: input, shape index: {}]
  %s1 = inlined_call_operand.vmem [shape: f32[1,128], index: 1, kind: input, shape index: {}]
  %s2 = inlined_call_operand.vmem [shape: f32[1,128], index: 2, kind: input, shape index: {}]
  %s3 = inlined_call_operand.vmem [shape: bf16[128,256], index: 3, kind: input, shape index: {}]
  %s4 = inlined_call_operand.vmem [shape: f32[1,256], index: 4, kind: input, shape index: {}]
  %s5 = inlined_call_operand.vmem [shape: bf16[16,256], index: 5, kind: output, shape index: {}]
  %s6 = sld [smem:[#allocation0]]
  $region34: #{cross_attention_gpt2_forward.32} parent=0
    _
  %s8 = ssub.s32 1, %s6
  %s9 = scalar_select 0, %s8, %s6
  // Predicated region
  $region2: #{cross_attention_gpt2_forward.32} parent=0 // pred_check
    _
  $region3: #{cross_attention_gpt2_forward.32} parent=0 // pred_check_branch
    %11 = sbr.rel (0) target = $region5
  $region4: #{cross_attention_gpt2_forward.32} parent=0 // pred_region
    _
  $region5: #{cross_attention_gpt2_forward.32} parent=0 // pred_fallthru
    _
  // Predicated region
  $region6: #{cross_attention_gpt2_forward.32} parent=0 // pred_check
    _
  $region7: #{cross_attention_gpt2_forward.32} parent=0 // pred_check_branch
    %13 = sbr.rel (0) target = $region9
  $region8: #{cross_attention_gpt2_forward.32} parent=0 // pred_region
    _
  $region9: #{cross_attention_gpt2_forward.32} parent=0 // pred_fallthru
    _
  // Predicated region
  $region10: #{cross_attention_gpt2_forward.32} parent=0 // pred_check
    _
  $region11: #{cross_attention_gpt2_forward.32} parent=0 // pred_check_branch
    %15 = sbr.rel (0) target = $region13
  $region12: #{cross_attention_gpt2_forward.32} parent=0 // pred_region
    _
  $region13: #{cross_attention_gpt2_forward.32} parent=0 // pred_fallthru
    _
  // Predicated region
  $region14: #{cross_attention_gpt2_forward.32} parent=0 // pred_check
    _
  $region15: #{cross_attention_gpt2_forward.32} parent=0 // pred_check_branch
    %17 = sbr.rel (0) target = $region17
  $region16: #{cross_attention_gpt2_forward.32} parent=0 // pred_region
    _
  $region17: #{cross_attention_gpt2_forward.32} parent=0 // pred_fallthru
    _
  // Predicated region
  $region18: #{cross_attention_gpt2_forward.32} parent=0 // pred_check
    _
  $region19: #{cross_attention_gpt2_forward.32} parent=0 // pred_check_branch
    %19 = sbr.rel (0) target = $region21
  $region20: #{cross_attention_gpt2_forward.32} parent=0 // pred_region
    _
  $region21: #{cross_attention_gpt2_forward.32} parent=0 // pred_fallthru
    _
  %p21 = scmp.eq.s32.totalorder 0, 0
  // Predicated region
  $region22: #{cross_attention_gpt2_forward.32} parent=0 // pred_check
    %p22 = pneg %p21
  $region23: #{cross_attention_gpt2_forward.32} parent=0 // pred_check_branch
    %24 = sbr.rel (%p22) target = $region25
  $region24: #{cross_attention_gpt2_forward.32} parent=0 // pred_region
    %v25 = vld [vmem:[%s0] sm:$0xff]
    %v26 = vld [vmem:[%s0 + $0x8] sm:$0xff]
    %27 = vadd.xlane.f32.xlu0 %v25
    %v28 = vpop.xlane.xlu0 %27
    %29 = vadd.xlane.f32.xlu0 %v26
    %v30 = vpop.xlane.xlu0 %29
    %v31 = vrcp.pop 128.0
    %v32 = vmul.f32 %v28, %v31
    %v33 = vmul.f32 %v30, %v31
    %v34 = vsub.f32 %v25, %v32
    %v35 = vsub.f32 %v26, %v33
    %v36 = vmul.f32 %v34, %v34
    %v37 = vmul.f32 %v35, %v35
    %38 = vadd.xlane.f32.xlu0 %v36
    %v39 = vpop.xlane.xlu0 %38
    %40 = vadd.xlane.f32.xlu0 %v37
    %v41 = vpop.xlane.xlu0 %40
    %v42 = vmul.f32 %v39, %v31
    %v43 = vmul.f32 %v41, %v31
    %v44 = vadd.f32 %v42, 1e-05
    %v45 = vadd.f32 %v43, 1e-05
    %v46 = vrsqrt.pop %v44
    %v47 = vrsqrt.pop %v45
    %v48 = vmul.f32 %v34, %v46
    %v49 = vmul.f32 %v35, %v47
    %v50 = vld [vmem:[%s1] sm:$0x1]
    %v52 = vlaneseq
    %v53 = vshrl.u32 %v52, 7
    %v54 = vsub.s32 0, %v53
    %v55 = vrot.slane %v50, %v54
    %v57 = vmul.f32 %v48, %v55
    %v58 = vmul.f32 %v49, %v55
    %v59 = vld [vmem:[%s2] sm:$0x1]
    %v61 = vlaneseq
    %v62 = vshrl.u32 %v61, 7
    %v63 = vsub.s32 0, %v62
    %v64 = vrot.slane %v59, %v63
    %v66 = vadd.f32 %v57, %v64
    %v67 = vadd.f32 %v58, %v64
    %v68 = vpack.c.bf16 %v67, %v66
    %v70 = vunpack.c.l.b16 %v68
    %v71 = vunpack.c.h.b16 %v68
    %v72 = vpack.c.b16 %v70, %v70
    %v73 = vpack.c.b16 %v71, %v71
    %76 = vst [vmem:[#allocation2] sm:$0xf] %v72
    %77 = vst [vmem:[#allocation2 + $0x4] sm:$0xf] %v73
  $region25: #{cross_attention_gpt2_forward.32} parent=0 // pred_fallthru
    _
  %v78 = vld [vmem:[#allocation2] sm:$0xf]
  %v79 = vld [vmem:[#allocation2 + $0x4] sm:$0xf]
  %v80 = vld [vmem:[%s3] sm:$0xff]
  %v81 = vld [vmem:[%s3 + $0x8] sm:$0xff]
  %v82 = vld [vmem:[%s3 + $0x10] sm:$0xff]
  %v83 = vld [vmem:[%s3 + $0x18] sm:$0xff]
  %v84 = vld [vmem:[%s3 + $0x20] sm:$0xff]
  %v85 = vld [vmem:[%s3 + $0x28] sm:$0xff]
  %v86 = vld [vmem:[%s3 + $0x30] sm:$0xff]
  %v87 = vld [vmem:[%s3 + $0x38] sm:$0xff]
  %v88 = vld [vmem:[%s3 + $0x40] sm:$0xff]
  %v89 = vld [vmem:[%s3 + $0x48] sm:$0xff]
  %v90 = vld [vmem:[%s3 + $0x50] sm:$0xff]
  %v91 = vld [vmem:[%s3 + $0x58] sm:$0xff]
  %v92 = vld [vmem:[%s3 + $0x60] sm:$0xff]
  %v93 = vld [vmem:[%s3 + $0x68] sm:$0xff]
  %v94 = vld [vmem:[%s3 + $0x70] sm:$0xff]
  %v95 = vld [vmem:[%s3 + $0x78] sm:$0xff]
  %v96 = vld [vmem:[%s4] sm:$0x3]
  %v98 = vlaneseq
  %v99 = vshrl.u32 %v98, 7
  %v100 = vsub.s32 0, %v99
  %v101 = vrot.slane %v96, %v100
  %v102 = vlaneseq
  %v103 = vshrl.u32 %v102, 7
  %v104 = vsub.s32 1, %v103
  %v105 = vrot.slane %v96, %v104
  %v110 = vunpack.c.l.b16 %v78
  %v111 = vunpack.c.l.b16 %v79
  %v112 = vpack.c.b16 %v111, %v110
  %v130 = vunpack.c.l.b16 %v80
  %v131 = vunpack.c.h.b16 %v80
  %v132 = vunpack.c.l.b16 %v81
  %v133 = vunpack.c.h.b16 %v81
  %v134 = vunpack.c.l.b16 %v82
  %v135 = vunpack.c.h.b16 %v82
  %v136 = vunpack.c.l.b16 %v83
  %v137 = vunpack.c.h.b16 %v83
  %v138 = vunpack.c.l.b16 %v84
  %v139 = vunpack.c.h.b16 %v84
  %v140 = vunpack.c.l.b16 %v85
  %v141 = vunpack.c.h.b16 %v85
  %v142 = vunpack.c.l.b16 %v86
  %v143 = vunpack.c.h.b16 %v86
  %v144 = vunpack.c.l.b16 %v87
  %v145 = vunpack.c.h.b16 %v87
  %v146 = vunpack.c.l.b16 %v88
  %v147 = vunpack.c.h.b16 %v88
  %v148 = vunpack.c.l.b16 %v89
  %v149 = vunpack.c.h.b16 %v89
  %v150 = vunpack.c.l.b16 %v90
  %v151 = vunpack.c.h.b16 %v90
  %v152 = vunpack.c.l.b16 %v91
  %v153 = vunpack.c.h.b16 %v91
  %v154 = vunpack.c.l.b16 %v92
  %v155 = vunpack.c.h.b16 %v92
  %v156 = vunpack.c.l.b16 %v93
  %v157 = vunpack.c.h.b16 %v93
  %v158 = vunpack.c.l.b16 %v94
  %v159 = vunpack.c.h.b16 %v94
  %v160 = vunpack.c.l.b16 %v95
  %v161 = vunpack.c.h.b16 %v95
  %v162 = vpack.c.b16 %v132, %v130
  %v163 = vpack.c.b16 %v133, %v131
  %v164 = vpack.c.b16 %v136, %v134
  %v165 = vpack.c.b16 %v137, %v135
  %v166 = vpack.c.b16 %v140, %v138
  %v167 = vpack.c.b16 %v141, %v139
  %v168 = vpack.c.b16 %v144, %v142
  %v169 = vpack.c.b16 %v145, %v143
  %v170 = vpack.c.b16 %v148, %v146
  %v171 = vpack.c.b16 %v149, %v147
  %v172 = vpack.c.b16 %v152, %v150
  %v173 = vpack.c.b16 %v153, %v151
  %v174 = vpack.c.b16 %v156, %v154
  %v175 = vpack.c.b16 %v157, %v155
  %v176 = vpack.c.b16 %v160, %v158
  %v177 = vpack.c.b16 %v161, %v159
  %194 = vmatprep.subr.bf16.mxu0 %v177
  %195 = vmatpush1.bf16.msra.mxu0 %v176
  %196 = vmatprep.subr.bf16.mxu0 %v175
  %197 = vmatpush1.bf16.msra.mxu0 %v174
  %198 = vmatprep.subr.bf16.mxu0 %v173
  %199 = vmatpush1.bf16.msra.mxu0 %v172
  %200 = vmatprep.subr.bf16.mxu0 %v171
  %201 = vmatpush1.bf16.msra.mxu0 %v170
  %202 = vmatprep.subr.bf16.mxu0 %v169
  %203 = vmatpush1.bf16.msra.mxu0 %v168
  %204 = vmatprep.subr.bf16.mxu0 %v167
  %205 = vmatpush1.bf16.msra.mxu0 %v166
  %206 = vmatprep.subr.bf16.mxu0 %v165
  %207 = vmatpush1.bf16.msra.mxu0 %v164
  %208 = vmatprep.subr.bf16.mxu0 %v163
  %209 = vmatpush1.bf16.msra.mxu0 %v162
  %210 = vmatprep.subr.bf16.mxu0 0
  %211 = vmatpush2.bf16.msra.mxu0 0
  %212 = vmatprep.subr.bf16.mxu0 0
  %213 = vmatpush2.bf16.msra.mxu0 0
  %214 = vmatprep.subr.bf16.mxu0 0
  %215 = vmatpush2.bf16.msra.mxu0 0
  %216 = vmatprep.subr.bf16.mxu0 0
  %217 = vmatpush2.bf16.msra.mxu0 0
  %218 = vmatprep.subr.bf16.mxu0 0
  %219 = vmatpush2.bf16.msra.mxu0 0
  %220 = vmatprep.subr.bf16.mxu0 0
  %221 = vmatpush2.bf16.msra.mxu0 0
  %222 = vmatprep.subr.bf16.mxu0 0
  %223 = vmatpush2.bf16.msra.mxu0 0
  %224 = vmatprep.subr.bf16.mxu0 0
  %225 = vmatpush2.bf16.msra.mxu0 0
  %226 = vmatprep.mubr.bf16.mxu0 0
  %227 = vmatmul.mubr.bf16.gmra.mxu0 %v112
  %v228 = vpop.f32.mrf.mxu0
  %v229 = vadd.f32 %v101, %v228
  %v230 = vpop.f32.mrf.mxu0
  %v231 = vadd.f32 %v105, %v230
  %v232 = vpop.f32.mrf.mxu0
  %v233 = vadd.f32 %v101, %v232
  %v234 = vpop.f32.mrf.mxu0
  %v235 = vadd.f32 %v105, %v234
  %236 = vdwg.mxu0
  %v237 = vpack.c.bf16 %v233, %v229
  %v238 = vpack.c.bf16 %v235, %v231
  %v241 = vunpack.c.l.b16 %v237
  %v242 = vunpack.c.l.b16 %v238
  %v243 = vunpack.c.h.b16 %v237
  %v244 = vunpack.c.h.b16 %v238
  %v245 = vpack.c.b16 %v242, %v241
  %v246 = vpack.c.b16 %v244, %v243
  %249 = vst [vmem:[%s5] sm:$0xff] %v245
  %250 = vst [vmem:[%s5 + $0x8] sm:$0xff] %v246
  // Predicated region
  $region26: #{cross_attention_gpt2_forward.32} parent=0 // pred_check
    _
  $region27: #{cross_attention_gpt2_forward.32} parent=0 // pred_check_branch
    %252 = sbr.rel (0) target = $region29
  $region28: #{cross_attention_gpt2_forward.32} parent=0 // pred_region
    _
  $region29: #{cross_attention_gpt2_forward.32} parent=0 // pred_fallthru
    _
  // Predicated region
  $region30: #{cross_attention_gpt2_forward.32} parent=0 // pred_check
    _
  $region31: #{cross_attention_gpt2_forward.32} parent=0 // pred_check_branch
    %254 = sbr.rel (0) target = $region33
  $region32: #{cross_attention_gpt2_forward.32} parent=0 // pred_region
    _
  $region33: #{cross_attention_gpt2_forward.32} parent=0 // pred_fallthru
    _

// kernel: cross_attention_gpt2_forward.36
$region0: #{cross_attention_gpt2_forward.36}
  #allocation0 [shape = 'u32[]', space=smem, size = 0x4, offset = 0x4, fixed_abs, tag = 'smem constant byte address 0x4 - core index']
  #allocation1 [shape = 'u32[144,128]{1,0:T(1,128)}', space=vmem, size = 0x12000, scoped, tag = 'internal scratch']
  #allocation2 [shape = 'bf16[16,128]{1,0:T(8,128)(2,1)}', space=vmem, size = 0x1000, scoped, tag = 'scratch operand']
  #allocation3 [shape = 'f32[16,128]{1,0:T(8,128)}', space=vmem, size = 0x2000, scoped, tag = 'scratch operand']
  %s0 = inlined_call_operand.vmem [shape: f32[16,128], index: 0, kind: input, shape index: {}, may-alias: {0,7}]
  %s1 = inlined_call_operand.vmem [shape: f32[1,128], index: 1, kind: input, shape index: {}]
  %s2 = inlined_call_operand.vmem [shape: f32[1,128], index: 2, kind: input, shape index: {}]
  %s3 = inlined_call_operand.vmem [shape: bf16[128,512], index: 3, kind: input, shape index: {}]
  %s4 = inlined_call_operand.vmem [shape: f32[1,512], index: 4, kind: input, shape index: {}]
  %s5 = inlined_call_operand.vmem [shape: bf16[512,128], index: 5, kind: input, shape index: {}]
  %s6 = inlined_call_operand.vmem [shape: f32[1,128], index: 6, kind: input, shape index: {}]
  %s7 = inlined_call_operand.vmem [shape: f32[16,128], index: 7, kind: input, shape index: {}, may-alias: {0,7}]
  %s8 = inlined_call_operand.vmem [shape: f32[16,128], index: 8, kind: output, shape index: {}]
  %s9 = sld [smem:[#allocation0]]
  $region50: #{cross_attention_gpt2_forward.36} parent=0
    _
  %s11 = ssub.s32 1, %s9
  %s12 = scalar_select 0, %s11, %s9
  // Predicated region
  $region2: #{cross_attention_gpt2_forward.36} parent=0 // pred_check
    _
  $region3: #{cross_attention_gpt2_forward.36} parent=0 // pred_check_branch
    %14 = sbr.rel (0) target = $region5
  $region4: #{cross_attention_gpt2_forward.36} parent=0 // pred_region
    _
  $region5: #{cross_attention_gpt2_forward.36} parent=0 // pred_fallthru
    _
  // Predicated region
  $region6: #{cross_attention_gpt2_forward.36} parent=0 // pred_check
    _
  $region7: #{cross_attention_gpt2_forward.36} parent=0 // pred_check_branch
    %16 = sbr.rel (0) target = $region9
  $region8: #{cross_attention_gpt2_forward.36} parent=0 // pred_region
    _
  $region9: #{cross_attention_gpt2_forward.36} parent=0 // pred_fallthru
    _
  // Predicated region
  $region10: #{cross_attention_gpt2_forward.36} parent=0 // pred_check
    _
  $region11: #{cross_attention_gpt2_forward.36} parent=0 // pred_check_branch
    %18 = sbr.rel (0) target = $region13
  $region12: #{cross_attention_gpt2_forward.36} parent=0 // pred_region
    _
  $region13: #{cross_attention_gpt2_forward.36} parent=0 // pred_fallthru
    _
  // Predicated region
  $region14: #{cross_attention_gpt2_forward.36} parent=0 // pred_check
    _
  $region15: #{cross_attention_gpt2_forward.36} parent=0 // pred_check_branch
    %20 = sbr.rel (0) target = $region17
  $region16: #{cross_attention_gpt2_forward.36} parent=0 // pred_region
    _
  $region17: #{cross_attention_gpt2_forward.36} parent=0 // pred_fallthru
    _
  // Predicated region
  $region18: #{cross_attention_gpt2_forward.36} parent=0 // pred_check
    _
  $region19: #{cross_attention_gpt2_forward.36} parent=0 // pred_check_branch
    %22 = sbr.rel (0) target = $region21
  $region20: #{cross_attention_gpt2_forward.36} parent=0 // pred_region
    _
  $region21: #{cross_attention_gpt2_forward.36} parent=0 // pred_fallthru
    _
  // Predicated region
  $region22: #{cross_attention_gpt2_forward.36} parent=0 // pred_check
    _
  $region23: #{cross_attention_gpt2_forward.36} parent=0 // pred_check_branch
    %24 = sbr.rel (0) target = $region25
  $region24: #{cross_attention_gpt2_forward.36} parent=0 // pred_region
    _
  $region25: #{cross_attention_gpt2_forward.36} parent=0 // pred_fallthru
    _
  // Predicated region
  $region26: #{cross_attention_gpt2_forward.36} parent=0 // pred_check
    _
  $region27: #{cross_attention_gpt2_forward.36} parent=0 // pred_check_branch
    %26 = sbr.rel (0) target = $region29
  $region28: #{cross_attention_gpt2_forward.36} parent=0 // pred_region
    _
  $region29: #{cross_attention_gpt2_forward.36} parent=0 // pred_fallthru
    _
  // Predicated region
  $region30: #{cross_attention_gpt2_forward.36} parent=0 // pred_check
    _
  $region31: #{cross_attention_gpt2_forward.36} parent=0 // pred_check_branch
    %28 = sbr.rel (0) target = $region33
  $region32: #{cross_attention_gpt2_forward.36} parent=0 // pred_region
    _
  $region33: #{cross_attention_gpt2_forward.36} parent=0 // pred_fallthru
    _
  %p30 = scmp.eq.s32.totalorder 0, 0
  // Predicated region
  $region34: #{cross_attention_gpt2_forward.36} parent=0 // pred_check
    %p31 = pneg %p30
  $region35: #{cross_attention_gpt2_forward.36} parent=0 // pred_check_branch
    %33 = sbr.rel (%p31) target = $region37
  $region36: #{cross_attention_gpt2_forward.36} parent=0 // pred_region
    %v34 = vld [vmem:[%s0] sm:$0xff]
    %v35 = vld [vmem:[%s0 + $0x8] sm:$0xff]
    %36 = vadd.xlane.f32.xlu0 %v34
    %v37 = vpop.xlane.xlu0 %36
    %38 = vadd.xlane.f32.xlu0 %v35
    %v39 = vpop.xlane.xlu0 %38
    %v40 = vrcp.pop 128.0
    %v41 = vmul.f32 %v37, %v40
    %v42 = vmul.f32 %v39, %v40
    %v43 = vsub.f32 %v34, %v41
    %v44 = vsub.f32 %v35, %v42
    %v45 = vmul.f32 %v43, %v43
    %v46 = vmul.f32 %v44, %v44
    %47 = vadd.xlane.f32.xlu0 %v45
    %v48 = vpop.xlane.xlu0 %47
    %49 = vadd.xlane.f32.xlu0 %v46
    %v50 = vpop.xlane.xlu0 %49
    %v51 = vmul.f32 %v48, %v40
    %v52 = vmul.f32 %v50, %v40
    %v53 = vadd.f32 %v51, 1e-05
    %v54 = vadd.f32 %v52, 1e-05
    %v55 = vrsqrt.pop %v53
    %v56 = vrsqrt.pop %v54
    %v57 = vmul.f32 %v43, %v55
    %v58 = vmul.f32 %v44, %v56
    %v59 = vld [vmem:[%s1] sm:$0x1]
    %v61 = vlaneseq
    %v62 = vshrl.u32 %v61, 7
    %v63 = vsub.s32 0, %v62
    %v64 = vrot.slane %v59, %v63
    %v66 = vmul.f32 %v57, %v64
    %v67 = vmul.f32 %v58, %v64
    %v68 = vld [vmem:[%s2] sm:$0x1]
    %v70 = vlaneseq
    %v71 = vshrl.u32 %v70, 7
    %v72 = vsub.s32 0, %v71
    %v73 = vrot.slane %v68, %v72
    %v75 = vadd.f32 %v66, %v73
    %v76 = vadd.f32 %v67, %v73
    %v77 = vpack.c.bf16 %v76, %v75
    %v79 = vunpack.c.l.b16 %v77
    %v80 = vunpack.c.h.b16 %v77
    %v81 = vpack.c.b16 %v79, %v79
    %v82 = vpack.c.b16 %v80, %v80
    %85 = vst [vmem:[#allocation2] sm:$0xf] %v81
    %86 = vst [vmem:[#allocation2 + $0x4] sm:$0xf] %v82
    %87 = vst [vmem:[#allocation3] sm:$0xff] 0.0
    %88 = vst [vmem:[#allocation3 + $0x8] sm:$0xff] 0.0
  $region37: #{cross_attention_gpt2_forward.36} parent=0 // pred_fallthru
    _
  %v89 = vld [vmem:[#allocation2] sm:$0xf]
  %v90 = vld [vmem:[#allocation2 + $0x4] sm:$0xf]
  %v91 = vld [vmem:[%s3] sm:$0xff]
  %v92 = vld [vmem:[%s3 + $0x8] sm:$0xff]
  %v93 = vld [vmem:[%s3 + $0x10] sm:$0xff]
  %v94 = vld [vmem:[%s3 + $0x18] sm:$0xff]
  %v95 = vld [vmem:[%s3 + $0x20] sm:$0xff]
  %v96 = vld [vmem:[%s3 + $0x28] sm:$0xff]
  %v97 = vld [vmem:[%s3 + $0x30] sm:$0xff]
  %v98 = vld [vmem:[%s3 + $0x38] sm:$0xff]
  %v99 = vld [vmem:[%s3 + $0x40] sm:$0xff]
  %v100 = vld [vmem:[%s3 + $0x48] sm:$0xff]
  %v101 = vld [vmem:[%s3 + $0x50] sm:$0xff]
  %v102 = vld [vmem:[%s3 + $0x58] sm:$0xff]
  %v103 = vld [vmem:[%s3 + $0x60] sm:$0xff]
  %v104 = vld [vmem:[%s3 + $0x68] sm:$0xff]
  %v105 = vld [vmem:[%s3 + $0x70] sm:$0xff]
  %v106 = vld [vmem:[%s3 + $0x78] sm:$0xff]
  %v107 = vld [vmem:[%s3 + $0x80] sm:$0xff]
  %v108 = vld [vmem:[%s3 + $0x88] sm:$0xff]
  %v109 = vld [vmem:[%s3 + $0x90] sm:$0xff]
  %v110 = vld [vmem:[%s3 + $0x98] sm:$0xff]
  %v111 = vld [vmem:[%s3 + $0xa0] sm:$0xff]
  %v112 = vld [vmem:[%s3 + $0xa8] sm:$0xff]
  %v113 = vld [vmem:[%s3 + $0xb0] sm:$0xff]
  %v114 = vld [vmem:[%s3 + $0xb8] sm:$0xff]
  %v115 = vld [vmem:[%s3 + $0xc0] sm:$0xff]
  %v116 = vld [vmem:[%s3 + $0xc8] sm:$0xff]
  %v117 = vld [vmem:[%s3 + $0xd0] sm:$0xff]
  %v118 = vld [vmem:[%s3 + $0xd8] sm:$0xff]
  %v119 = vld [vmem:[%s3 + $0xe0] sm:$0xff]
  %v120 = vld [vmem:[%s3 + $0xe8] sm:$0xff]
  %v121 = vld [vmem:[%s3 + $0xf0] sm:$0xff]
  %v122 = vld [vmem:[%s3 + $0xf8] sm:$0xff]
  %v123 = vld [vmem:[%s4] sm:$0xf]
  %v125 = vlaneseq
  %v126 = vshrl.u32 %v125, 7
  %v127 = vsub.s32 0, %v126
  %v128 = vrot.slane %v123, %v127
  %v129 = vlaneseq
  %v130 = vshrl.u32 %v129, 7
  %v131 = vsub.s32 1, %v130
  %v132 = vrot.slane %v123, %v131
  %v133 = vlaneseq
  %v134 = vshrl.u32 %v133, 7
  %v135 = vsub.s32 2, %v134
  %v136 = vrot.slane %v123, %v135
  %v137 = vlaneseq
  %v138 = vshrl.u32 %v137, 7
  %v139 = vsub.s32 3, %v138
  %v140 = vrot.slane %v123, %v139
  %v147 = vunpack.c.l.b16 %v89
  %v148 = vunpack.c.l.b16 %v90
  %v149 = vpack.c.b16 %v148, %v147
  %v183 = vunpack.c.l.b16 %v91
  %v184 = vunpack.c.h.b16 %v91
  %v185 = vunpack.c.l.b16 %v92
  %v186 = vunpack.c.h.b16 %v92
  %v187 = vunpack.c.l.b16 %v93
  %v188 = vunpack.c.h.b16 %v93
  %v189 = vunpack.c.l.b16 %v94
  %v190 = vunpack.c.h.b16 %v94
  %v191 = vunpack.c.l.b16 %v95
  %v192 = vunpack.c.h.b16 %v95
  %v193 = vunpack.c.l.b16 %v96
  %v194 = vunpack.c.h.b16 %v96
  %v195 = vunpack.c.l.b16 %v97
  %v196 = vunpack.c.h.b16 %v97
  %v197 = vunpack.c.l.b16 %v98
  %v198 = vunpack.c.h.b16 %v98
  %v199 = vunpack.c.l.b16 %v99
  %v200 = vunpack.c.h.b16 %v99
  %v201 = vunpack.c.l.b16 %v100
  %v202 = vunpack.c.h.b16 %v100
  %v203 = vunpack.c.l.b16 %v101
  %v204 = vunpack.c.h.b16 %v101
  %v205 = vunpack.c.l.b16 %v102
  %v206 = vunpack.c.h.b16 %v102
  %v207 = vunpack.c.l.b16 %v103
  %v208 = vunpack.c.h.b16 %v103
  %v209 = vunpack.c.l.b16 %v104
  %v210 = vunpack.c.h.b16 %v104
  %v211 = vunpack.c.l.b16 %v105
  %v212 = vunpack.c.h.b16 %v105
  %v213 = vunpack.c.l.b16 %v106
  %v214 = vunpack.c.h.b16 %v106
  %v215 = vunpack.c.l.b16 %v107
  %v216 = vunpack.c.h.b16 %v107
  %v217 = vunpack.c.l.b16 %v108
  %v218 = vunpack.c.h.b16 %v108
  %v219 = vunpack.c.l.b16 %v109
  %v220 = vunpack.c.h.b16 %v109
  %v221 = vunpack.c.l.b16 %v110
  %v222 = vunpack.c.h.b16 %v110
  %v223 = vunpack.c.l.b16 %v111
  %v224 = vunpack.c.h.b16 %v111
  %v225 = vunpack.c.l.b16 %v112
  %v226 = vunpack.c.h.b16 %v112
  %v227 = vunpack.c.l.b16 %v113
  %v228 = vunpack.c.h.b16 %v113
  %v229 = vunpack.c.l.b16 %v114
  %v230 = vunpack.c.h.b16 %v114
  %v231 = vunpack.c.l.b16 %v115
  %v232 = vunpack.c.h.b16 %v115
  %v233 = vunpack.c.l.b16 %v116
  %v234 = vunpack.c.h.b16 %v116
  %v235 = vunpack.c.l.b16 %v117
  %v236 = vunpack.c.h.b16 %v117
  %v237 = vunpack.c.l.b16 %v118
  %v238 = vunpack.c.h.b16 %v118
  %v239 = vunpack.c.l.b16 %v119
  %v240 = vunpack.c.h.b16 %v119
  %v241 = vunpack.c.l.b16 %v120
  %v242 = vunpack.c.h.b16 %v120
  %v243 = vunpack.c.l.b16 %v121
  %v244 = vunpack.c.h.b16 %v121
  %v245 = vunpack.c.l.b16 %v122
  %v246 = vunpack.c.h.b16 %v122
  %v247 = vpack.c.b16 %v187, %v183
  %v248 = vpack.c.b16 %v188, %v184
  %v249 = vpack.c.b16 %v189, %v185
  %v250 = vpack.c.b16 %v190, %v186
  %v251 = vpack.c.b16 %v195, %v191
  %v252 = vpack.c.b16 %v196, %v192
  %v253 = vpack.c.b16 %v197, %v193
  %v254 = vpack.c.b16 %v198, %v194
  %v255 = vpack.c.b16 %v203, %v199
  %v256 = vpack.c.b16 %v204, %v200
  %v257 = vpack.c.b16 %v205, %v201
  %v258 = vpack.c.b16 %v206, %v202
  %v259 = vpack.c.b16 %v211, %v207
  %v260 = vpack.c.b16 %v212, %v208
  %v261 = vpack.c.b16 %v213, %v209
  %v262 = vpack.c.b16 %v214, %v210
  %v263 = vpack.c.b16 %v219, %v215
  %v264 = vpack.c.b16 %v220, %v216
  %v265 = vpack.c.b16 %v221, %v217
  %v266 = vpack.c.b16 %v222, %v218
  %v267 = vpack.c.b16 %v227, %v223
  %v268 = vpack.c.b16 %v228, %v224
  %v269 = vpack.c.b16 %v229, %v225
  %v270 = vpack.c.b16 %v230, %v226
  %v271 = vpack.c.b16 %v235, %v231
  %v272 = vpack.c.b16 %v236, %v232
  %v273 = vpack.c.b16 %v237, %v233
  %v274 = vpack.c.b16 %v238, %v234
  %v275 = vpack.c.b16 %v243, %v239
  %v276 = vpack.c.b16 %v244, %v240
  %v277 = vpack.c.b16 %v245, %v241
  %v278 = vpack.c.b16 %v246, %v242
  %311 = vmatprep.subr.bf16.mxu0 %v276
  %312 = vmatpush1.bf16.msra.mxu0 %v275
  %313 = vmatprep.subr.bf16.mxu0 %v272
  %314 = vmatpush1.bf16.msra.mxu0 %v271
  %315 = vmatprep.subr.bf16.mxu0 %v268
  %316 = vmatpush1.bf16.msra.mxu0 %v267
  %317 = vmatprep.subr.bf16.mxu0 %v264
  %318 = vmatpush1.bf16.msra.mxu0 %v263
  %319 = vmatprep.subr.bf16.mxu0 %v260
  %320 = vmatpush1.bf16.msra.mxu0 %v259
  %321 = vmatprep.subr.bf16.mxu0 %v256
  %322 = vmatpush1.bf16.msra.mxu0 %v255
  %323 = vmatprep.subr.bf16.mxu0 %v252
  %324 = vmatpush1.bf16.msra.mxu0 %v251
  %325 = vmatprep.subr.bf16.mxu0 %v248
  %326 = vmatpush1.bf16.msra.mxu0 %v247
  %327 = vmatprep.subr.bf16.mxu0 0
  %328 = vmatpush2.bf16.msra.mxu0 0
  %329 = vmatprep.subr.bf16.mxu0 0
  %330 = vmatpush2.bf16.msra.mxu0 0
  %331 = vmatprep.subr.bf16.mxu0 0
  %332 = vmatpush2.bf16.msra.mxu0 0
  %333 = vmatprep.subr.bf16.mxu0 0
  %334 = vmatpush2.bf16.msra.mxu0 0
  %335 = vmatprep.subr.bf16.mxu0 0
  %336 = vmatpush2.bf16.msra.mxu0 0
  %337 = vmatprep.subr.bf16.mxu0 0
  %338 = vmatpush2.bf16.msra.mxu0 0
  %339 = vmatprep.subr.bf16.mxu0 0
  %340 = vmatpush2.bf16.msra.mxu0 0
  %341 = vmatprep.subr.bf16.mxu0 0
  %342 = vmatpush2.bf16.msra.mxu0 0
  %343 = vmatprep.mubr.bf16.mxu0 0
  %344 = vmatmul.mubr.bf16.gmra.mxu0 %v149
  %v345 = vpop.f32.mrf.mxu0
  %v346 = vadd.f32 %v128, %v345
  %v347 = vpop.f32.mrf.mxu0
  %v348 = vadd.f32 %v132, %v347
  %v349 = vpop.f32.mrf.mxu0
  %v350 = vadd.f32 %v128, %v349
  %v351 = vpop.f32.mrf.mxu0
  %v352 = vadd.f32 %v132, %v351
  %353 = vdwg.mxu0
  %354 = vmatprep.subr.bf16.mxu0 %v278
  %355 = vmatpush1.bf16.msra.mxu0 %v277
  %356 = vmatprep.subr.bf16.mxu0 %v274
  %357 = vmatpush1.bf16.msra.mxu0 %v273
  %358 = vmatprep.subr.bf16.mxu0 %v270
  %359 = vmatpush1.bf16.msra.mxu0 %v269
  %360 = vmatprep.subr.bf16.mxu0 %v266
  %361 = vmatpush1.bf16.msra.mxu0 %v265
  %362 = vmatprep.subr.bf16.mxu0 %v262
  %363 = vmatpush1.bf16.msra.mxu0 %v261
  %364 = vmatprep.subr.bf16.mxu0 %v258
  %365 = vmatpush1.bf16.msra.mxu0 %v257
  %366 = vmatprep.subr.bf16.mxu0 %v254
  %367 = vmatpush1.bf16.msra.mxu0 %v253
  %368 = vmatprep.subr.bf16.mxu0 %v250
  %369 = vmatpush1.bf16.msra.mxu0 %v249
  %370 = vmatprep.subr.bf16.mxu0 0
  %371 = vmatpush2.bf16.msra.mxu0 0
  %372 = vmatprep.subr.bf16.mxu0 0
  %373 = vmatpush2.bf16.msra.mxu0 0
  %374 = vmatprep.subr.bf16.mxu0 0
  %375 = vmatpush2.bf16.msra.mxu0 0
  %376 = vmatprep.subr.bf16.mxu0 0
  %377 = vmatpush2.bf16.msra.mxu0 0
  %378 = vmatprep.subr.bf16.mxu0 0
  %379 = vmatpush2.bf16.msra.mxu0 0
  %380 = vmatprep.subr.bf16.mxu0 0
  %381 = vmatpush2.bf16.msra.mxu0 0
  %382 = vmatprep.subr.bf16.mxu0 0
  %383 = vmatpush2.bf16.msra.mxu0 0
  %384 = vmatprep.subr.bf16.mxu0 0
  %385 = vmatpush2.bf16.msra.mxu0 0
  %386 = vmatprep.mubr.bf16.mxu0 0
  %387 = vmatmul.mubr.bf16.gmra.mxu0 %v149
  %v388 = vpop.f32.mrf.mxu0
  %v389 = vadd.f32 %v136, %v388
  %v390 = vpop.f32.mrf.mxu0
  %v391 = vadd.f32 %v140, %v390
  %v392 = vpop.f32.mrf.mxu0
  %v393 = vadd.f32 %v136, %v392
  %v394 = vpop.f32.mrf.mxu0
  %v395 = vadd.f32 %v140, %v394
  %396 = vdwg.mxu0
  %v397 = vmul.f32 %v346, 0.5
  %v398 = vmul.f32 %v348, 0.5
  %v399 = vmul.f32 %v389, 0.5
  %v400 = vmul.f32 %v391, 0.5
  %v401 = vmul.f32 %v350, 0.5
  %v402 = vmul.f32 %v352, 0.5
  %v403 = vmul.f32 %v393, 0.5
  %v404 = vmul.f32 %v395, 0.5
  %v405 = vmul.f32 %v346, 0.044715
  %v406 = vmul.f32 %v348, 0.044715
  %v407 = vmul.f32 %v389, 0.044715
  %v408 = vmul.f32 %v391, 0.044715
  %v409 = vmul.f32 %v350, 0.044715
  %v410 = vmul.f32 %v352, 0.044715
  %v411 = vmul.f32 %v393, 0.044715
  %v412 = vmul.f32 %v395, 0.044715
  %v413 = vmul.f32 %v405, %v346
  %v414 = vmul.f32 %v406, %v348
  %v415 = vmul.f32 %v407, %v389
  %v416 = vmul.f32 %v408, %v391
  %v417 = vmul.f32 %v409, %v350
  %v418 = vmul.f32 %v410, %v352
  %v419 = vmul.f32 %v411, %v393
  %v420 = vmul.f32 %v412, %v395
  %v421 = vmul.f32 %v413, %v346
  %v422 = vmul.f32 %v414, %v348
  %v423 = vmul.f32 %v415, %v389
  %v424 = vmul.f32 %v416, %v391
  %v425 = vmul.f32 %v417, %v350
  %v426 = vmul.f32 %v418, %v352
  %v427 = vmul.f32 %v419, %v393
  %v428 = vmul.f32 %v420, %v395
  %v429 = vadd.f32 %v346, %v421
  %v430 = vadd.f32 %v348, %v422
  %v431 = vadd.f32 %v389, %v423
  %v432 = vadd.f32 %v391, %v424
  %v433 = vadd.f32 %v350, %v425
  %v434 = vadd.f32 %v352, %v426
  %v435 = vadd.f32 %v393, %v427
  %v436 = vadd.f32 %v395, %v428
  %v437 = vmul.f32 %v429, 0.7978846
  %v438 = vmul.f32 %v430, 0.7978846
  %v439 = vmul.f32 %v431, 0.7978846
  %v440 = vmul.f32 %v432, 0.7978846
  %v441 = vmul.f32 %v433, 0.7978846
  %v442 = vmul.f32 %v434, 0.7978846
  %v443 = vmul.f32 %v435, 0.7978846
  %v444 = vmul.f32 %v436, 0.7978846
  %v445 = vtanh.pop %v437
  %v446 = vtanh.pop %v438
  %v447 = vtanh.pop %v439
  %v448 = vtanh.pop %v440
  %v449 = vtanh.pop %v441
  %v450 = vtanh.pop %v442
  %v451 = vtanh.pop %v443
  %v452 = vtanh.pop %v444
  %v453 = vadd.f32 %v445, 1.0
  %v454 = vadd.f32 %v446, 1.0
  %v455 = vadd.f32 %v447, 1.0
  %v456 = vadd.f32 %v448, 1.0
  %v457 = vadd.f32 %v449, 1.0
  %v458 = vadd.f32 %v450, 1.0
  %v459 = vadd.f32 %v451, 1.0
  %v460 = vadd.f32 %v452, 1.0
  %v461 = vmul.f32 %v397, %v453
  %v462 = vmul.f32 %v398, %v454
  %v463 = vmul.f32 %v399, %v455
  %v464 = vmul.f32 %v400, %v456
  %v465 = vmul.f32 %v401, %v457
  %v466 = vmul.f32 %v402, %v458
  %v467 = vmul.f32 %v403, %v459
  %v468 = vmul.f32 %v404, %v460
  %v469 = vld [vmem:[#allocation3] sm:$0xff]
  %v470 = vld [vmem:[#allocation3 + $0x8] sm:$0xff]
  %v471 = vpack.c.bf16 %v465, %v461
  %v472 = vpack.c.bf16 %v466, %v462
  %v473 = vpack.c.bf16 %v467, %v463
  %v474 = vpack.c.bf16 %v468, %v464
  %v475 = vld [vmem:[%s5] sm:$0xf]
  %v476 = vld [vmem:[%s5 + $0x4] sm:$0xf]
  %v477 = vld [vmem:[%s5 + $0x8] sm:$0xf]
  %v478 = vld [vmem:[%s5 + $0xc] sm:$0xf]
  %v479 = vld [vmem:[%s5 + $0x10] sm:$0xf]
  %v480 = vld [vmem:[%s5 + $0x14] sm:$0xf]
  %v481 = vld [vmem:[%s5 + $0x18] sm:$0xf]
  %v482 = vld [vmem:[%s5 + $0x1c] sm:$0xf]
  %v483 = vld [vmem:[%s5 + $0x20] sm:$0xf]
  %v484 = vld [vmem:[%s5 + $0x24] sm:$0xf]
  %v485 = vld [vmem:[%s5 + $0x28] sm:$0xf]
  %v486 = vld [vmem:[%s5 + $0x2c] sm:$0xf]
  %v487 = vld [vmem:[%s5 + $0x30] sm:$0xf]
  %v488 = vld [vmem:[%s5 + $0x34] sm:$0xf]
  %v489 = vld [vmem:[%s5 + $0x38] sm:$0xf]
  %v490 = vld [vmem:[%s5 + $0x3c] sm:$0xf]
  %v491 = vld [vmem:[%s5 + $0x40] sm:$0xf]
  %v492 = vld [vmem:[%s5 + $0x44] sm:$0xf]
  %v493 = vld [vmem:[%s5 + $0x48] sm:$0xf]
  %v494 = vld [vmem:[%s5 + $0x4c] sm:$0xf]
  %v495 = vld [vmem:[%s5 + $0x50] sm:$0xf]
  %v496 = vld [vmem:[%s5 + $0x54] sm:$0xf]
  %v497 = vld [vmem:[%s5 + $0x58] sm:$0xf]
  %v498 = vld [vmem:[%s5 + $0x5c] sm:$0xf]
  %v499 = vld [vmem:[%s5 + $0x60] sm:$0xf]
  %v500 = vld [vmem:[%s5 + $0x64] sm:$0xf]
  %v501 = vld [vmem:[%s5 + $0x68] sm:$0xf]
  %v502 = vld [vmem:[%s5 + $0x6c] sm:$0xf]
  %v503 = vld [vmem:[%s5 + $0x70] sm:$0xf]
  %v504 = vld [vmem:[%s5 + $0x74] sm:$0xf]
  %v505 = vld [vmem:[%s5 + $0x78] sm:$0xf]
  %v506 = vld [vmem:[%s5 + $0x7c] sm:$0xf]
  %v507 = vld [vmem:[%s5 + $0x80] sm:$0xf]
  %v508 = vld [vmem:[%s5 + $0x84] sm:$0xf]
  %v509 = vld [vmem:[%s5 + $0x88] sm:$0xf]
  %v510 = vld [vmem:[%s5 + $0x8c] sm:$0xf]
  %v511 = vld [vmem:[%s5 + $0x90] sm:$0xf]
  %v512 = vld [vmem:[%s5 + $0x94] sm:$0xf]
  %v513 = vld [vmem:[%s5 + $0x98] sm:$0xf]
  %v514 = vld [vmem:[%s5 + $0x9c] sm:$0xf]
  %v515 = vld [vmem:[%s5 + $0xa0] sm:$0xf]
  %v516 = vld [vmem:[%s5 + $0xa4] sm:$0xf]
  %v517 = vld [vmem:[%s5 + $0xa8] sm:$0xf]
  %v518 = vld [vmem:[%s5 + $0xac] sm:$0xf]
  %v519 = vld [vmem:[%s5 + $0xb0] sm:$0xf]
  %v520 = vld [vmem:[%s5 + $0xb4] sm:$0xf]
  %v521 = vld [vmem:[%s5 + $0xb8] sm:$0xf]
  %v522 = vld [vmem:[%s5 + $0xbc] sm:$0xf]
  %v523 = vld [vmem:[%s5 + $0xc0] sm:$0xf]
  %v524 = vld [vmem:[%s5 + $0xc4] sm:$0xf]
  %v525 = vld [vmem:[%s5 + $0xc8] sm:$0xf]
  %v526 = vld [vmem:[%s5 + $0xcc] sm:$0xf]
  %v527 = vld [vmem:[%s5 + $0xd0] sm:$0xf]
  %v528 = vld [vmem:[%s5 + $0xd4] sm:$0xf]
  %v529 = vld [vmem:[%s5 + $0xd8] sm:$0xf]
  %v530 = vld [vmem:[%s5 + $0xdc] sm:$0xf]
  %v531 = vld [vmem:[%s5 + $0xe0] sm:$0xf]
  %v532 = vld [vmem:[%s5 + $0xe4] sm:$0xf]
  %v533 = vld [vmem:[%s5 + $0xe8] sm:$0xf]
  %v534 = vld [vmem:[%s5 + $0xec] sm:$0xf]
  %v535 = vld [vmem:[%s5 + $0xf0] sm:$0xf]
  %v536 = vld [vmem:[%s5 + $0xf4] sm:$0xf]
  %v537 = vld [vmem:[%s5 + $0xf8] sm:$0xf]
  %v538 = vld [vmem:[%s5 + $0xfc] sm:$0xf]
  %v603 = vunpack.c.l.b16 %v475
  %v604 = vunpack.c.l.b16 %v476
  %v605 = vunpack.c.l.b16 %v477
  %v606 = vunpack.c.l.b16 %v478
  %v607 = vunpack.c.l.b16 %v479
  %v608 = vunpack.c.l.b16 %v480
  %v609 = vunpack.c.l.b16 %v481
  %v610 = vunpack.c.l.b16 %v482
  %v611 = vunpack.c.l.b16 %v483
  %v612 = vunpack.c.l.b16 %v484
  %v613 = vunpack.c.l.b16 %v485
  %v614 = vunpack.c.l.b16 %v486
  %v615 = vunpack.c.l.b16 %v487
  %v616 = vunpack.c.l.b16 %v488
  %v617 = vunpack.c.l.b16 %v489
  %v618 = vunpack.c.l.b16 %v490
  %v619 = vunpack.c.l.b16 %v491
  %v620 = vunpack.c.l.b16 %v492
  %v621 = vunpack.c.l.b16 %v493
  %v622 = vunpack.c.l.b16 %v494
  %v623 = vunpack.c.l.b16 %v495
  %v624 = vunpack.c.l.b16 %v496
  %v625 = vunpack.c.l.b16 %v497
  %v626 = vunpack.c.l.b16 %v498
  %v627 = vunpack.c.l.b16 %v499
  %v628 = vunpack.c.l.b16 %v500
  %v629 = vunpack.c.l.b16 %v501
  %v630 = vunpack.c.l.b16 %v502
  %v631 = vunpack.c.l.b16 %v503
  %v632 = vunpack.c.l.b16 %v504
  %v633 = vunpack.c.l.b16 %v505
  %v634 = vunpack.c.l.b16 %v506
  %v635 = vunpack.c.l.b16 %v507
  %v636 = vunpack.c.l.b16 %v508
  %v637 = vunpack.c.l.b16 %v509
  %v638 = vunpack.c.l.b16 %v510
  %v639 = vunpack.c.l.b16 %v511
  %v640 = vunpack.c.l.b16 %v512
  %v641 = vunpack.c.l.b16 %v513
  %v642 = vunpack.c.l.b16 %v514
  %v643 = vunpack.c.l.b16 %v515
  %v644 = vunpack.c.l.b16 %v516
  %v645 = vunpack.c.l.b16 %v517
  %v646 = vunpack.c.l.b16 %v518
  %v647 = vunpack.c.l.b16 %v519
  %v648 = vunpack.c.l.b16 %v520
  %v649 = vunpack.c.l.b16 %v521
  %v650 = vunpack.c.l.b16 %v522
  %v651 = vunpack.c.l.b16 %v523
  %v652 = vunpack.c.l.b16 %v524
  %v653 = vunpack.c.l.b16 %v525
  %v654 = vunpack.c.l.b16 %v526
  %v655 = vunpack.c.l.b16 %v527
  %v656 = vunpack.c.l.b16 %v528
  %v657 = vunpack.c.l.b16 %v529
  %v658 = vunpack.c.l.b16 %v530
  %v659 = vunpack.c.l.b16 %v531
  %v660 = vunpack.c.l.b16 %v532
  %v661 = vunpack.c.l.b16 %v533
  %v662 = vunpack.c.l.b16 %v534
  %v663 = vunpack.c.l.b16 %v535
  %v664 = vunpack.c.l.b16 %v536
  %v665 = vunpack.c.l.b16 %v537
  %v666 = vunpack.c.l.b16 %v538
  %v667 = vpack.c.b16 %v604, %v603
  %v668 = vpack.c.b16 %v606, %v605
  %v669 = vpack.c.b16 %v608, %v607
  %v670 = vpack.c.b16 %v610, %v609
  %v671 = vpack.c.b16 %v612, %v611
  %v672 = vpack.c.b16 %v614, %v613
  %v673 = vpack.c.b16 %v616, %v615
  %v674 = vpack.c.b16 %v618, %v617
  %v675 = vpack.c.b16 %v620, %v619
  %v676 = vpack.c.b16 %v622, %v621
  %v677 = vpack.c.b16 %v624, %v623
  %v678 = vpack.c.b16 %v626, %v625
  %v679 = vpack.c.b16 %v628, %v627
  %v680 = vpack.c.b16 %v630, %v629
  %v681 = vpack.c.b16 %v632, %v631
  %v682 = vpack.c.b16 %v634, %v633
  %v683 = vpack.c.b16 %v636, %v635
  %v684 = vpack.c.b16 %v638, %v637
  %v685 = vpack.c.b16 %v640, %v639
  %v686 = vpack.c.b16 %v642, %v641
  %v687 = vpack.c.b16 %v644, %v643
  %v688 = vpack.c.b16 %v646, %v645
  %v689 = vpack.c.b16 %v648, %v647
  %v690 = vpack.c.b16 %v650, %v649
  %v691 = vpack.c.b16 %v652, %v651
  %v692 = vpack.c.b16 %v654, %v653
  %v693 = vpack.c.b16 %v656, %v655
  %v694 = vpack.c.b16 %v658, %v657
  %v695 = vpack.c.b16 %v660, %v659
  %v696 = vpack.c.b16 %v662, %v661
  %v697 = vpack.c.b16 %v664, %v663
  %v698 = vpack.c.b16 %v666, %v665
  %731 = vmatprep.subr.bf16.mxu0 0
  %732 = vmatpush1.bf16.msra.mxu0 %v674
  %733 = vmatprep.subr.bf16.mxu0 0
  %734 = vmatpush1.bf16.msra.mxu0 %v673
  %735 = vmatprep.subr.bf16.mxu0 0
  %736 = vmatpush1.bf16.msra.mxu0 %v672
  %737 = vmatprep.subr.bf16.mxu0 0
  %738 = vmatpush1.bf16.msra.mxu0 %v671
  %739 = vmatprep.subr.bf16.mxu0 0
  %740 = vmatpush1.bf16.msra.mxu0 %v670
  %741 = vmatprep.subr.bf16.mxu0 0
  %742 = vmatpush1.bf16.msra.mxu0 %v669
  %743 = vmatprep.subr.bf16.mxu0 0
  %744 = vmatpush1.bf16.msra.mxu0 %v668
  %745 = vmatprep.subr.bf16.mxu0 0
  %746 = vmatpush1.bf16.msra.mxu0 %v667
  %747 = vmatprep.subr.bf16.mxu0 0
  %748 = vmatpush2.bf16.msra.mxu0 %v682
  %749 = vmatprep.subr.bf16.mxu0 0
  %750 = vmatpush2.bf16.msra.mxu0 %v681
  %751 = vmatprep.subr.bf16.mxu0 0
  %752 = vmatpush2.bf16.msra.mxu0 %v680
  %753 = vmatprep.subr.bf16.mxu0 0
  %754 = vmatpush2.bf16.msra.mxu0 %v679
  %755 = vmatprep.subr.bf16.mxu0 0
  %756 = vmatpush2.bf16.msra.mxu0 %v678
  %757 = vmatprep.subr.bf16.mxu0 0
  %758 = vmatpush2.bf16.msra.mxu0 %v677
  %759 = vmatprep.subr.bf16.mxu0 0
  %760 = vmatpush2.bf16.msra.mxu0 %v676
  %761 = vmatprep.subr.bf16.mxu0 0
  %762 = vmatpush2.bf16.msra.mxu0 %v675
  %763 = vmatprep.mubr.bf16.mxu0 %v472
  %764 = vmatmul.mubr.bf16.gmra.mxu0 %v471
  %v765 = vpop.f32.mrf.mxu0
  %v766 = vadd.f32 0.0, %v765
  %v767 = vpop.f32.mrf.mxu0
  %v768 = vpop.f32.mrf.mxu0
  %v769 = vadd.f32 0.0, %v768
  %v770 = vpop.f32.mrf.mxu0
  %771 = vdwg.mxu0
  %772 = vmatprep.subr.bf16.mxu0 0
  %773 = vmatpush1.bf16.msra.mxu0 %v690
  %774 = vmatprep.subr.bf16.mxu0 0
  %775 = vmatpush1.bf16.msra.mxu0 %v689
  %776 = vmatprep.subr.bf16.mxu0 0
  %777 = vmatpush1.bf16.msra.mxu0 %v688
  %778 = vmatprep.subr.bf16.mxu0 0
  %779 = vmatpush1.bf16.msra.mxu0 %v687
  %780 = vmatprep.subr.bf16.mxu0 0
  %781 = vmatpush1.bf16.msra.mxu0 %v686
  %782 = vmatprep.subr.bf16.mxu0 0
  %783 = vmatpush1.bf16.msra.mxu0 %v685
  %784 = vmatprep.subr.bf16.mxu0 0
  %785 = vmatpush1.bf16.msra.mxu0 %v684
  %786 = vmatprep.subr.bf16.mxu0 0
  %787 = vmatpush1.bf16.msra.mxu0 %v683
  %788 = vmatprep.subr.bf16.mxu0 0
  %789 = vmatpush2.bf16.msra.mxu0 %v698
  %790 = vmatprep.subr.bf16.mxu0 0
  %791 = vmatpush2.bf16.msra.mxu0 %v697
  %792 = vmatprep.subr.bf16.mxu0 0
  %793 = vmatpush2.bf16.msra.mxu0 %v696
  %794 = vmatprep.subr.bf16.mxu0 0
  %795 = vmatpush2.bf16.msra.mxu0 %v695
  %796 = vmatprep.subr.bf16.mxu0 0
  %797 = vmatpush2.bf16.msra.mxu0 %v694
  %798 = vmatprep.subr.bf16.mxu0 0
  %799 = vmatpush2.bf16.msra.mxu0 %v693
  %800 = vmatprep.subr.bf16.mxu0 0
  %801 = vmatpush2.bf16.msra.mxu0 %v692
  %802 = vmatprep.subr.bf16.mxu0 0
  %803 = vmatpush2.bf16.msra.mxu0 %v691
  %804 = vmatprep.mubr.bf16.mxu0 %v474
  %805 = vmatmul.mubr.bf16.gmra.mxu0 %v473
  %v806 = vpop.f32.mrf.mxu0
  %v807 = vadd.f32 %v766, %v806
  %v808 = vpop.f32.mrf.mxu0
  %v809 = vpop.f32.mrf.mxu0
  %v810 = vadd.f32 %v769, %v809
  %v811 = vpop.f32.mrf.mxu0
  %812 = vdwg.mxu0
  %v813 = vadd.f32 %v469, %v807
  %v814 = vadd.f32 %v470, %v810
  %815 = vst [vmem:[#allocation3] sm:$0xff] %v813
  %816 = vst [vmem:[#allocation3 + $0x8] sm:$0xff] %v814
  // Predicated region
  $region38: #{cross_attention_gpt2_forward.36} parent=0 // pred_check
    %p817 = pneg %p30
  $region39: #{cross_attention_gpt2_forward.36} parent=0 // pred_check_branch
    %819 = sbr.rel (%p817) target = $region41
  $region40: #{cross_attention_gpt2_forward.36} parent=0 // pred_region
    %v820 = vld [vmem:[#allocation3] sm:$0xff]
    %v821 = vld [vmem:[#allocation3 + $0x8] sm:$0xff]
    %v822 = vld [vmem:[%s6] sm:$0x1]
    %v824 = vlaneseq
    %v825 = vshrl.u32 %v824, 7
    %v826 = vsub.s32 0, %v825
    %v827 = vrot.slane %v822, %v826
    %v829 = vadd.f32 %v820, %v827
    %v830 = vadd.f32 %v821, %v827
    %v831 = vld [vmem:[%s7] sm:$0xff]
    %v832 = vld [vmem:[%s7 + $0x8] sm:$0xff]
    %v833 = vadd.f32 %v829, %v831
    %v834 = vadd.f32 %v830, %v832
    %835 = vst [vmem:[%s8] sm:$0xff] %v833
    %836 = vst [vmem:[%s8 + $0x8] sm:$0xff] %v834
  $region41: #{cross_attention_gpt2_forward.36} parent=0 // pred_fallthru
    _
  // Predicated region
  $region42: #{cross_attention_gpt2_forward.36} parent=0 // pred_check
    _
  $region43: #{cross_attention_gpt2_forward.36} parent=0 // pred_check_branch
    %838 = sbr.rel (0) target = $region45
  $region44: #{cross_attention_gpt2_forward.36} parent=0 // pred_region
    _
  $region45: #{cross_attention_gpt2_forward.36} parent=0 // pred_fallthru
    _
  // Predicated region
  $region46: #{cross_attention_gpt2_forward.36} parent=0 // pred_check
    _
  $region47: #{cross_attention_gpt2_forward.36} parent=0 // pred_check_branch
    %840 = sbr.rel (0) target = $region49
  $region48: #{cross_attention_gpt2_forward.36} parent=0 // pred_region
    _
  $region49: #{cross_attention_gpt2_forward.36} parent=0 // pred_fallthru
    _

// kernel: cross_attention_gpt2_forward.33
$region0: #{cross_attention_gpt2_forward.33}
  #allocation0 [shape = 'u32[]', space=smem, size = 0x4, offset = 0x4, fixed_abs, tag = 'smem constant byte address 0x4 - core index']
  #allocation1 [shape = 'u32[144,128]{1,0:T(1,128)}', space=vmem, size = 0x12000, scoped, tag = 'internal scratch']
  %s0 = inlined_call_operand.vmem [shape: bf16[2,8,128], index: 0, kind: input, shape index: {}]
  %s1 = inlined_call_operand.vmem [shape: bf16[2,8,256], index: 1, kind: input, shape index: {}, may-alias: {1,2}]
  %s2 = inlined_call_operand.vmem [shape: bf16[2,8,256], index: 2, kind: input, shape index: {}, may-alias: {1,2}]
  %s3 = inlined_call_operand.vmem [shape: f32[2,1,8], index: 3, kind: input, shape index: {}]
  %s4 = inlined_call_operand.vmem [shape: bf16[2,8,128], index: 4, kind: output, shape index: {}]
  %s5 = sld [smem:[#allocation0]]
  $region49: #{cross_attention_gpt2_forward.33} parent=0
    _
  %s7 = ssub.s32 1, %s5
  %s8 = scalar_select 0, %s7, %s5
  loop: start=0, step=1, limit=4
  $region2: #{cross_attention_gpt2_forward.33} parent=0 // loop_pre_header
    _
  $region3: #{cross_attention_gpt2_forward.33} parent=0 // loop_header
    %s10 = sphi 0, %s14
    %p11 = scmp.ge.s32.totalorder %s10, 4
    %s17 = sphi 0, %s36
    %s18 = sphi 0, %s32
    %s19 = sphi 0, %s28
    %s20 = sphi 0, %s17
    %s21 = sphi 0, %s18
    %s22 = sphi 0, %s19
    %s23 = sphi 0, %s20
    %s24 = sphi 0, %s21
    %s25 = sphi 0, %s22
    %s43 = sphi 0, %s45
    %s46 = sphi 0, %s43
    %s47 = sphi 0, %s46
    %s63 = sphi 0, %s47
    %s71 = sphi 0, %s73
    %s74 = sphi 0, %s71
    %s75 = sphi 0, %s74
    %s91 = sphi 0, %s75
    %s101 = sphi 0, %s103
    %s104 = sphi 0, %s101
    %s105 = sphi 0, %s104
    %s121 = sphi 0, %s105
    %s127 = sphi 0, %s129
    %s130 = sphi 0, %s127
    %s131 = sphi 0, %s130
    %s147 = sphi 0, %s131
    %s157 = sphi 0, %s159
    %s160 = sphi 0, %s157
    %s161 = sphi 0, %s160
    %s177 = sphi 0, %s161
  $region4: #{cross_attention_gpt2_forward.33} parent=0 // loop_header_branch
    %13 = sbr.rel (%p11) target = $region8
  $region5: #{cross_attention_gpt2_forward.33} parent=0 // loop_body
    %s15 = ssub.s32 %s10, 1
    %s16 = ssub.s32 %s10, 2
    %s26 = sadd.s32 1, %s19
    %p27 = scmp.ge.s32.totalorder %s26, 1
    %s28 = scalar_select %p27, 0, %s26
    %s29 = sadd.s32 1, %s18
    %s30 = scalar_select %p27, %s29, %s18
    %p31 = scmp.ge.s32.totalorder %s30, 1
    %s32 = scalar_select %p31, 0, %s30
    %s33 = sadd.s32 1, %s17
    %s34 = scalar_select %p31, %s33, %s17
    %p35 = scmp.ge.s32.totalorder %s34, 2
    %s36 = scalar_select %p35, 0, %s34
    %s37 = ssub.s32 %s17, %s36
    %s38 = ssub.s32 %s19, %s28
    %s39 = sor.u32 %s37, %s38
    %s40 = ssub.s32 %s18, %s32
    %s41 = sor.u32 %s39, %s40
    %p42 = scmp.eq.s32.totalorder %s41, 0
    %s44 = sadd.s32 %s43, 1
    %s45 = scalar_select %p42, %s43, %s44
    %p48 = pneg %p42
    %p49 = scmp.eq.s32.totalorder %s10, 1
    %p50 = por %p48, %p49
    %p51 = scmp.ne.s32.totalorder %s43, %s46
    %p52 = scmp.eq.s32.totalorder %s10, 0
    %p53 = por %p51, %p52
    %p54 = scmp.ne.s32.totalorder %s43, %s46
    %p55 = scmp.eq.s32.totalorder %s15, 1
    %p56 = por %p54, %p55
    %p57 = scmp.ne.s32.totalorder %s46, %s47
    %p58 = scmp.eq.s32.totalorder %s15, 0
    %p59 = por %p57, %p58
    %p60 = scmp.ne.s32.totalorder %s46, %s47
    %p61 = scmp.eq.s32.totalorder %s16, 1
    %p62 = por %p60, %p61
    %p64 = scmp.ne.s32.totalorder %s47, %s63
    %p65 = scmp.eq.s32.totalorder %s16, 0
    %p66 = por %p64, %p65
    %s67 = ssub.s32 %s17, %s36
    %s68 = ssub.s32 %s18, %s32
    %s69 = sor.u32 %s67, %s68
    %p70 = scmp.eq.s32.totalorder %s69, 0
    %s72 = sadd.s32 %s71, 1
    %s73 = scalar_select %p70, %s71, %s72
    %p76 = pneg %p70
    %p77 = scmp.eq.s32.totalorder %s10, 1
    %p78 = por %p76, %p77
    %p79 = scmp.ne.s32.totalorder %s71, %s74
    %p80 = scmp.eq.s32.totalorder %s10, 0
    %p81 = por %p79, %p80
    %p82 = scmp.ne.s32.totalorder %s71, %s74
    %p83 = scmp.eq.s32.totalorder %s15, 1
    %p84 = por %p82, %p83
    %p85 = scmp.ne.s32.totalorder %s74, %s75
    %p86 = scmp.eq.s32.totalorder %s15, 0
    %p87 = por %p85, %p86
    %p88 = scmp.ne.s32.totalorder %s74, %s75
    %p89 = scmp.eq.s32.totalorder %s16, 1
    %p90 = por %p88, %p89
    %p92 = scmp.ne.s32.totalorder %s75, %s91
    %p93 = scmp.eq.s32.totalorder %s16, 0
    %p94 = por %p92, %p93
    %s95 = sadd.s32 %s18, 1
    %s96 = sadd.s32 %s32, 1
    %s97 = ssub.s32 %s17, %s36
    %s98 = ssub.s32 %s95, %s96
    %s99 = sor.u32 %s97, %s98
    %p100 = scmp.eq.s32.totalorder %s99, 0
    %s102 = sadd.s32 %s101, 1
    %s103 = scalar_select %p100, %s101, %s102
    %p106 = pneg %p100
    %p107 = scmp.eq.s32.totalorder %s10, 1
    %p108 = por %p106, %p107
    %p109 = scmp.ne.s32.totalorder %s101, %s104
    %p110 = scmp.eq.s32.totalorder %s10, 0
    %p111 = por %p109, %p110
    %p112 = scmp.ne.s32.totalorder %s101, %s104
    %p113 = scmp.eq.s32.totalorder %s15, 1
    %p114 = por %p112, %p113
    %p115 = scmp.ne.s32.totalorder %s104, %s105
    %p116 = scmp.eq.s32.totalorder %s15, 0
    %p117 = por %p115, %p116
    %p118 = scmp.ne.s32.totalorder %s104, %s105
    %p119 = scmp.eq.s32.totalorder %s16, 1
    %p120 = por %p118, %p119
    %p122 = scmp.ne.s32.totalorder %s105, %s121
    %p123 = scmp.eq.s32.totalorder %s16, 0
    %p124 = por %p122, %p123
    %s125 = ssub.s32 %s17, %s36
    %p126 = scmp.eq.s32.totalorder %s125, 0
    %s128 = sadd.s32 %s127, 1
    %s129 = scalar_select %p126, %s127, %s128
    %p132 = pneg %p126
    %p133 = scmp.eq.s32.totalorder %s10, 1
    %p134 = por %p132, %p133
    %p135 = scmp.ne.s32.totalorder %s127, %s130
    %p136 = scmp.eq.s32.totalorder %s10, 0
    %p137 = por %p135, %p136
    %p138 = scmp.ne.s32.totalorder %s127, %s130
    %p139 = scmp.eq.s32.totalorder %s15, 1
    %p140 = por %p138, %p139
    %p141 = scmp.ne.s32.totalorder %s130, %s131
    %p142 = scmp.eq.s32.totalorder %s15, 0
    %p143 = por %p141, %p142
    %p144 = scmp.ne.s32.totalorder %s130, %s131
    %p145 = scmp.eq.s32.totalorder %s16, 1
    %p146 = por %p144, %p145
    %p148 = scmp.ne.s32.totalorder %s131, %s147
    %p149 = scmp.eq.s32.totalorder %s16, 0
    %p150 = por %p148, %p149
    %s151 = ssub.s32 %s17, %s36
    %s152 = ssub.s32 %s19, %s28
    %s153 = sor.u32 %s151, %s152
    %s154 = ssub.s32 %s18, %s32
    %s155 = sor.u32 %s153, %s154
    %p156 = scmp.eq.s32.totalorder %s155, 0
    %s158 = sadd.s32 %s157, 1
    %s159 = scalar_select %p156, %s157, %s158
    %p162 = pneg %p156
    %p163 = scmp.eq.s32.totalorder %s10, 1
    %p164 = por %p162, %p163
    %p165 = scmp.ne.s32.totalorder %s157, %s160
    %p166 = scmp.eq.s32.totalorder %s10, 0
    %p167 = por %p165, %p166
    %p168 = scmp.ne.s32.totalorder %s157, %s160
    %p169 = scmp.eq.s32.totalorder %s15, 1
    %p170 = por %p168, %p169
    %p171 = scmp.ne.s32.totalorder %s160, %s161
    %p172 = scmp.eq.s32.totalorder %s15, 0
    %p173 = por %p171, %p172
    %p174 = scmp.ne.s32.totalorder %s160, %s161
    %p175 = scmp.eq.s32.totalorder %s16, 1
    %p176 = por %p174, %p175
    %p178 = scmp.ne.s32.totalorder %s161, %s177
    %p179 = scmp.eq.s32.totalorder %s16, 0
    %p180 = por %p178, %p179
    %p181 = scmp.le.s32.totalorder 1, %s10
    %p182 = scmp.lt.s32.totalorder %s10, 3
    %p183 = pnand %p181, %p182
    %p184 = pneg %p183
    // Predicated region
    $region9: #{cross_attention_gpt2_forward.33} parent=5 // pred_check
      _
    $region10: #{cross_attention_gpt2_forward.33} parent=5 // pred_check_branch
      %186 = sbr.rel (%p183) target = $region12
    $region11: #{cross_attention_gpt2_forward.33} parent=5 // pred_region
      %s187 = ssub.s32 %s10, 1
    $region12: #{cross_attention_gpt2_forward.33} parent=5 // pred_fallthru
      _
    %p188 = scmp.lt.s32.totalorder %s10, 2
    // Predicated region
    $region13: #{cross_attention_gpt2_forward.33} parent=5 // pred_check
      %p189 = pneg %p188
    $region14: #{cross_attention_gpt2_forward.33} parent=5 // pred_check_branch
      %191 = sbr.rel (%p189) target = $region16
    $region15: #{cross_attention_gpt2_forward.33} parent=5 // pred_region
      // Predicated region
      $region17: #{cross_attention_gpt2_forward.33} parent=15 // pred_check
        %p192 = pneg %p53
      $region18: #{cross_attention_gpt2_forward.33} parent=15 // pred_check_branch
        %194 = sbr.rel (%p192) target = $region20
      $region19: #{cross_attention_gpt2_forward.33} parent=15 // pred_region
        %p195 = scmp.lt.s32.totalorder %s17, 1
        %s196 = scalar_select %p195, %s17, 1
        %p197 = scmp.lt.s32.totalorder %s19, 0
        %s198 = scalar_select %p197, %s19, 0
        %p199 = scmp.lt.s32.totalorder %s18, 0
        %s200 = scalar_select %p199, %s18, 0
        %s201 = sadd.s32 %s200, %s198
        %s202 = sadd.s32 %s201, %s196
        %s203 = smul.addr %s202, 4
        %s204 = scalar_lea.vmem %s0, %s203
      $region20: #{cross_attention_gpt2_forward.33} parent=15 // pred_fallthru
        _
      // Predicated region
      $region21: #{cross_attention_gpt2_forward.33} parent=15 // pred_check
        %p205 = pneg %p81
      $region22: #{cross_attention_gpt2_forward.33} parent=15 // pred_check_branch
        %207 = sbr.rel (%p205) target = $region24
      $region23: #{cross_attention_gpt2_forward.33} parent=15 // pred_region
        %p208 = scmp.lt.s32.totalorder %s17, 1
        %s209 = scalar_select %p208, %s17, 1
        %p210 = scmp.lt.s32.totalorder %s18, 1
        %s211 = scalar_select %p210, %s18, 1
        %s212 = smul.addr %s209, 2
        %s213 = sadd.s32 %s211, %s212
        %s214 = smul.addr %s213, 4
        %s215 = scalar_lea.vmem %s1, %s214
      $region24: #{cross_attention_gpt2_forward.33} parent=15 // pred_fallthru
        _
      // Predicated region
      $region25: #{cross_attention_gpt2_forward.33} parent=15 // pred_check
        %p216 = pneg %p111
      $region26: #{cross_attention_gpt2_forward.33} parent=15 // pred_check_branch
        %218 = sbr.rel (%p216) target = $region28
      $region27: #{cross_attention_gpt2_forward.33} parent=15 // pred_region
        %s219 = sadd.s32 %s18, 1
        %p220 = scmp.lt.s32.totalorder %s17, 1
        %s221 = scalar_select %p220, %s17, 1
        %p222 = scmp.lt.s32.totalorder %s219, 1
        %s223 = scalar_select %p222, %s219, 1
        %s224 = smul.addr %s221, 2
        %s225 = sadd.s32 %s223, %s224
        %s226 = smul.addr %s225, 4
        %s227 = scalar_lea.vmem %s2, %s226
        %s228 = sadd.s32 %s18, 1
      $region28: #{cross_attention_gpt2_forward.33} parent=15 // pred_fallthru
        _
      // Predicated region
      $region29: #{cross_attention_gpt2_forward.33} parent=15 // pred_check
        %p229 = pneg %p137
      $region30: #{cross_attention_gpt2_forward.33} parent=15 // pred_check_branch
        %231 = sbr.rel (%p229) target = $region32
      $region31: #{cross_attention_gpt2_forward.33} parent=15 // pred_region
        %p232 = scmp.lt.s32.totalorder %s17, 1
        %s233 = scalar_select %p232, %s17, 1
        %s234 = scalar_lea.vmem %s3, %s233
      $region32: #{cross_attention_gpt2_forward.33} parent=15 // pred_fallthru
        _
    $region16: #{cross_attention_gpt2_forward.33} parent=5 // pred_fallthru
      _
    %p235 = scmp.le.s32.totalorder 1, %s10
    %p236 = scmp.lt.s32.totalorder %s10, 3
    %p237 = pnand %p235, %p236
    %p238 = pneg %p237
    // Predicated region
    $region33: #{cross_attention_gpt2_forward.33} parent=5 // pred_check
      _
    $region34: #{cross_attention_gpt2_forward.33} parent=5 // pred_check_branch
      %240 = sbr.rel (%p237) target = $region36
    $region35: #{cross_attention_gpt2_forward.33} parent=5 // pred_region
      %s241 = ssub.s32 %s10, 1
      %p242 = scmp.lt.s32.totalorder %s20, 1
      %s243 = scalar_select %p242, %s20, 1
      %p244 = scmp.lt.s32.totalorder %s22, 0
      %s245 = scalar_select %p244, %s22, 0
      %p246 = scmp.lt.s32.totalorder %s21, 0
      %s247 = scalar_select %p246, %s21, 0
      %s248 = sadd.s32 %s247, %s245
      %s249 = sadd.s32 %s248, %s243
      %s250 = smul.addr %s249, 4
      %s251 = scalar_lea.vmem %s0, %s250
      %p252 = pneg %p59
      %p253 = pneg %p56
      %p254 = scmp.lt.s32.totalorder %s20, 1
      %s255 = scalar_select %p254, %s20, 1
      %p256 = scmp.lt.s32.totalorder %s21, 1
      %s257 = scalar_select %p256, %s21, 1
      %s258 = smul.addr %s255, 2
      %s259 = sadd.s32 %s257, %s258
      %s260 = smul.addr %s259, 4
      %s261 = scalar_lea.vmem %s1, %s260
      %p262 = pneg %p87
      %p263 = pneg %p84
      %s264 = sadd.s32 %s21, 1
      %p265 = scmp.lt.s32.totalorder %s20, 1
      %s266 = scalar_select %p265, %s20, 1
      %p267 = scmp.lt.s32.totalorder %s264, 1
      %s268 = scalar_select %p267, %s264, 1
      %s269 = smul.addr %s266, 2
      %s270 = sadd.s32 %s268, %s269
      %s271 = smul.addr %s270, 4
      %s272 = scalar_lea.vmem %s2, %s271
      %p273 = pneg %p117
      %p274 = pneg %p114
      %p275 = scmp.lt.s32.totalorder %s20, 1
      %s276 = scalar_select %p275, %s20, 1
      %s277 = scalar_lea.vmem %s3, %s276
      %p278 = pneg %p143
      %p279 = pneg %p140
      %p280 = pneg %p173
      %p281 = pneg %p170
      %p282 = scmp.lt.s32.totalorder %s20, 1
      %s283 = scalar_select %p282, %s20, 1
      %p284 = scmp.lt.s32.totalorder %s22, 0
      %s285 = scalar_select %p284, %s22, 0
      %p286 = scmp.lt.s32.totalorder %s21, 0
      %s287 = scalar_select %p286, %s21, 0
      %s288 = sadd.s32 %s287, %s285
      %s289 = sadd.s32 %s288, %s283
      %s290 = smul.addr %s289, 4
      %s291 = scalar_lea.vmem %s4, %s290
      %p292 = scmp.lt.s32.totalorder %s20, 1
      %s293 = scalar_select %p292, %s20, 1
      %p294 = scmp.lt.s32.totalorder %s22, 0
      %s295 = scalar_select %p294, %s22, 0
      %p296 = scmp.lt.s32.totalorder %s21, 0
      %s297 = scalar_select %p296, %s21, 0
      %s298 = sadd.s32 %s297, %s295
      %s299 = sadd.s32 %s298, %s293
      %s300 = smul.addr %s299, 4
      %s301 = scalar_lea.vmem %s0, %s300
      %p302 = scmp.lt.s32.totalorder %s20, 1
      %s303 = scalar_select %p302, %s20, 1
      %p304 = scmp.lt.s32.totalorder %s21, 1
      %s305 = scalar_select %p304, %s21, 1
      %s306 = smul.addr %s303, 2
      %s307 = sadd.s32 %s305, %s306
      %s308 = smul.addr %s307, 4
      %s309 = scalar_lea.vmem %s1, %s308
      %s310 = sadd.s32 %s21, 1
      %p311 = scmp.lt.s32.totalorder %s20, 1
      %s312 = scalar_select %p311, %s20, 1
      %p313 = scmp.lt.s32.totalorder %s310, 1
      %s314 = scalar_select %p313, %s310, 1
      %s315 = smul.addr %s312, 2
      %s316 = sadd.s32 %s314, %s315
      %s317 = smul.addr %s316, 4
      %s318 = scalar_lea.vmem %s2, %s317
      %s319 = sadd.s32 %s21, 1
      %p320 = scmp.lt.s32.totalorder %s20, 1
      %s321 = scalar_select %p320, %s20, 1
      %s322 = scalar_lea.vmem %s3, %s321
      %p323 = scmp.lt.s32.totalorder %s20, 1
      %s324 = scalar_select %p323, %s20, 1
      %p325 = scmp.lt.s32.totalorder %s22, 0
      %s326 = scalar_select %p325, %s22, 0
      %p327 = scmp.lt.s32.totalorder %s21, 0
      %s328 = scalar_select %p327, %s21, 0
      %s329 = sadd.s32 %s328, %s326
      %s330 = sadd.s32 %s329, %s324
      %s331 = smul.addr %s330, 4
      %s332 = scalar_lea.vmem %s4, %s331
      %v334 = vld [vmem:[%s301] sm:$0xf]
      %v335 = vld [vmem:[%s309] sm:$0xf]
      %v336 = vld [vmem:[%s318] sm:$0xf]
      %v337 = vld [vmem:[%s322] sm:$0x1]
      %vm338 = vcmask 523264
      %v340 = vsel %vm338, %v334, 0
      %v343 = vsel %vm338, %v335, 0
      %345 = vmatprep.subr.bf16.mxu0 0
      %346 = vmatpush1.bf16.xpose.msra.mxu0 0
      %347 = vmatprep.subr.bf16.mxu0 0
      %348 = vmatpush1.bf16.xpose.msra.mxu0 0
      %349 = vmatprep.subr.bf16.mxu0 0
      %350 = vmatpush1.bf16.xpose.msra.mxu0 0
      %351 = vmatprep.subr.bf16.mxu0 0
      %352 = vmatpush1.bf16.xpose.msra.mxu0 0
      %353 = vmatprep.subr.bf16.mxu0 0
      %354 = vmatpush1.bf16.xpose.msra.mxu0 0
      %355 = vmatprep.subr.bf16.mxu0 0
      %356 = vmatpush1.bf16.xpose.msra.mxu0 0
      %357 = vmatprep.subr.bf16.mxu0 0
      %358 = vmatpush1.bf16.xpose.msra.mxu0 0
      %359 = vmatprep.subr.bf16.mxu0 0
      %360 = vmatpush1.bf16.xpose.msra.mxu0 %v343
      %361 = vmatprep.subr.bf16.mxu0 0
      %362 = vmatpush2.bf16.xpose.msra.mxu0 0
      %363 = vmatprep.subr.bf16.mxu0 0
      %364 = vmatpush2.bf16.xpose.msra.mxu0 0
      %365 = vmatprep.subr.bf16.mxu0 0
      %366 = vmatpush2.bf16.xpose.msra.mxu0 0
      %367 = vmatprep.subr.bf16.mxu0 0
      %368 = vmatpush2.bf16.xpose.msra.mxu0 0
      %369 = vmatprep.subr.bf16.mxu0 0
      %370 = vmatpush2.bf16.xpose.msra.mxu0 0
      %371 = vmatprep.subr.bf16.mxu0 0
      %372 = vmatpush2.bf16.xpose.msra.mxu0 0
      %373 = vmatprep.subr.bf16.mxu0 0
      %374 = vmatpush2.bf16.xpose.msra.mxu0 0
      %375 = vmatprep.subr.bf16.mxu0 0
      %376 = vmatpush2.bf16.xpose.msra.mxu0 0
      %377 = vmatprep.mubr.bf16.mxu0 0
      %378 = vmatmul.mubr.bf16.gmra.mxu0 %v340
      %v379 = vpop.f32.mrf.mxu0
      %v380 = vadd.f32 0.0, %v379
      %v381 = vpop.f32.mrf.mxu0
      %v382 = vpop.f32.mrf.mxu0
      %v383 = vpop.f32.mrf.mxu0
      %384 = vdwg.mxu0
      %v385 = vmul.f32 %v380, 0.125
      %v387 = vlaneseq
      %v388 = vshrl.u32 %v387, 7
      %v389 = vsub.s32 0, %v388
      %v390 = vrot.slane %v337, %v389
      %v392 = vadd.f32 %v385, %v390
      %vm393 = vcmask 64512
      %v394 = vsel %vm393, %v392, -inf
      %395 = vmax.xlane.f32.xlu0 %v394
      %v396 = vpop.xlane.xlu0 %395
      %v397 = vsub.f32 %v392, %v396
      %v398 = vmul.f32 %v397, 1.442695
      %v399 = vpow.pop %v398
      %v400 = vsel %vm393, %v399, 0.0
      %401 = vadd.xlane.f32.xlu0 %v400
      %v402 = vpop.xlane.xlu0 %401
      %v403 = vrcp.pop %v402
      %v404 = vpack.c.bf16 %v399, %v399
      %v406 = vsel %vm393, %v404, 0
      %vm408 = vcmask 1043456
      %v410 = vsel %vm408, %v336, 0
      %412 = vmatprep.subr.bf16.mxu0 0
      %413 = vmatpush1.bf16.msra.mxu0 0
      %414 = vmatprep.subr.bf16.mxu0 0
      %415 = vmatpush1.bf16.msra.mxu0 0
      %416 = vmatprep.subr.bf16.mxu0 0
      %417 = vmatpush1.bf16.msra.mxu0 0
      %418 = vmatprep.subr.bf16.mxu0 0
      %419 = vmatpush1.bf16.msra.mxu0 0
      %420 = vmatprep.subr.bf16.mxu0 0
      %421 = vmatpush1.bf16.msra.mxu0 0
      %422 = vmatprep.subr.bf16.mxu0 0
      %423 = vmatpush1.bf16.msra.mxu0 0
      %424 = vmatprep.subr.bf16.mxu0 0
      %425 = vmatpush1.bf16.msra.mxu0 0
      %426 = vmatprep.subr.bf16.mxu0 0
      %427 = vmatpush1.bf16.msra.mxu0 %v410
      %428 = vmatprep.subr.bf16.mxu0 0
      %429 = vmatpush2.bf16.msra.mxu0 0
      %430 = vmatprep.subr.bf16.mxu0 0
      %431 = vmatpush2.bf16.msra.mxu0 0
      %432 = vmatprep.subr.bf16.mxu0 0
      %433 = vmatpush2.bf16.msra.mxu0 0
      %434 = vmatprep.subr.bf16.mxu0 0
      %435 = vmatpush2.bf16.msra.mxu0 0
      %436 = vmatprep.subr.bf16.mxu0 0
      %437 = vmatpush2.bf16.msra.mxu0 0
      %438 = vmatprep.subr.bf16.mxu0 0
      %439 = vmatpush2.bf16.msra.mxu0 0
      %440 = vmatprep.subr.bf16.mxu0 0
      %441 = vmatpush2.bf16.msra.mxu0 0
      %442 = vmatprep.subr.bf16.mxu0 0
      %443 = vmatpush2.bf16.msra.mxu0 0
      %444 = vmatprep.mubr.bf16.mxu0 0
      %445 = vmatmul.mubr.bf16.gmra.mxu0 %v406
      %v446 = vpop.f32.mrf.mxu0
      %v447 = vadd.f32 0.0, %v446
      %v448 = vpop.f32.mrf.mxu0
      %v449 = vpop.f32.mrf.mxu0
      %v450 = vpop.f32.mrf.mxu0
      %451 = vdwg.mxu0
      %v452 = vmul.f32 %v447, %v403
      %v454 = vunpack.c.l.b16 %v334
      %v455 = vpack.c.b16 %v454, %v454
      %456 = vrot.lane.b32.xlu0 %v455, 64
      %v457 = vpop.permute.xlu0 %456
      %v459 = vunpack.c.l.b16 %v335
      %v460 = vpack.c.b16 %v459, %v459
      %461 = vrot.lane.b32.xlu0 %v460, 64
      %v462 = vpop.permute.xlu0 %461
      %v464 = vsel %vm338, %v457, 0
      %v467 = vsel %vm338, %v462, 0
      %469 = vmatprep.subr.bf16.mxu0 0
      %470 = vmatpush1.bf16.xpose.msra.mxu0 0
      %471 = vmatprep.subr.bf16.mxu0 0
      %472 = vmatpush1.bf16.xpose.msra.mxu0 0
      %473 = vmatprep.subr.bf16.mxu0 0
      %474 = vmatpush1.bf16.xpose.msra.mxu0 0
      %475 = vmatprep.subr.bf16.mxu0 0
      %476 = vmatpush1.bf16.xpose.msra.mxu0 0
      %477 = vmatprep.subr.bf16.mxu0 0
      %478 = vmatpush1.bf16.xpose.msra.mxu0 0
      %479 = vmatprep.subr.bf16.mxu0 0
      %480 = vmatpush1.bf16.xpose.msra.mxu0 0
      %481 = vmatprep.subr.bf16.mxu0 0
      %482 = vmatpush1.bf16.xpose.msra.mxu0 0
      %483 = vmatprep.subr.bf16.mxu0 0
      %484 = vmatpush1.bf16.xpose.msra.mxu0 %v467
      %485 = vmatprep.subr.bf16.mxu0 0
      %486 = vmatpush2.bf16.xpose.msra.mxu0 0
      %487 = vmatprep.subr.bf16.mxu0 0
      %488 = vmatpush2.bf16.xpose.msra.mxu0 0
      %489 = vmatprep.subr.bf16.mxu0 0
      %490 = vmatpush2.bf16.xpose.msra.mxu0 0
      %491 = vmatprep.subr.bf16.mxu0 0
      %492 = vmatpush2.bf16.xpose.msra.mxu0 0
      %493 = vmatprep.subr.bf16.mxu0 0
      %494 = vmatpush2.bf16.xpose.msra.mxu0 0
      %495 = vmatprep.subr.bf16.mxu0 0
      %496 = vmatpush2.bf16.xpose.msra.mxu0 0
      %497 = vmatprep.subr.bf16.mxu0 0
      %498 = vmatpush2.bf16.xpose.msra.mxu0 0
      %499 = vmatprep.subr.bf16.mxu0 0
      %500 = vmatpush2.bf16.xpose.msra.mxu0 0
      %501 = vmatprep.mubr.bf16.mxu0 0
      %502 = vmatmul.mubr.bf16.gmra.mxu0 %v464
      %v503 = vpop.f32.mrf.mxu0
      %v504 = vadd.f32 0.0, %v503
      %v505 = vpop.f32.mrf.mxu0
      %v506 = vpop.f32.mrf.mxu0
      %v507 = vpop.f32.mrf.mxu0
      %508 = vdwg.mxu0
      %v509 = vmul.f32 %v504, 0.125
      %v510 = vadd.f32 %v509, %v390
      %v511 = vsel %vm393, %v510, -inf
      %512 = vmax.xlane.f32.xlu0 %v511
      %v513 = vpop.xlane.xlu0 %512
      %v514 = vsub.f32 %v510, %v513
      %v515 = vmul.f32 %v514, 1.442695
      %v516 = vpow.pop %v515
      %v517 = vsel %vm393, %v516, 0.0
      %518 = vadd.xlane.f32.xlu0 %v517
      %v519 = vpop.xlane.xlu0 %518
      %v520 = vrcp.pop %v519
      %v521 = vpack.c.bf16 %v516, %v516
      %v523 = vunpack.c.l.b16 %v336
      %v524 = vpack.c.b16 %v523, %v523
      %525 = vrot.lane.b32.xlu0 %v524, 64
      %v526 = vpop.permute.xlu0 %525
      %v528 = vsel %vm393, %v521, 0
      %v531 = vsel %vm408, %v526, 0
      %533 = vmatprep.subr.bf16.mxu0 0
      %534 = vmatpush1.bf16.msra.mxu0 0
      %535 = vmatprep.subr.bf16.mxu0 0
      %536 = vmatpush1.bf16.msra.mxu0 0
      %537 = vmatprep.subr.bf16.mxu0 0
      %538 = vmatpush1.bf16.msra.mxu0 0
      %539 = vmatprep.subr.bf16.mxu0 0
      %540 = vmatpush1.bf16.msra.mxu0 0
      %541 = vmatprep.subr.bf16.mxu0 0
      %542 = vmatpush1.bf16.msra.mxu0 0
      %543 = vmatprep.subr.bf16.mxu0 0
      %544 = vmatpush1.bf16.msra.mxu0 0
      %545 = vmatprep.subr.bf16.mxu0 0
      %546 = vmatpush1.bf16.msra.mxu0 0
      %547 = vmatprep.subr.bf16.mxu0 0
      %548 = vmatpush1.bf16.msra.mxu0 %v531
      %549 = vmatprep.subr.bf16.mxu0 0
      %550 = vmatpush2.bf16.msra.mxu0 0
      %551 = vmatprep.subr.bf16.mxu0 0
      %552 = vmatpush2.bf16.msra.mxu0 0
      %553 = vmatprep.subr.bf16.mxu0 0
      %554 = vmatpush2.bf16.msra.mxu0 0
      %555 = vmatprep.subr.bf16.mxu0 0
      %556 = vmatpush2.bf16.msra.mxu0 0
      %557 = vmatprep.subr.bf16.mxu0 0
      %558 = vmatpush2.bf16.msra.mxu0 0
      %559 = vmatprep.subr.bf16.mxu0 0
      %560 = vmatpush2.bf16.msra.mxu0 0
      %561 = vmatprep.subr.bf16.mxu0 0
      %562 = vmatpush2.bf16.msra.mxu0 0
      %563 = vmatprep.subr.bf16.mxu0 0
      %564 = vmatpush2.bf16.msra.mxu0 0
      %565 = vmatprep.mubr.bf16.mxu0 0
      %566 = vmatmul.mubr.bf16.gmra.mxu0 %v528
      %v567 = vpop.f32.mrf.mxu0
      %v568 = vadd.f32 0.0, %v567
      %v569 = vpop.f32.mrf.mxu0
      %v570 = vpop.f32.mrf.mxu0
      %v571 = vpop.f32.mrf.mxu0
      %572 = vdwg.mxu0
      %v573 = vmul.f32 %v568, %v520
      %575 = vrot.lane.b32.xlu0 %v573, 64
      %v576 = vpop.permute.xlu0 %575
      %v578 = vsel %vm338, %v452, %v576
      %v579 = vpack.c.bf16 %v578, %v578
      %580 = vst [vmem:[%s332] sm:$0xf] %v579
      %p581 = scmp.lt.s32.totalorder %s20, 1
      %s582 = scalar_select %p581, %s20, 1
      %p583 = scmp.lt.s32.totalorder %s22, 0
      %s584 = scalar_select %p583, %s22, 0
      %p585 = scmp.lt.s32.totalorder %s21, 0
      %s586 = scalar_select %p585, %s21, 0
      %s587 = sadd.s32 %s586, %s584
      %s588 = sadd.s32 %s587, %s582
      %s589 = smul.addr %s588, 4
      %s590 = scalar_lea.vmem %s4, %s589
      // Predicated region
      $region37: #{cross_attention_gpt2_forward.33} parent=35 // pred_check
        %p591 = pneg %p170
      $region38: #{cross_attention_gpt2_forward.33} parent=35 // pred_check_branch
        %593 = sbr.rel (%p591) target = $region40
      $region39: #{cross_attention_gpt2_forward.33} parent=35 // pred_region
        _
      $region40: #{cross_attention_gpt2_forward.33} parent=35 // pred_fallthru
        _
    $region36: #{cross_attention_gpt2_forward.33} parent=5 // pred_fallthru
      _
    %p594 = scmp.le.s32.totalorder 2, %s10
    // Predicated region
    $region41: #{cross_attention_gpt2_forward.33} parent=5 // pred_check
      %p595 = pneg %p594
    $region42: #{cross_attention_gpt2_forward.33} parent=5 // pred_check_branch
      %597 = sbr.rel (%p595) target = $region44
    $region43: #{cross_attention_gpt2_forward.33} parent=5 // pred_region
      %s598 = ssub.s32 %s10, 2
      // Predicated region
      $region45: #{cross_attention_gpt2_forward.33} parent=43 // pred_check
        %p599 = pneg %p176
      $region46: #{cross_attention_gpt2_forward.33} parent=43 // pred_check_branch
        %601 = sbr.rel (%p599) target = $region48
      $region47: #{cross_attention_gpt2_forward.33} parent=43 // pred_region
        %p602 = scmp.lt.s32.totalorder %s23, 1
        %s603 = scalar_select %p602, %s23, 1
        %p604 = scmp.lt.s32.totalorder %s25, 0
        %s605 = scalar_select %p604, %s25, 0
        %p606 = scmp.lt.s32.totalorder %s24, 0
        %s607 = scalar_select %p606, %s24, 0
        %s608 = sadd.s32 %s607, %s605
        %s609 = sadd.s32 %s608, %s603
        %s610 = smul.addr %s609, 4
        %s611 = scalar_lea.vmem %s4, %s610
      $region48: #{cross_attention_gpt2_forward.33} parent=43 // pred_fallthru
        _
    $region44: #{cross_attention_gpt2_forward.33} parent=5 // pred_fallthru
      _
  $region6: #{cross_attention_gpt2_forward.33} parent=0 // loop_footer
    %s14 = sadd.s32 1, %s10
  $region7: #{cross_attention_gpt2_forward.33} parent=0 // loop_footer_branch
    %9 = sbr.rel target = $region3
  $region8: #{cross_attention_gpt2_forward.33} parent=0 // loop_exit
    _

// kernel: cross_attention_gpt2_forward.49
$region0: #{cross_attention_gpt2_forward.49}
  #allocation0 [shape = 'u32[]', space=smem, size = 0x4, offset = 0x4, fixed_abs, tag = 'smem constant byte address 0x4 - core index']
  #allocation1 [shape = 'u32[144,128]{1,0:T(1,128)}', space=vmem, size = 0x12000, scoped, tag = 'internal scratch']
  %s0 = inlined_call_operand.vmem [shape: bf16[16,128], index: 0, kind: input, shape index: {}]
  %s1 = inlined_call_operand.vmem [shape: bf16[128,512], index: 1, kind: input, shape index: {}]
  %s2 = inlined_call_operand.hbm [shape: f32[16,512], index: 2, kind: output, shape index: {}]
  %s3 = sld [smem:[#allocation0]]
  $region18: #{cross_attention_gpt2_forward.49} parent=0
    _
  %s5 = ssub.s32 1, %s3
  %s6 = scalar_select 0, %s5, %s3
  $region1: #{cross_attention_gpt2_forward.49} parent=0
    #allocation2 [shape = 'u8[32768]{0}', space=vmem, size = 0x8000, scoped, tag = 'output window, operand 0, single buffered']
    #allocation3 [shape = 's32[1]{0}', space=sflag, size = 0x4, scoped, tag = 'scoped memory for cross_attention_gpt2_forward.49']
    %7 = vsyncpa [#allocation3], 0
    // Predicated region
    $region2: #{cross_attention_gpt2_forward.49} parent=1 // pred_check
      _
    $region3: #{cross_attention_gpt2_forward.49} parent=1 // pred_check_branch
      %9 = sbr.rel (0) target = $region5
    $region4: #{cross_attention_gpt2_forward.49} parent=1 // pred_region
      _
    $region5: #{cross_attention_gpt2_forward.49} parent=1 // pred_fallthru
      _
    // Predicated region
    $region6: #{cross_attention_gpt2_forward.49} parent=1 // pred_check
      _
    $region7: #{cross_attention_gpt2_forward.49} parent=1 // pred_check_branch
      %11 = sbr.rel (0) target = $region9
    $region8: #{cross_attention_gpt2_forward.49} parent=1 // pred_region
      _
    $region9: #{cross_attention_gpt2_forward.49} parent=1 // pred_fallthru
      _
    %v13 = vld [vmem:[%s0] sm:$0xf]
    %v14 = vld [vmem:[%s0 + $0x4] sm:$0xf]
    %v15 = vld [vmem:[%s1] sm:$0xff]
    %v16 = vld [vmem:[%s1 + $0x8] sm:$0xff]
    %v17 = vld [vmem:[%s1 + $0x10] sm:$0xff]
    %v18 = vld [vmem:[%s1 + $0x18] sm:$0xff]
    %v19 = vld [vmem:[%s1 + $0x20] sm:$0xff]
    %v20 = vld [vmem:[%s1 + $0x28] sm:$0xff]
    %v21 = vld [vmem:[%s1 + $0x30] sm:$0xff]
    %v22 = vld [vmem:[%s1 + $0x38] sm:$0xff]
    %v23 = vld [vmem:[%s1 + $0x40] sm:$0xff]
    %v24 = vld [vmem:[%s1 + $0x48] sm:$0xff]
    %v25 = vld [vmem:[%s1 + $0x50] sm:$0xff]
    %v26 = vld [vmem:[%s1 + $0x58] sm:$0xff]
    %v27 = vld [vmem:[%s1 + $0x60] sm:$0xff]
    %v28 = vld [vmem:[%s1 + $0x68] sm:$0xff]
    %v29 = vld [vmem:[%s1 + $0x70] sm:$0xff]
    %v30 = vld [vmem:[%s1 + $0x78] sm:$0xff]
    %v31 = vld [vmem:[%s1 + $0x80] sm:$0xff]
    %v32 = vld [vmem:[%s1 + $0x88] sm:$0xff]
    %v33 = vld [vmem:[%s1 + $0x90] sm:$0xff]
    %v34 = vld [vmem:[%s1 + $0x98] sm:$0xff]
    %v35 = vld [vmem:[%s1 + $0xa0] sm:$0xff]
    %v36 = vld [vmem:[%s1 + $0xa8] sm:$0xff]
    %v37 = vld [vmem:[%s1 + $0xb0] sm:$0xff]
    %v38 = vld [vmem:[%s1 + $0xb8] sm:$0xff]
    %v39 = vld [vmem:[%s1 + $0xc0] sm:$0xff]
    %v40 = vld [vmem:[%s1 + $0xc8] sm:$0xff]
    %v41 = vld [vmem:[%s1 + $0xd0] sm:$0xff]
    %v42 = vld [vmem:[%s1 + $0xd8] sm:$0xff]
    %v43 = vld [vmem:[%s1 + $0xe0] sm:$0xff]
    %v44 = vld [vmem:[%s1 + $0xe8] sm:$0xff]
    %v45 = vld [vmem:[%s1 + $0xf0] sm:$0xff]
    %v46 = vld [vmem:[%s1 + $0xf8] sm:$0xff]
    %v49 = vunpack.c.l.b16 %v13
    %v50 = vunpack.c.l.b16 %v14
    %v51 = vpack.c.b16 %v50, %v49
    %v85 = vunpack.c.l.b16 %v15
    %v86 = vunpack.c.h.b16 %v15
    %v87 = vunpack.c.l.b16 %v16
    %v88 = vunpack.c.h.b16 %v16
    %v89 = vunpack.c.l.b16 %v17
    %v90 = vunpack.c.h.b16 %v17
    %v91 = vunpack.c.l.b16 %v18
    %v92 = vunpack.c.h.b16 %v18
    %v93 = vunpack.c.l.b16 %v19
    %v94 = vunpack.c.h.b16 %v19
    %v95 = vunpack.c.l.b16 %v20
    %v96 = vunpack.c.h.b16 %v20
    %v97 = vunpack.c.l.b16 %v21
    %v98 = vunpack.c.h.b16 %v21
    %v99 = vunpack.c.l.b16 %v22
    %v100 = vunpack.c.h.b16 %v22
    %v101 = vunpack.c.l.b16 %v23
    %v102 = vunpack.c.h.b16 %v23
    %v103 = vunpack.c.l.b16 %v24
    %v104 = vunpack.c.h.b16 %v24
    %v105 = vunpack.c.l.b16 %v25
    %v106 = vunpack.c.h.b16 %v25
    %v107 = vunpack.c.l.b16 %v26
    %v108 = vunpack.c.h.b16 %v26
    %v109 = vunpack.c.l.b16 %v27
    %v110 = vunpack.c.h.b16 %v27
    %v111 = vunpack.c.l.b16 %v28
    %v112 = vunpack.c.h.b16 %v28
    %v113 = vunpack.c.l.b16 %v29
    %v114 = vunpack.c.h.b16 %v29
    %v115 = vunpack.c.l.b16 %v30
    %v116 = vunpack.c.h.b16 %v30
    %v117 = vunpack.c.l.b16 %v31
    %v118 = vunpack.c.h.b16 %v31
    %v119 = vunpack.c.l.b16 %v32
    %v120 = vunpack.c.h.b16 %v32
    %v121 = vunpack.c.l.b16 %v33
    %v122 = vunpack.c.h.b16 %v33
    %v123 = vunpack.c.l.b16 %v34
    %v124 = vunpack.c.h.b16 %v34
    %v125 = vunpack.c.l.b16 %v35
    %v126 = vunpack.c.h.b16 %v35
    %v127 = vunpack.c.l.b16 %v36
    %v128 = vunpack.c.h.b16 %v36
    %v129 = vunpack.c.l.b16 %v37
    %v130 = vunpack.c.h.b16 %v37
    %v131 = vunpack.c.l.b16 %v38
    %v132 = vunpack.c.h.b16 %v38
    %v133 = vunpack.c.l.b16 %v39
    %v134 = vunpack.c.h.b16 %v39
    %v135 = vunpack.c.l.b16 %v40
    %v136 = vunpack.c.h.b16 %v40
    %v137 = vunpack.c.l.b16 %v41
    %v138 = vunpack.c.h.b16 %v41
    %v139 = vunpack.c.l.b16 %v42
    %v140 = vunpack.c.h.b16 %v42
    %v141 = vunpack.c.l.b16 %v43
    %v142 = vunpack.c.h.b16 %v43
    %v143 = vunpack.c.l.b16 %v44
    %v144 = vunpack.c.h.b16 %v44
    %v145 = vunpack.c.l.b16 %v45
    %v146 = vunpack.c.h.b16 %v45
    %v147 = vunpack.c.l.b16 %v46
    %v148 = vunpack.c.h.b16 %v46
    %v149 = vpack.c.b16 %v89, %v85
    %v150 = vpack.c.b16 %v90, %v86
    %v151 = vpack.c.b16 %v91, %v87
    %v152 = vpack.c.b16 %v92, %v88
    %v153 = vpack.c.b16 %v97, %v93
    %v154 = vpack.c.b16 %v98, %v94
    %v155 = vpack.c.b16 %v99, %v95
    %v156 = vpack.c.b16 %v100, %v96
    %v157 = vpack.c.b16 %v105, %v101
    %v158 = vpack.c.b16 %v106, %v102
    %v159 = vpack.c.b16 %v107, %v103
    %v160 = vpack.c.b16 %v108, %v104
    %v161 = vpack.c.b16 %v113, %v109
    %v162 = vpack.c.b16 %v114, %v110
    %v163 = vpack.c.b16 %v115, %v111
    %v164 = vpack.c.b16 %v116, %v112
    %v165 = vpack.c.b16 %v121, %v117
    %v166 = vpack.c.b16 %v122, %v118
    %v167 = vpack.c.b16 %v123, %v119
    %v168 = vpack.c.b16 %v124, %v120
    %v169 = vpack.c.b16 %v129, %v125
    %v170 = vpack.c.b16 %v130, %v126
    %v171 = vpack.c.b16 %v131, %v127
    %v172 = vpack.c.b16 %v132, %v128
    %v173 = vpack.c.b16 %v137, %v133
    %v174 = vpack.c.b16 %v138, %v134
    %v175 = vpack.c.b16 %v139, %v135
    %v176 = vpack.c.b16 %v140, %v136
    %v177 = vpack.c.b16 %v145, %v141
    %v178 = vpack.c.b16 %v146, %v142
    %v179 = vpack.c.b16 %v147, %v143
    %v180 = vpack.c.b16 %v148, %v144
    %213 = vmatprep.subr.bf16.mxu0 %v178
    %214 = vmatpush1.bf16.msra.mxu0 %v177
    %215 = vmatprep.subr.bf16.mxu0 %v174
    %216 = vmatpush1.bf16.msra.mxu0 %v173
    %217 = vmatprep.subr.bf16.mxu0 %v170
    %218 = vmatpush1.bf16.msra.mxu0 %v169
    %219 = vmatprep.subr.bf16.mxu0 %v166
    %220 = vmatpush1.bf16.msra.mxu0 %v165
    %221 = vmatprep.subr.bf16.mxu0 %v162
    %222 = vmatpush1.bf16.msra.mxu0 %v161
    %223 = vmatprep.subr.bf16.mxu0 %v158
    %224 = vmatpush1.bf16.msra.mxu0 %v157
    %225 = vmatprep.subr.bf16.mxu0 %v154
    %226 = vmatpush1.bf16.msra.mxu0 %v153
    %227 = vmatprep.subr.bf16.mxu0 %v150
    %228 = vmatpush1.bf16.msra.mxu0 %v149
    %229 = vmatprep.subr.bf16.mxu0 0
    %230 = vmatpush2.bf16.msra.mxu0 0
    %231 = vmatprep.subr.bf16.mxu0 0
    %232 = vmatpush2.bf16.msra.mxu0 0
    %233 = vmatprep.subr.bf16.mxu0 0
    %234 = vmatpush2.bf16.msra.mxu0 0
    %235 = vmatprep.subr.bf16.mxu0 0
    %236 = vmatpush2.bf16.msra.mxu0 0
    %237 = vmatprep.subr.bf16.mxu0 0
    %238 = vmatpush2.bf16.msra.mxu0 0
    %239 = vmatprep.subr.bf16.mxu0 0
    %240 = vmatpush2.bf16.msra.mxu0 0
    %241 = vmatprep.subr.bf16.mxu0 0
    %242 = vmatpush2.bf16.msra.mxu0 0
    %243 = vmatprep.subr.bf16.mxu0 0
    %244 = vmatpush2.bf16.msra.mxu0 0
    %245 = vmatprep.mubr.bf16.mxu0 0
    %246 = vmatmul.mubr.bf16.gmra.mxu0 %v51
    %v247 = vpop.f32.mrf.mxu0
    %v248 = vadd.f32 0.0, %v247
    %v249 = vpop.f32.mrf.mxu0
    %v250 = vadd.f32 0.0, %v249
    %v251 = vpop.f32.mrf.mxu0
    %v252 = vadd.f32 0.0, %v251
    %v253 = vpop.f32.mrf.mxu0
    %v254 = vadd.f32 0.0, %v253
    %255 = vdwg.mxu0
    %256 = vmatprep.subr.bf16.mxu0 %v180
    %257 = vmatpush1.bf16.msra.mxu0 %v179
    %258 = vmatprep.subr.bf16.mxu0 %v176
    %259 = vmatpush1.bf16.msra.mxu0 %v175
    %260 = vmatprep.subr.bf16.mxu0 %v172
    %261 = vmatpush1.bf16.msra.mxu0 %v171
    %262 = vmatprep.subr.bf16.mxu0 %v168
    %263 = vmatpush1.bf16.msra.mxu0 %v167
    %264 = vmatprep.subr.bf16.mxu0 %v164
    %265 = vmatpush1.bf16.msra.mxu0 %v163
    %266 = vmatprep.subr.bf16.mxu0 %v160
    %267 = vmatpush1.bf16.msra.mxu0 %v159
    %268 = vmatprep.subr.bf16.mxu0 %v156
    %269 = vmatpush1.bf16.msra.mxu0 %v155
    %270 = vmatprep.subr.bf16.mxu0 %v152
    %271 = vmatpush1.bf16.msra.mxu0 %v151
    %272 = vmatprep.subr.bf16.mxu0 0
    %273 = vmatpush2.bf16.msra.mxu0 0
    %274 = vmatprep.subr.bf16.mxu0 0
    %275 = vmatpush2.bf16.msra.mxu0 0
    %276 = vmatprep.subr.bf16.mxu0 0
    %277 = vmatpush2.bf16.msra.mxu0 0
    %278 = vmatprep.subr.bf16.mxu0 0
    %279 = vmatpush2.bf16.msra.mxu0 0
    %280 = vmatprep.subr.bf16.mxu0 0
    %281 = vmatpush2.bf16.msra.mxu0 0
    %282 = vmatprep.subr.bf16.mxu0 0
    %283 = vmatpush2.bf16.msra.mxu0 0
    %284 = vmatprep.subr.bf16.mxu0 0
    %285 = vmatpush2.bf16.msra.mxu0 0
    %286 = vmatprep.subr.bf16.mxu0 0
    %287 = vmatpush2.bf16.msra.mxu0 0
    %288 = vmatprep.mubr.bf16.mxu0 0
    %289 = vmatmul.mubr.bf16.gmra.mxu0 %v51
    %v290 = vpop.f32.mrf.mxu0
    %v291 = vadd.f32 0.0, %v290
    %v292 = vpop.f32.mrf.mxu0
    %v293 = vadd.f32 0.0, %v292
    %v294 = vpop.f32.mrf.mxu0
    %v295 = vadd.f32 0.0, %v294
    %v296 = vpop.f32.mrf.mxu0
    %v297 = vadd.f32 0.0, %v296
    %298 = vdwg.mxu0
    %299 = vst [vmem:[#allocation2] sm:$0xff] %v248
    %300 = vst [vmem:[#allocation2 + $0x8] sm:$0xff] %v250
    %301 = vst [vmem:[#allocation2 + $0x10] sm:$0xff] %v291
    %302 = vst [vmem:[#allocation2 + $0x18] sm:$0xff] %v293
    %303 = vst [vmem:[#allocation2 + $0x20] sm:$0xff] %v252
    %304 = vst [vmem:[#allocation2 + $0x28] sm:$0xff] %v254
    %305 = vst [vmem:[#allocation2 + $0x30] sm:$0xff] %v295
    %306 = vst [vmem:[#allocation2 + $0x38] sm:$0xff] %v297
    // Predicated region
    $region10: #{cross_attention_gpt2_forward.49} parent=1 // pred_check
      _
    $region11: #{cross_attention_gpt2_forward.49} parent=1 // pred_check_branch
      %308 = sbr.rel (0) target = $region13
    $region12: #{cross_attention_gpt2_forward.49} parent=1 // pred_region
      %s310 = ssub.s32 1024, 1024
      %311 = vsyncadd [#allocation3], %s310
      %s312 = sshll.u32 [#allocation2], 4
      %s313 = int_to_ptr.vmem [resolvable:$true] %s312
      %318 = dma.vmem_to_hbm [thread:$0]  %s313, 1024, %s2, [#allocation3], 512, 512, 32
    $region13: #{cross_attention_gpt2_forward.49} parent=1 // pred_fallthru
      _
    // Predicated region
    $region14: #{cross_attention_gpt2_forward.49} parent=1 // pred_check
      _
    $region15: #{cross_attention_gpt2_forward.49} parent=1 // pred_check_branch
      %320 = sbr.rel (0) target = $region17
    $region16: #{cross_attention_gpt2_forward.49} parent=1 // pred_region
      %321 = dma.done [#allocation3], 1024
    $region17: #{cross_attention_gpt2_forward.49} parent=1 // pred_fallthru
      _
    %322 = vsyncpa [#allocation3], 1

</llo_original>
